<compile_context>
chip_gen: v7x
topology: tpu7x:2x2x1
jax: 0.10.0
libtpu: 0.0.40
codegen_flags: <defaults>
</compile_context>

<pallas_src>
import functools

import jax
import jax.numpy as jnp
from jax.experimental import pallas as pl
from jax.experimental.pallas import tpu as pltpu


# ---------------------------------------------------------------------------
# Generic fused (im2col) matmul + per-channel shift + optional ReLU kernel
# ---------------------------------------------------------------------------

def _matmul_affine_kernel(x_ref, w_ref, shift_ref, o_ref, *, act):
    # x_ref:     (TM, K)      im2col patches / flattened activations
    # w_ref:     (K, Cout)    conv weights (BN scale pre-folded where applicable)
    # shift_ref: (1, Cout)    bias / folded BN shift
    # o_ref:     (TM, Cout)
    acc = jnp.dot(x_ref[...], w_ref[...], preferred_element_type=jnp.float32)
    y = acc + shift_ref[...]
    if act == "relu":
        y = jnp.maximum(y, 0.0)
    o_ref[...] = y.astype(o_ref.dtype)


def _round_up(x, m):
    return (x + m - 1) // m * m


def matmul_affine(x, w, shift, act=None, tm=512):
    """y = act(x @ w + shift). x: (M, K) f32, w: (K, Cout), shift: (Cout,)."""
    M, K = x.shape
    Cout = w.shape[1]
    tm = min(tm, _round_up(M, 8))        # large M tiles; shrink only for tiny problems
    Mp = _round_up(M, tm)                # pad M instead of asserting divisibility
    if Mp != M:
        x = jnp.pad(x, ((0, Mp - M), (0, 0)))
    out = pl.pallas_call(
        functools.partial(_matmul_affine_kernel, act=act),
        out_shape=jax.ShapeDtypeStruct((Mp, Cout), jnp.float32),
        grid_spec=pltpu.PrefetchScalarGridSpec(
            num_scalar_prefetch=0,
            grid=(Mp // tm,),
            in_specs=[
                pl.BlockSpec((tm, K), lambda i: (i, 0)),
                pl.BlockSpec((K, Cout), lambda i: (0, 0)),
                pl.BlockSpec((1, Cout), lambda i: (0, 0)),
            ],
            out_specs=pl.BlockSpec((tm, Cout), lambda i: (i, 0)),
        ),
        compiler_params=pltpu.CompilerParams(
            dimension_semantics=("parallel",),      # megacore-splittable on v7x
            vmem_limit_bytes=32 * 1024 * 1024,      # explicit; fits v7x 64 MiB VMEM
        ),
    )(x.astype(jnp.float32), w.astype(jnp.float32),
      shift.reshape(1, Cout).astype(jnp.float32))
    return out[:M]


def conv2d_nhwc(x, w_oihw, bias, stride, padding, act=None, tm=512):
    """2-D conv (PyTorch cross-correlation semantics) on NHWC input via a single
    fused Pallas matmul with K = KH*KW*Cin."""
    N, H, W, Cin = x.shape
    Cout, Cin2, KH, KW = w_oihw.shape
    assert Cin2 == Cin
    sh, sw = stride
    ph, pw = padding
    H_out = (H + 2 * ph - KH) // sh + 1
    W_out = (W + 2 * pw - KW) // sw + 1
    xp = jnp.pad(x, ((0, 0), (ph, ph), (pw, pw), (0, 0)))
    cols = []
    for kh in range(KH):
        for kw in range(KW):
            cols.append(xp[:, kh:kh + sh * (H_out - 1) + 1:sh,
                           kw:kw + sw * (W_out - 1) + 1:sw, :])
    patches = jnp.concatenate(cols, axis=-1)            # (N, H_out, W_out, KH*KW*Cin)
    K = KH * KW * Cin
    xm = patches.reshape(N * H_out * W_out, K)
    wm = jnp.transpose(w_oihw, (2, 3, 1, 0)).reshape(K, Cout)   # (kh, kw, cin) -> cout
    out = matmul_affine(xm, wm, bias, act=act, tm=tm)
    return out.reshape(N, H_out, W_out, Cout)


# ---------------------------------------------------------------------------
# TFConvUnit: conv -> conv -> BN(folded) -> Dropout(eval=id) -> ReLU
# ---------------------------------------------------------------------------

def tf_conv_unit(x_nhwc, p, eps=1e-5):
    y = conv2d_nhwc(x_nhwc, p["w1"], p["b1"], (2, 15), (1, 1), act=None)
    scale = p["gamma"] / jnp.sqrt(p["var"] + eps)
    w2f = p["w2"] * scale[:, None, None, None]              # fold BN scale into weights
    shift = (p["b2"] - p["mean"]) * scale + p["beta"]       # fold bias + BN into one shift
    return conv2d_nhwc(y, w2f, shift, (2, 15), (1, 1), act="relu")


# ---------------------------------------------------------------------------
# PSA block: grouped 1x1 conv -> per-split multi-scale conv + fused SE gating
# ---------------------------------------------------------------------------

def _psa_se_kernel(c_ref, x_ref, w1_ref, w2_ref, o_ref):
    # Each grid step handles one channel split g (leading block dim of size 1).
    # c_ref/x_ref/o_ref: (1, N, HW, Cq)   w1_ref: (1, Cq, Rp)   w2_ref: (1, Rp, Cq)
    c = c_ref[0]
    x = x_ref[0]
    pooled = jnp.mean(c, axis=1)                                     # (N, Cq) avg-pool
    h = jax.lax.dot_general(pooled, w1_ref[0], (((1,), (0,)), ((), ())),
                            preferred_element_type=jnp.float32)      # (N, Rp)
    h = jnp.maximum(h, 0.0)
    z = jax.lax.dot_general(h, w2_ref[0], (((1,), (0,)), ((), ())),
                            preferred_element_type=jnp.float32)      # (N, Cq)
    gate = 1.0 / (1.0 + jnp.exp(-z))                                 # sigmoid
    o_ref[0] = (x * c * gate[:, None, :]).astype(o_ref.dtype)


def psa_block(x_nhwc, p):
    N, H, W, C = x_nhwc.shape
    Cq = C // 4
    HW = H * W

    # grouped 1x1 conv == block-diagonal matmul
    wbd = jnp.zeros((C, C), jnp.float32)
    for g in range(4):
        wg = p["gconv_w"][g * Cq:(g + 1) * Cq, :, 0, 0]              # (Cq_out, Cq_in)
        wbd = wbd.at[g * Cq:(g + 1) * Cq, g * Cq:(g + 1) * Cq].set(wg.T)
    y = matmul_affine(x_nhwc.reshape(N * HW, C), wbd, p["gconv_b"], act=None)
    y = y.reshape(N, H, W, C)

    # per-split multi-scale convs (k = 3, 5, 7, 9), each a single fused matmul
    x_splits, c_splits = [], []
    for g in range(4):
        x_i = y[..., g * Cq:(g + 1) * Cq]
        w = p["convs_w"][g]
        k = w.shape[-1]
        c = conv2d_nhwc(x_i, w, p["convs_b"][g], (1, 1), (k // 2, k // 2), act=None)
        x_splits.append(x_i.reshape(N, HW, Cq))
        c_splits.append(c.reshape(N, HW, Cq))

    c_all = jnp.stack(c_splits)                                      # (4, N, HW, Cq)
    x_all = jnp.stack(x_splits)                                      # (4, N, HW, Cq)
    w1t = jnp.stack([w.T for w in p["fc1_w"]])                       # (4, Cq, R)
    w2t = jnp.stack([w.T for w in p["fc2_w"]])                       # (4, R, Cq)
    R = w1t.shape[-1]
    Rp = max(8, R)   # zero-pad SE hidden dim (exact) to avoid size-1 matmul dims
    if Rp != R:
        w1t = jnp.pad(w1t, ((0, 0), (0, 0), (0, Rp - R)))
        w2t = jnp.pad(w2t, ((0, 0), (0, Rp - R), (0, 0)))

    out = pl.pallas_call(
        _psa_se_kernel,
        out_shape=jax.ShapeDtypeStruct((4, N, HW, Cq), jnp.float32),
        grid_spec=pltpu.PrefetchScalarGridSpec(
            num_scalar_prefetch=0,
            grid=(4,),
            in_specs=[
                pl.BlockSpec((1, N, HW, Cq), lambda g: (g, 0, 0, 0)),
                pl.BlockSpec((1, N, HW, Cq), lambda g: (g, 0, 0, 0)),
                pl.BlockSpec((1, Cq, Rp), lambda g: (g, 0, 0)),
                pl.BlockSpec((1, Rp, Cq), lambda g: (g, 0, 0)),
            ],
            out_specs=pl.BlockSpec((1, N, HW, Cq), lambda g: (g, 0, 0, 0)),
        ),
        compiler_params=pltpu.CompilerParams(
            dimension_semantics=("parallel",),
            vmem_limit_bytes=32 * 1024 * 1024,
        ),
    )(c_all, x_all, w1t, w2t)

    # torch.cat(outputs, dim=1): put the 4 splits back on the channel axis in order
    return jnp.transpose(out, (1, 2, 0, 3)).reshape(N, H, W, C)


# ---------------------------------------------------------------------------
# Full TFConvBlock forward (NCHW in / NCHW out)
# ---------------------------------------------------------------------------

def tf_conv_block(x_nchw, params):
    x = jnp.transpose(x_nchw, (0, 2, 3, 1)).astype(jnp.float32)      # NHWC internally
    y = conv2d_nhwc(x, params["conv1_w"], params["conv1_b"], (1, 1), (2, 2), act=None)
    y = tf_conv_unit(y, params["unit1"])
    y = tf_conv_unit(y, params["unit2"])
    y = psa_block(y, params["psa"])
    return jnp.transpose(y, (0, 3, 1, 2))


# ---------------------------------------------------------------------------
# Pure-JAX reference (eval-mode PyTorch semantics)
# ---------------------------------------------------------------------------

def reference_tf_conv_block(x, p, eps=1e-5):
    hp = jax.lax.Precision.HIGHEST

    def conv(x, w, b, stride, padding, groups=1):
        y = jax.lax.conv_general_dilated(
            x, w, window_strides=stride,
            padding=[(padding[0], padding[0]), (padding[1], padding[1])],
            dimension_numbers=("NCHW", "OIHW", "NCHW"),
            feature_group_count=groups, precision=hp)
        return y + b[None, :, None, None]

    def unit(x, u):
        y = conv(x, u["w1"], u["b1"], (2, 15), (1, 1))
        y = conv(y, u["w2"], u["b2"], (2, 15), (1, 1))
        y = (y - u["mean"][None, :, None, None]) / jnp.sqrt(
            u["var"][None, :, None, None] + eps)
        y = y * u["gamma"][None, :, None, None] + u["beta"][None, :, None, None]
        return jnp.maximum(y, 0.0)

    y = conv(x, p["conv1_w"], p["conv1_b"], (1, 1), (2, 2))
    y = unit(y, p["unit1"])
    y = unit(y, p["unit2"])

    ps = p["psa"]
    C = y.shape[1]
    Cq = C // 4
    yg = conv(y, ps["gconv_w"], ps["gconv_b"], (1, 1), (0, 0), groups=4)
    outs = []
    for g in range(4):
        x_i = yg[:, g * Cq:(g + 1) * Cq]
        w = ps["convs_w"][g]
        k = w.shape[-1]
        c = conv(x_i, w, ps["convs_b"][g], (1, 1), (k // 2, k // 2))
        pooled = jnp.mean(c, axis=(2, 3))
        h = jnp.maximum(pooled @ ps["fc1_w"][g].T, 0.0)
        gate = jax.nn.sigmoid(h @ ps["fc2_w"][g].T)
        outs.append(x_i * c * gate[:, :, None, None])
    return jnp.concatenate(outs, axis=1)


# ---------------------------------------------------------------------------
# Deterministic parameter construction
# ---------------------------------------------------------------------------

def init_params(key, cin, cout):
    keys = iter(jax.random.split(key, 40))

    def w_conv(co, ci, kh, kw):
        return jax.random.normal(next(keys), (co, ci, kh, kw), jnp.float32) \
            * (1.0 / float(ci * kh * kw) ** 0.5)

    def vec(n, s=0.1):
        return s * jax.random.normal(next(keys), (n,), jnp.float32)

    def unit_params():
        return {
            "w1": w_conv(cout, cout, 3, 3), "b1": vec(cout),
            "w2": w_conv(cout, cout, 3, 3), "b2": vec(cout),
            "gamma": 1.0 + vec(cout), "beta": vec(cout),
            "mean": vec(cout),
            "var": jax.random.uniform(next(keys), (cout,), jnp.float32,
                                      minval=0.5, maxval=1.5),
        }

    Cq = cout // 4
    R = Cq // 16
    assert R >= 1, "out_channels must be >= 64 so SE reduction (//16) is non-degenerate"
    psa = {
        "gconv_w": w_conv(cout, Cq, 1, 1), "gconv_b": vec(cout),
        "convs_w": [w_conv(Cq, Cq, k, k) for k in (3, 5, 7, 9)],
        "convs_b": [vec(Cq) for _ in range(4)],
        "fc1_w": [jax.random.normal(next(keys), (R, Cq), jnp.float32)
                  * (1.0 / float(Cq) ** 0.5) for _ in range(4)],
        "fc2_w": [jax.random.normal(next(keys), (Cq, R), jnp.float32)
                  * (1.0 / float(R) ** 0.5) for _ in range(4)],
    }
    return {
        "conv1_w": w_conv(cout, cin, 5, 5), "conv1_b": vec(cout),
        "unit1": unit_params(), "unit2": unit_params(),
        "psa": psa,
    }


if __name__ == "__main__":
    N, Cin, H, W = 2, 4, 32, 64
    Cout = 64

    key = jax.random.PRNGKey(0)
    kx, kp = jax.random.split(key)
    x = jax.random.normal(kx, (N, Cin, H, W), dtype=jnp.float32)
    params = init_params(kp, Cin, Cout)

    fwd = jax.jit(tf_conv_block)
    out = jax.block_until_ready(fwd(x, params))

    ref = reference_tf_conv_block(x, params)
    assert out.shape == ref.shape, (out.shape, ref.shape)
    max_err = float(jnp.max(jnp.abs(out - ref)))
    assert jnp.allclose(out, ref, atol=5e-3, rtol=5e-3), f"max abs err {max_err}"

    print("KERNEL_OK")
</pallas_src>

<mosaic_0001>
module attributes {stable_mosaic.version = 11 : i64} {
  func.func @_matmul_affine_kernel(%arg0: i32, %arg1: memref<512x100xf32, #tpu.memory_space<vmem>>, %arg2: memref<100x64xf32, #tpu.memory_space<vmem>>, %arg3: memref<1x64xf32, #tpu.memory_space<vmem>>, %arg4: memref<512x64xf32, #tpu.memory_space<vmem>>) attributes {dimension_semantics = [#tpu.dimension_semantics<parallel>], iteration_bounds = array<i64: 8>, scalar_prefetch = 0 : i64, scratch_operands = 0 : i64, tpu.core_type = #tpu.core_type<tc>, window_params = [{transform_indices = @transform_0, window_bounds = array<i64: 512, 100>}, {pipeline_mode = #tpu.pipeline_mode<synchronous>, transform_indices = @transform_1, window_bounds = array<i64: 100, 64>}, {pipeline_mode = #tpu.pipeline_mode<synchronous>, transform_indices = @transform_2, window_bounds = array<i64: 1, 64>}, {transform_indices = @transform_3, window_bounds = array<i64: 512, 64>}]} {
    %c0 = arith.constant 0 : index
    %c0_0 = arith.constant 0 : index
    %0 = vector.load %arg1[%c0, %c0_0] : memref<512x100xf32, #tpu.memory_space<vmem>>, vector<512x100xf32>
    %c0_1 = arith.constant 0 : index
    %c0_2 = arith.constant 0 : index
    %1 = vector.load %arg2[%c0_1, %c0_2] : memref<100x64xf32, #tpu.memory_space<vmem>>, vector<100x64xf32>
    %cst = arith.constant dense<0.000000e+00> : vector<512x64xf32>
    %2 = tpu.matmul %0, %1, %cst {dimension_numbers = #tpu.dot_dimension_numbers<[1], [0], [0], [1], [0, 0, 1, 1], [], []>} : vector<512x100xf32>, vector<100x64xf32>, vector<512x64xf32> -> vector<512x64xf32>
    %c0_3 = arith.constant 0 : index
    %c0_4 = arith.constant 0 : index
    %3 = vector.load %arg3[%c0_3, %c0_4] : memref<1x64xf32, #tpu.memory_space<vmem>>, vector<1x64xf32>
    %4 = vector.broadcast %3 : vector<1x64xf32> to vector<512x64xf32>
    %5 = arith.addf %2, %4 : vector<512x64xf32>
    %c0_5 = arith.constant 0 : index
    %c0_6 = arith.constant 0 : index
    %6 = vector.load %arg4[%c0_5, %c0_6] : memref<512x64xf32, #tpu.memory_space<vmem>>, vector<512x64xf32>
    tpu.vector_store %arg4[%c0_5, %c0_6], %5 {strides = array<i32>} : memref<512x64xf32, #tpu.memory_space<vmem>>, vector<512x64xf32>,
    return
  }
  func.func @transform_0(%arg0: i32) -> (i32, i32) {
    %c0_i32 = arith.constant 0 : i32
    %c0_i32_0 = arith.constant 0 : i32
    return %arg0, %c0_i32 : i32, i32
  }
  func.func @transform_1(%arg0: i32) -> (i32, i32) {
    %c0_i32 = arith.constant 0 : i32
    %c0_i32_0 = arith.constant 0 : i32
    %c0_i32_1 = arith.constant 0 : i32
    return %c0_i32, %c0_i32_0 : i32, i32
  }
  func.func @transform_2(%arg0: i32) -> (i32, i32) {
    %c0_i32 = arith.constant 0 : i32
    %c0_i32_0 = arith.constant 0 : i32
    %c0_i32_1 = arith.constant 0 : i32
    return %c0_i32, %c0_i32_0 : i32, i32
  }
  func.func @transform_3(%arg0: i32) -> (i32, i32) {
    %c0_i32 = arith.constant 0 : i32
    %c0_i32_0 = arith.constant 0 : i32
    return %arg0, %c0_i32 : i32, i32
  }
}

module attributes {stable_mosaic.version = 11 : i64} {
  func.func @_matmul_affine_kernel(%arg0: i32, %arg1: memref<160x576xf32, #tpu.memory_space<vmem>>, %arg2: memref<576x64xf32, #tpu.memory_space<vmem>>, %arg3: memref<1x64xf32, #tpu.memory_space<vmem>>, %arg4: memref<160x64xf32, #tpu.memory_space<vmem>>) attributes {dimension_semantics = [#tpu.dimension_semantics<parallel>], iteration_bounds = array<i64: 1>, scalar_prefetch = 0 : i64, scratch_operands = 0 : i64, tpu.core_type = #tpu.core_type<tc>, window_params = [{transform_indices = @transform_0, window_bounds = array<i64: 160, 576>}, {pipeline_mode = #tpu.pipeline_mode<synchronous>, transform_indices = @transform_1, window_bounds = array<i64: 576, 64>}, {pipeline_mode = #tpu.pipeline_mode<synchronous>, transform_indices = @transform_2, window_bounds = array<i64: 1, 64>}, {transform_indices = @transform_3, window_bounds = array<i64: 160, 64>}]} {
    %c0 = arith.constant 0 : index
    %c0_0 = arith.constant 0 : index
    %0 = vector.load %arg1[%c0, %c0_0] : memref<160x576xf32, #tpu.memory_space<vmem>>, vector<160x576xf32>
    %c0_1 = arith.constant 0 : index
    %c0_2 = arith.constant 0 : index
    %1 = vector.load %arg2[%c0_1, %c0_2] : memref<576x64xf32, #tpu.memory_space<vmem>>, vector<576x64xf32>
    %cst = arith.constant dense<0.000000e+00> : vector<160x64xf32>
    %2 = tpu.matmul %0, %1, %cst {dimension_numbers = #tpu.dot_dimension_numbers<[1], [0], [0], [1], [0, 0, 1, 1], [], []>} : vector<160x576xf32>, vector<576x64xf32>, vector<160x64xf32> -> vector<160x64xf32>
    %c0_3 = arith.constant 0 : index
    %c0_4 = arith.constant 0 : index
    %3 = vector.load %arg3[%c0_3, %c0_4] : memref<1x64xf32, #tpu.memory_space<vmem>>, vector<1x64xf32>
    %4 = vector.broadcast %3 : vector<1x64xf32> to vector<160x64xf32>
    %5 = arith.addf %2, %4 : vector<160x64xf32>
    %c0_5 = arith.constant 0 : index
    %c0_6 = arith.constant 0 : index
    %6 = vector.load %arg4[%c0_5, %c0_6] : memref<160x64xf32, #tpu.memory_space<vmem>>, vector<160x64xf32>
    tpu.vector_store %arg4[%c0_5, %c0_6], %5 {strides = array<i32>} : memref<160x64xf32, #tpu.memory_space<vmem>>, vector<160x64xf32>,
    return
  }
  func.func @transform_0(%arg0: i32) -> (i32, i32) {
    %c0_i32 = arith.constant 0 : i32
    %c0_i32_0 = arith.constant 0 : i32
    return %arg0, %c0_i32 : i32, i32
  }
  func.func @transform_1(%arg0: i32) -> (i32, i32) {
    %c0_i32 = arith.constant 0 : i32
    %c0_i32_0 = arith.constant 0 : i32
    %c0_i32_1 = arith.constant 0 : i32
    return %c0_i32, %c0_i32_0 : i32, i32
  }
  func.func @transform_2(%arg0: i32) -> (i32, i32) {
    %c0_i32 = arith.constant 0 : i32
    %c0_i32_0 = arith.constant 0 : i32
    %c0_i32_1 = arith.constant 0 : i32
    return %c0_i32, %c0_i32_0 : i32, i32
  }
  func.func @transform_3(%arg0: i32) -> (i32, i32) {
    %c0_i32 = arith.constant 0 : i32
    %c0_i32_0 = arith.constant 0 : i32
    return %arg0, %c0_i32 : i32, i32
  }
}

module attributes {stable_mosaic.version = 11 : i64} {
  func.func @_matmul_affine_kernel(%arg0: i32, %arg1: memref<16x576xf32, #tpu.memory_space<vmem>>, %arg2: memref<576x64xf32, #tpu.memory_space<vmem>>, %arg3: memref<1x64xf32, #tpu.memory_space<vmem>>, %arg4: memref<16x64xf32, #tpu.memory_space<vmem>>) attributes {dimension_semantics = [#tpu.dimension_semantics<parallel>], iteration_bounds = array<i64: 1>, scalar_prefetch = 0 : i64, scratch_operands = 0 : i64, tpu.core_type = #tpu.core_type<tc>, window_params = [{transform_indices = @transform_0, window_bounds = array<i64: 16, 576>}, {pipeline_mode = #tpu.pipeline_mode<synchronous>, transform_indices = @transform_1, window_bounds = array<i64: 576, 64>}, {pipeline_mode = #tpu.pipeline_mode<synchronous>, transform_indices = @transform_2, window_bounds = array<i64: 1, 64>}, {transform_indices = @transform_3, window_bounds = array<i64: 16, 64>}]} {
    %c0 = arith.constant 0 : index
    %c0_0 = arith.constant 0 : index
    %0 = vector.load %arg1[%c0, %c0_0] : memref<16x576xf32, #tpu.memory_space<vmem>>, vector<16x576xf32>
    %c0_1 = arith.constant 0 : index
    %c0_2 = arith.constant 0 : index
    %1 = vector.load %arg2[%c0_1, %c0_2] : memref<576x64xf32, #tpu.memory_space<vmem>>, vector<576x64xf32>
    %cst = arith.constant dense<0.000000e+00> : vector<16x64xf32>
    %2 = tpu.matmul %0, %1, %cst {dimension_numbers = #tpu.dot_dimension_numbers<[1], [0], [0], [1], [0, 0, 1, 1], [], []>} : vector<16x576xf32>, vector<576x64xf32>, vector<16x64xf32> -> vector<16x64xf32>
    %c0_3 = arith.constant 0 : index
    %c0_4 = arith.constant 0 : index
    %3 = vector.load %arg3[%c0_3, %c0_4] : memref<1x64xf32, #tpu.memory_space<vmem>>, vector<1x64xf32>
    %4 = vector.broadcast %3 : vector<1x64xf32> to vector<16x64xf32>
    %5 = arith.addf %2, %4 : vector<16x64xf32>
    %cst_5 = arith.constant 0.000000e+00 : f32
    %6 = vector.broadcast %cst_5 : f32 to vector<16x64xf32>
    %7 = arith.maximumf %5, %6 : vector<16x64xf32>
    %c0_6 = arith.constant 0 : index
    %c0_7 = arith.constant 0 : index
    %8 = vector.load %arg4[%c0_6, %c0_7] : memref<16x64xf32, #tpu.memory_space<vmem>>, vector<16x64xf32>
    tpu.vector_store %arg4[%c0_6, %c0_7], %7 {strides = array<i32>} : memref<16x64xf32, #tpu.memory_space<vmem>>, vector<16x64xf32>,
    return
  }
  func.func @transform_0(%arg0: i32) -> (i32, i32) {
    %c0_i32 = arith.constant 0 : i32
    %c0_i32_0 = arith.constant 0 : i32
    return %arg0, %c0_i32 : i32, i32
  }
  func.func @transform_1(%arg0: i32) -> (i32, i32) {
    %c0_i32 = arith.constant 0 : i32
    %c0_i32_0 = arith.constant 0 : i32
    %c0_i32_1 = arith.constant 0 : i32
    return %c0_i32, %c0_i32_0 : i32, i32
  }
  func.func @transform_2(%arg0: i32) -> (i32, i32) {
    %c0_i32 = arith.constant 0 : i32
    %c0_i32_0 = arith.constant 0 : i32
    %c0_i32_1 = arith.constant 0 : i32
    return %c0_i32, %c0_i32_0 : i32, i32
  }
  func.func @transform_3(%arg0: i32) -> (i32, i32) {
    %c0_i32 = arith.constant 0 : i32
    %c0_i32_0 = arith.constant 0 : i32
    return %arg0, %c0_i32 : i32, i32
  }
}

module attributes {stable_mosaic.version = 11 : i64} {
  func.func @_matmul_affine_kernel(%arg0: i32, %arg1: memref<8x576xf32, #tpu.memory_space<vmem>>, %arg2: memref<576x64xf32, #tpu.memory_space<vmem>>, %arg3: memref<1x64xf32, #tpu.memory_space<vmem>>, %arg4: memref<8x64xf32, #tpu.memory_space<vmem>>) attributes {dimension_semantics = [#tpu.dimension_semantics<parallel>], iteration_bounds = array<i64: 1>, scalar_prefetch = 0 : i64, scratch_operands = 0 : i64, tpu.core_type = #tpu.core_type<tc>, window_params = [{transform_indices = @transform_0, window_bounds = array<i64: 8, 576>}, {pipeline_mode = #tpu.pipeline_mode<synchronous>, transform_indices = @transform_1, window_bounds = array<i64: 576, 64>}, {pipeline_mode = #tpu.pipeline_mode<synchronous>, transform_indices = @transform_2, window_bounds = array<i64: 1, 64>}, {transform_indices = @transform_3, window_bounds = array<i64: 8, 64>}]} {
    %c0 = arith.constant 0 : index
    %c0_0 = arith.constant 0 : index
    %0 = vector.load %arg1[%c0, %c0_0] : memref<8x576xf32, #tpu.memory_space<vmem>>, vector<8x576xf32>
    %c0_1 = arith.constant 0 : index
    %c0_2 = arith.constant 0 : index
    %1 = vector.load %arg2[%c0_1, %c0_2] : memref<576x64xf32, #tpu.memory_space<vmem>>, vector<576x64xf32>
    %cst = arith.constant dense<0.000000e+00> : vector<8x64xf32>
    %2 = tpu.matmul %0, %1, %cst {dimension_numbers = #tpu.dot_dimension_numbers<[1], [0], [0], [1], [0, 0, 1, 1], [], []>} : vector<8x576xf32>, vector<576x64xf32>, vector<8x64xf32> -> vector<8x64xf32>
    %c0_3 = arith.constant 0 : index
    %c0_4 = arith.constant 0 : index
    %3 = vector.load %arg3[%c0_3, %c0_4] : memref<1x64xf32, #tpu.memory_space<vmem>>, vector<1x64xf32>
    %4 = vector.broadcast %3 : vector<1x64xf32> to vector<8x64xf32>
    %5 = arith.addf %2, %4 : vector<8x64xf32>
    %c0_5 = arith.constant 0 : index
    %c0_6 = arith.constant 0 : index
    %6 = vector.load %arg4[%c0_5, %c0_6] : memref<8x64xf32, #tpu.memory_space<vmem>>, vector<8x64xf32>
    tpu.vector_store %arg4[%c0_5, %c0_6], %5 {strides = array<i32>} : memref<8x64xf32, #tpu.memory_space<vmem>>, vector<8x64xf32>,
    return
  }
  func.func @transform_0(%arg0: i32) -> (i32, i32) {
    %c0_i32 = arith.constant 0 : i32
    %c0_i32_0 = arith.constant 0 : i32
    return %arg0, %c0_i32 : i32, i32
  }
  func.func @transform_1(%arg0: i32) -> (i32, i32) {
    %c0_i32 = arith.constant 0 : i32
    %c0_i32_0 = arith.constant 0 : i32
    %c0_i32_1 = arith.constant 0 : i32
    return %c0_i32, %c0_i32_0 : i32, i32
  }
  func.func @transform_2(%arg0: i32) -> (i32, i32) {
    %c0_i32 = arith.constant 0 : i32
    %c0_i32_0 = arith.constant 0 : i32
    %c0_i32_1 = arith.constant 0 : i32
    return %c0_i32, %c0_i32_0 : i32, i32
  }
  func.func @transform_3(%arg0: i32) -> (i32, i32) {
    %c0_i32 = arith.constant 0 : i32
    %c0_i32_0 = arith.constant 0 : i32
    return %arg0, %c0_i32 : i32, i32
  }
}

module attributes {stable_mosaic.version = 11 : i64} {
  func.func @_matmul_affine_kernel(%arg0: i32, %arg1: memref<8x576xf32, #tpu.memory_space<vmem>>, %arg2: memref<576x64xf32, #tpu.memory_space<vmem>>, %arg3: memref<1x64xf32, #tpu.memory_space<vmem>>, %arg4: memref<8x64xf32, #tpu.memory_space<vmem>>) attributes {dimension_semantics = [#tpu.dimension_semantics<parallel>], iteration_bounds = array<i64: 1>, scalar_prefetch = 0 : i64, scratch_operands = 0 : i64, tpu.core_type = #tpu.core_type<tc>, window_params = [{transform_indices = @transform_0, window_bounds = array<i64: 8, 576>}, {pipeline_mode = #tpu.pipeline_mode<synchronous>, transform_indices = @transform_1, window_bounds = array<i64: 576, 64>}, {pipeline_mode = #tpu.pipeline_mode<synchronous>, transform_indices = @transform_2, window_bounds = array<i64: 1, 64>}, {transform_indices = @transform_3, window_bounds = array<i64: 8, 64>}]} {
    %c0 = arith.constant 0 : index
    %c0_0 = arith.constant 0 : index
    %0 = vector.load %arg1[%c0, %c0_0] : memref<8x576xf32, #tpu.memory_space<vmem>>, vector<8x576xf32>
    %c0_1 = arith.constant 0 : index
    %c0_2 = arith.constant 0 : index
    %1 = vector.load %arg2[%c0_1, %c0_2] : memref<576x64xf32, #tpu.memory_space<vmem>>, vector<576x64xf32>
    %cst = arith.constant dense<0.000000e+00> : vector<8x64xf32>
    %2 = tpu.matmul %0, %1, %cst {dimension_numbers = #tpu.dot_dimension_numbers<[1], [0], [0], [1], [0, 0, 1, 1], [], []>} : vector<8x576xf32>, vector<576x64xf32>, vector<8x64xf32> -> vector<8x64xf32>
    %c0_3 = arith.constant 0 : index
    %c0_4 = arith.constant 0 : index
    %3 = vector.load %arg3[%c0_3, %c0_4] : memref<1x64xf32, #tpu.memory_space<vmem>>, vector<1x64xf32>
    %4 = vector.broadcast %3 : vector<1x64xf32> to vector<8x64xf32>
    %5 = arith.addf %2, %4 : vector<8x64xf32>
    %cst_5 = arith.constant 0.000000e+00 : f32
    %6 = vector.broadcast %cst_5 : f32 to vector<8x64xf32>
    %7 = arith.maximumf %5, %6 : vector<8x64xf32>
    %c0_6 = arith.constant 0 : index
    %c0_7 = arith.constant 0 : index
    %8 = vector.load %arg4[%c0_6, %c0_7] : memref<8x64xf32, #tpu.memory_space<vmem>>, vector<8x64xf32>
    tpu.vector_store %arg4[%c0_6, %c0_7], %7 {strides = array<i32>} : memref<8x64xf32, #tpu.memory_space<vmem>>, vector<8x64xf32>,
    return
  }
  func.func @transform_0(%arg0: i32) -> (i32, i32) {
    %c0_i32 = arith.constant 0 : i32
    %c0_i32_0 = arith.constant 0 : i32
    return %arg0, %c0_i32 : i32, i32
  }
  func.func @transform_1(%arg0: i32) -> (i32, i32) {
    %c0_i32 = arith.constant 0 : i32
    %c0_i32_0 = arith.constant 0 : i32
    %c0_i32_1 = arith.constant 0 : i32
    return %c0_i32, %c0_i32_0 : i32, i32
  }
  func.func @transform_2(%arg0: i32) -> (i32, i32) {
    %c0_i32 = arith.constant 0 : i32
    %c0_i32_0 = arith.constant 0 : i32
    %c0_i32_1 = arith.constant 0 : i32
    return %c0_i32, %c0_i32_0 : i32, i32
  }
  func.func @transform_3(%arg0: i32) -> (i32, i32) {
    %c0_i32 = arith.constant 0 : i32
    %c0_i32_0 = arith.constant 0 : i32
    return %arg0, %c0_i32 : i32, i32
  }
}

module attributes {stable_mosaic.version = 11 : i64} {
  func.func @_matmul_affine_kernel(%arg0: i32, %arg1: memref<8x64xf32, #tpu.memory_space<vmem>>, %arg2: memref<64x64xf32, #tpu.memory_space<vmem>>, %arg3: memref<1x64xf32, #tpu.memory_space<vmem>>, %arg4: memref<8x64xf32, #tpu.memory_space<vmem>>) attributes {dimension_semantics = [#tpu.dimension_semantics<parallel>], iteration_bounds = array<i64: 1>, scalar_prefetch = 0 : i64, scratch_operands = 0 : i64, tpu.core_type = #tpu.core_type<tc>, window_params = [{transform_indices = @transform_0, window_bounds = array<i64: 8, 64>}, {pipeline_mode = #tpu.pipeline_mode<synchronous>, transform_indices = @transform_1, window_bounds = array<i64: 64, 64>}, {pipeline_mode = #tpu.pipeline_mode<synchronous>, transform_indices = @transform_2, window_bounds = array<i64: 1, 64>}, {transform_indices = @transform_3, window_bounds = array<i64: 8, 64>}]} {
    %c0 = arith.constant 0 : index
    %c0_0 = arith.constant 0 : index
    %0 = vector.load %arg1[%c0, %c0_0] : memref<8x64xf32, #tpu.memory_space<vmem>>, vector<8x64xf32>
    %c0_1 = arith.constant 0 : index
    %c0_2 = arith.constant 0 : index
    %1 = vector.load %arg2[%c0_1, %c0_2] : memref<64x64xf32, #tpu.memory_space<vmem>>, vector<64x64xf32>
    %cst = arith.constant dense<0.000000e+00> : vector<8x64xf32>
    %2 = tpu.matmul %0, %1, %cst {dimension_numbers = #tpu.dot_dimension_numbers<[1], [0], [0], [1], [0, 0, 1, 1], [], []>} : vector<8x64xf32>, vector<64x64xf32>, vector<8x64xf32> -> vector<8x64xf32>
    %c0_3 = arith.constant 0 : index
    %c0_4 = arith.constant 0 : index
    %3 = vector.load %arg3[%c0_3, %c0_4] : memref<1x64xf32, #tpu.memory_space<vmem>>, vector<1x64xf32>
    %4 = vector.broadcast %3 : vector<1x64xf32> to vector<8x64xf32>
    %5 = arith.addf %2, %4 : vector<8x64xf32>
    %c0_5 = arith.constant 0 : index
    %c0_6 = arith.constant 0 : index
    %6 = vector.load %arg4[%c0_5, %c0_6] : memref<8x64xf32, #tpu.memory_space<vmem>>, vector<8x64xf32>
    tpu.vector_store %arg4[%c0_5, %c0_6], %5 {strides = array<i32>} : memref<8x64xf32, #tpu.memory_space<vmem>>, vector<8x64xf32>,
    return
  }
  func.func @transform_0(%arg0: i32) -> (i32, i32) {
    %c0_i32 = arith.constant 0 : i32
    %c0_i32_0 = arith.constant 0 : i32
    return %arg0, %c0_i32 : i32, i32
  }
  func.func @transform_1(%arg0: i32) -> (i32, i32) {
    %c0_i32 = arith.constant 0 : i32
    %c0_i32_0 = arith.constant 0 : i32
    %c0_i32_1 = arith.constant 0 : i32
    return %c0_i32, %c0_i32_0 : i32, i32
  }
  func.func @transform_2(%arg0: i32) -> (i32, i32) {
    %c0_i32 = arith.constant 0 : i32
    %c0_i32_0 = arith.constant 0 : i32
    %c0_i32_1 = arith.constant 0 : i32
    return %c0_i32, %c0_i32_0 : i32, i32
  }
  func.func @transform_3(%arg0: i32) -> (i32, i32) {
    %c0_i32 = arith.constant 0 : i32
    %c0_i32_0 = arith.constant 0 : i32
    return %arg0, %c0_i32 : i32, i32
  }
}

module attributes {stable_mosaic.version = 11 : i64} {
  func.func @_matmul_affine_kernel(%arg0: i32, %arg1: memref<8x144xf32, #tpu.memory_space<vmem>>, %arg2: memref<144x16xf32, #tpu.memory_space<vmem>>, %arg3: memref<1x16xf32, #tpu.memory_space<vmem>>, %arg4: memref<8x16xf32, #tpu.memory_space<vmem>>) attributes {dimension_semantics = [#tpu.dimension_semantics<parallel>], iteration_bounds = array<i64: 1>, scalar_prefetch = 0 : i64, scratch_operands = 0 : i64, tpu.core_type = #tpu.core_type<tc>, window_params = [{transform_indices = @transform_0, window_bounds = array<i64: 8, 144>}, {pipeline_mode = #tpu.pipeline_mode<synchronous>, transform_indices = @transform_1, window_bounds = array<i64: 144, 16>}, {pipeline_mode = #tpu.pipeline_mode<synchronous>, transform_indices = @transform_2, window_bounds = array<i64: 1, 16>}, {transform_indices = @transform_3, window_bounds = array<i64: 8, 16>}]} {
    %c0 = arith.constant 0 : index
    %c0_0 = arith.constant 0 : index
    %0 = vector.load %arg1[%c0, %c0_0] : memref<8x144xf32, #tpu.memory_space<vmem>>, vector<8x144xf32>
    %c0_1 = arith.constant 0 : index
    %c0_2 = arith.constant 0 : index
    %1 = vector.load %arg2[%c0_1, %c0_2] : memref<144x16xf32, #tpu.memory_space<vmem>>, vector<144x16xf32>
    %cst = arith.constant dense<0.000000e+00> : vector<8x16xf32>
    %2 = tpu.matmul %0, %1, %cst {dimension_numbers = #tpu.dot_dimension_numbers<[1], [0], [0], [1], [0, 0, 1, 1], [], []>} : vector<8x144xf32>, vector<144x16xf32>, vector<8x16xf32> -> vector<8x16xf32>
    %c0_3 = arith.constant 0 : index
    %c0_4 = arith.constant 0 : index
    %3 = vector.load %arg3[%c0_3, %c0_4] : memref<1x16xf32, #tpu.memory_space<vmem>>, vector<1x16xf32>
    %4 = vector.broadcast %3 : vector<1x16xf32> to vector<8x16xf32>
    %5 = arith.addf %2, %4 : vector<8x16xf32>
    %c0_5 = arith.constant 0 : index
    %c0_6 = arith.constant 0 : index
    %6 = vector.load %arg4[%c0_5, %c0_6] : memref<8x16xf32, #tpu.memory_space<vmem>>, vector<8x16xf32>
    tpu.vector_store %arg4[%c0_5, %c0_6], %5 {strides = array<i32>} : memref<8x16xf32, #tpu.memory_space<vmem>>, vector<8x16xf32>,
    return
  }
  func.func @transform_0(%arg0: i32) -> (i32, i32) {
    %c0_i32 = arith.constant 0 : i32
    %c0_i32_0 = arith.constant 0 : i32
    return %arg0, %c0_i32 : i32, i32
  }
  func.func @transform_1(%arg0: i32) -> (i32, i32) {
    %c0_i32 = arith.constant 0 : i32
    %c0_i32_0 = arith.constant 0 : i32
    %c0_i32_1 = arith.constant 0 : i32
    return %c0_i32, %c0_i32_0 : i32, i32
  }
  func.func @transform_2(%arg0: i32) -> (i32, i32) {
    %c0_i32 = arith.constant 0 : i32
    %c0_i32_0 = arith.constant 0 : i32
    %c0_i32_1 = arith.constant 0 : i32
    return %c0_i32, %c0_i32_0 : i32, i32
  }
  func.func @transform_3(%arg0: i32) -> (i32, i32) {
    %c0_i32 = arith.constant 0 : i32
    %c0_i32_0 = arith.constant 0 : i32
    return %arg0, %c0_i32 : i32, i32
  }
}

module attributes {stable_mosaic.version = 11 : i64} {
  func.func @_matmul_affine_kernel(%arg0: i32, %arg1: memref<8x400xf32, #tpu.memory_space<vmem>>, %arg2: memref<400x16xf32, #tpu.memory_space<vmem>>, %arg3: memref<1x16xf32, #tpu.memory_space<vmem>>, %arg4: memref<8x16xf32, #tpu.memory_space<vmem>>) attributes {dimension_semantics = [#tpu.dimension_semantics<parallel>], iteration_bounds = array<i64: 1>, scalar_prefetch = 0 : i64, scratch_operands = 0 : i64, tpu.core_type = #tpu.core_type<tc>, window_params = [{transform_indices = @transform_0, window_bounds = array<i64: 8, 400>}, {pipeline_mode = #tpu.pipeline_mode<synchronous>, transform_indices = @transform_1, window_bounds = array<i64: 400, 16>}, {pipeline_mode = #tpu.pipeline_mode<synchronous>, transform_indices = @transform_2, window_bounds = array<i64: 1, 16>}, {transform_indices = @transform_3, window_bounds = array<i64: 8, 16>}]} {
    %c0 = arith.constant 0 : index
    %c0_0 = arith.constant 0 : index
    %0 = vector.load %arg1[%c0, %c0_0] : memref<8x400xf32, #tpu.memory_space<vmem>>, vector<8x400xf32>
    %c0_1 = arith.constant 0 : index
    %c0_2 = arith.constant 0 : index
    %1 = vector.load %arg2[%c0_1, %c0_2] : memref<400x16xf32, #tpu.memory_space<vmem>>, vector<400x16xf32>
    %cst = arith.constant dense<0.000000e+00> : vector<8x16xf32>
    %2 = tpu.matmul %0, %1, %cst {dimension_numbers = #tpu.dot_dimension_numbers<[1], [0], [0], [1], [0, 0, 1, 1], [], []>} : vector<8x400xf32>, vector<400x16xf32>, vector<8x16xf32> -> vector<8x16xf32>
    %c0_3 = arith.constant 0 : index
    %c0_4 = arith.constant 0 : index
    %3 = vector.load %arg3[%c0_3, %c0_4] : memref<1x16xf32, #tpu.memory_space<vmem>>, vector<1x16xf32>
    %4 = vector.broadcast %3 : vector<1x16xf32> to vector<8x16xf32>
    %5 = arith.addf %2, %4 : vector<8x16xf32>
    %c0_5 = arith.constant 0 : index
    %c0_6 = arith.constant 0 : index
    %6 = vector.load %arg4[%c0_5, %c0_6] : memref<8x16xf32, #tpu.memory_space<vmem>>, vector<8x16xf32>
    tpu.vector_store %arg4[%c0_5, %c0_6], %5 {strides = array<i32>} : memref<8x16xf32, #tpu.memory_space<vmem>>, vector<8x16xf32>,
    return
  }
  func.func @transform_0(%arg0: i32) -> (i32, i32) {
    %c0_i32 = arith.constant 0 : i32
    %c0_i32_0 = arith.constant 0 : i32
    return %arg0, %c0_i32 : i32, i32
  }
  func.func @transform_1(%arg0: i32) -> (i32, i32) {
    %c0_i32 = arith.constant 0 : i32
    %c0_i32_0 = arith.constant 0 : i32
    %c0_i32_1 = arith.constant 0 : i32
    return %c0_i32, %c0_i32_0 : i32, i32
  }
  func.func @transform_2(%arg0: i32) -> (i32, i32) {
    %c0_i32 = arith.constant 0 : i32
    %c0_i32_0 = arith.constant 0 : i32
    %c0_i32_1 = arith.constant 0 : i32
    return %c0_i32, %c0_i32_0 : i32, i32
  }
  func.func @transform_3(%arg0: i32) -> (i32, i32) {
    %c0_i32 = arith.constant 0 : i32
    %c0_i32_0 = arith.constant 0 : i32
    return %arg0, %c0_i32 : i32, i32
  }
}

module attributes {stable_mosaic.version = 11 : i64} {
  func.func @_matmul_affine_kernel(%arg0: i32, %arg1: memref<8x784xf32, #tpu.memory_space<vmem>>, %arg2: memref<784x16xf32, #tpu.memory_space<vmem>>, %arg3: memref<1x16xf32, #tpu.memory_space<vmem>>, %arg4: memref<8x16xf32, #tpu.memory_space<vmem>>) attributes {dimension_semantics = [#tpu.dimension_semantics<parallel>], iteration_bounds = array<i64: 1>, scalar_prefetch = 0 : i64, scratch_operands = 0 : i64, tpu.core_type = #tpu.core_type<tc>, window_params = [{transform_indices = @transform_0, window_bounds = array<i64: 8, 784>}, {pipeline_mode = #tpu.pipeline_mode<synchronous>, transform_indices = @transform_1, window_bounds = array<i64: 784, 16>}, {pipeline_mode = #tpu.pipeline_mode<synchronous>, transform_indices = @transform_2, window_bounds = array<i64: 1, 16>}, {transform_indices = @transform_3, window_bounds = array<i64: 8, 16>}]} {
    %c0 = arith.constant 0 : index
    %c0_0 = arith.constant 0 : index
    %0 = vector.load %arg1[%c0, %c0_0] : memref<8x784xf32, #tpu.memory_space<vmem>>, vector<8x784xf32>
    %c0_1 = arith.constant 0 : index
    %c0_2 = arith.constant 0 : index
    %1 = vector.load %arg2[%c0_1, %c0_2] : memref<784x16xf32, #tpu.memory_space<vmem>>, vector<784x16xf32>
    %cst = arith.constant dense<0.000000e+00> : vector<8x16xf32>
    %2 = tpu.matmul %0, %1, %cst {dimension_numbers = #tpu.dot_dimension_numbers<[1], [0], [0], [1], [0, 0, 1, 1], [], []>} : vector<8x784xf32>, vector<784x16xf32>, vector<8x16xf32> -> vector<8x16xf32>
    %c0_3 = arith.constant 0 : index
    %c0_4 = arith.constant 0 : index
    %3 = vector.load %arg3[%c0_3, %c0_4] : memref<1x16xf32, #tpu.memory_space<vmem>>, vector<1x16xf32>
    %4 = vector.broadcast %3 : vector<1x16xf32> to vector<8x16xf32>
    %5 = arith.addf %2, %4 : vector<8x16xf32>
    %c0_5 = arith.constant 0 : index
    %c0_6 = arith.constant 0 : index
    %6 = vector.load %arg4[%c0_5, %c0_6] : memref<8x16xf32, #tpu.memory_space<vmem>>, vector<8x16xf32>
    tpu.vector_store %arg4[%c0_5, %c0_6], %5 {strides = array<i32>} : memref<8x16xf32, #tpu.memory_space<vmem>>, vector<8x16xf32>,
    return
  }
  func.func @transform_0(%arg0: i32) -> (i32, i32) {
    %c0_i32 = arith.constant 0 : i32
    %c0_i32_0 = arith.constant 0 : i32
    return %arg0, %c0_i32 : i32, i32
  }
  func.func @transform_1(%arg0: i32) -> (i32, i32) {
    %c0_i32 = arith.constant 0 : i32
    %c0_i32_0 = arith.constant 0 : i32
    %c0_i32_1 = arith.constant 0 : i32
    return %c0_i32, %c0_i32_0 : i32, i32
  }
  func.func @transform_2(%arg0: i32) -> (i32, i32) {
    %c0_i32 = arith.constant 0 : i32
    %c0_i32_0 = arith.constant 0 : i32
    %c0_i32_1 = arith.constant 0 : i32
    return %c0_i32, %c0_i32_0 : i32, i32
  }
  func.func @transform_3(%arg0: i32) -> (i32, i32) {
    %c0_i32 = arith.constant 0 : i32
    %c0_i32_0 = arith.constant 0 : i32
    return %arg0, %c0_i32 : i32, i32
  }
}

module attributes {stable_mosaic.version = 11 : i64} {
  func.func @_matmul_affine_kernel(%arg0: i32, %arg1: memref<8x1296xf32, #tpu.memory_space<vmem>>, %arg2: memref<1296x16xf32, #tpu.memory_space<vmem>>, %arg3: memref<1x16xf32, #tpu.memory_space<vmem>>, %arg4: memref<8x16xf32, #tpu.memory_space<vmem>>) attributes {dimension_semantics = [#tpu.dimension_semantics<parallel>], iteration_bounds = array<i64: 1>, scalar_prefetch = 0 : i64, scratch_operands = 0 : i64, tpu.core_type = #tpu.core_type<tc>, window_params = [{transform_indices = @transform_0, window_bounds = array<i64: 8, 1296>}, {pipeline_mode = #tpu.pipeline_mode<synchronous>, transform_indices = @transform_1, window_bounds = array<i64: 1296, 16>}, {pipeline_mode = #tpu.pipeline_mode<synchronous>, transform_indices = @transform_2, window_bounds = array<i64: 1, 16>}, {transform_indices = @transform_3, window_bounds = array<i64: 8, 16>}]} {
    %c0 = arith.constant 0 : index
    %c0_0 = arith.constant 0 : index
    %0 = vector.load %arg1[%c0, %c0_0] : memref<8x1296xf32, #tpu.memory_space<vmem>>, vector<8x1296xf32>
    %c0_1 = arith.constant 0 : index
    %c0_2 = arith.constant 0 : index
    %1 = vector.load %arg2[%c0_1, %c0_2] : memref<1296x16xf32, #tpu.memory_space<vmem>>, vector<1296x16xf32>
    %cst = arith.constant dense<0.000000e+00> : vector<8x16xf32>
    %2 = tpu.matmul %0, %1, %cst {dimension_numbers = #tpu.dot_dimension_numbers<[1], [0], [0], [1], [0, 0, 1, 1], [], []>} : vector<8x1296xf32>, vector<1296x16xf32>, vector<8x16xf32> -> vector<8x16xf32>
    %c0_3 = arith.constant 0 : index
    %c0_4 = arith.constant 0 : index
    %3 = vector.load %arg3[%c0_3, %c0_4] : memref<1x16xf32, #tpu.memory_space<vmem>>, vector<1x16xf32>
    %4 = vector.broadcast %3 : vector<1x16xf32> to vector<8x16xf32>
    %5 = arith.addf %2, %4 : vector<8x16xf32>
    %c0_5 = arith.constant 0 : index
    %c0_6 = arith.constant 0 : index
    %6 = vector.load %arg4[%c0_5, %c0_6] : memref<8x16xf32, #tpu.memory_space<vmem>>, vector<8x16xf32>
    tpu.vector_store %arg4[%c0_5, %c0_6], %5 {strides = array<i32>} : memref<8x16xf32, #tpu.memory_space<vmem>>, vector<8x16xf32>,
    return
  }
  func.func @transform_0(%arg0: i32) -> (i32, i32) {
    %c0_i32 = arith.constant 0 : i32
    %c0_i32_0 = arith.constant 0 : i32
    return %arg0, %c0_i32 : i32, i32
  }
  func.func @transform_1(%arg0: i32) -> (i32, i32) {
    %c0_i32 = arith.constant 0 : i32
    %c0_i32_0 = arith.constant 0 : i32
    %c0_i32_1 = arith.constant 0 : i32
    return %c0_i32, %c0_i32_0 : i32, i32
  }
  func.func @transform_2(%arg0: i32) -> (i32, i32) {
    %c0_i32 = arith.constant 0 : i32
    %c0_i32_0 = arith.constant 0 : i32
    %c0_i32_1 = arith.constant 0 : i32
    return %c0_i32, %c0_i32_0 : i32, i32
  }
  func.func @transform_3(%arg0: i32) -> (i32, i32) {
    %c0_i32 = arith.constant 0 : i32
    %c0_i32_0 = arith.constant 0 : i32
    return %arg0, %c0_i32 : i32, i32
  }
}

module attributes {stable_mosaic.version = 11 : i64} {
  func.func @_psa_se_kernel(%arg0: i32, %arg1: memref<1x2x2x16xf32, #tpu.memory_space<vmem>>, %arg2: memref<1x2x2x16xf32, #tpu.memory_space<vmem>>, %arg3: memref<1x16x8xf32, #tpu.memory_space<vmem>>, %arg4: memref<1x8x16xf32, #tpu.memory_space<vmem>>, %arg5: memref<1x2x2x16xf32, #tpu.memory_space<vmem>>) attributes {dimension_semantics = [#tpu.dimension_semantics<parallel>], iteration_bounds = array<i64: 4>, scalar_prefetch = 0 : i64, scratch_operands = 0 : i64, tpu.core_type = #tpu.core_type<tc>, window_params = [{transform_indices = @transform_0, window_bounds = array<i64: 1, 2, 2, 16>}, {transform_indices = @transform_1, window_bounds = array<i64: 1, 2, 2, 16>}, {transform_indices = @transform_2, window_bounds = array<i64: 1, 16, 8>}, {transform_indices = @transform_3, window_bounds = array<i64: 1, 8, 16>}, {transform_indices = @transform_4, window_bounds = array<i64: 1, 2, 2, 16>}]} {
    %c0 = arith.constant 0 : index
    %c0_0 = arith.constant 0 : index
    %c0_1 = arith.constant 0 : index
    %c0_2 = arith.constant 0 : index
    %0 = vector.load %arg1[%c0, %c0_0, %c0_1, %c0_2] : memref<1x2x2x16xf32, #tpu.memory_space<vmem>>, vector<1x2x2x16xf32>
    %1 = vector.shape_cast %0 : vector<1x2x2x16xf32> to vector<2x2x16xf32>
    %c0_3 = arith.constant 0 : index
    %c0_4 = arith.constant 0 : index
    %c0_5 = arith.constant 0 : index
    %c0_6 = arith.constant 0 : index
    %2 = vector.load %arg2[%c0_3, %c0_4, %c0_5, %c0_6] : memref<1x2x2x16xf32, #tpu.memory_space<vmem>>, vector<1x2x2x16xf32>
    %3 = vector.shape_cast %2 : vector<1x2x2x16xf32> to vector<2x2x16xf32>
    %cst = arith.constant dense<0.000000e+00> : vector<2x16xf32>
    %4 = vector.multi_reduction <add>, %1, %cst [1] : vector<2x2x16xf32> to vector<2x16xf32>
    %cst_7 = arith.constant 2.000000e+00 : f32
    %5 = vector.broadcast %cst_7 : f32 to vector<2x16xf32>
    %6 = arith.divf %4, %5 : vector<2x16xf32>
    %c0_8 = arith.constant 0 : index
    %c0_9 = arith.constant 0 : index
    %c0_10 = arith.constant 0 : index
    %7 = vector.load %arg3[%c0_8, %c0_9, %c0_10] : memref<1x16x8xf32, #tpu.memory_space<vmem>>, vector<1x16x8xf32>
    %8 = vector.shape_cast %7 : vector<1x16x8xf32> to vector<16x8xf32>
    %cst_11 = arith.constant dense<0.000000e+00> : vector<2x8xf32>
    %9 = tpu.matmul %6, %8, %cst_11 {dimension_numbers = #tpu.dot_dimension_numbers<[1], [0], [0], [1], [0, 0, 1, 1], [], []>} : vector<2x16xf32>, vector<16x8xf32>, vector<2x8xf32> -> vector<2x8xf32>
    %cst_12 = arith.constant 0.000000e+00 : f32
    %10 = vector.broadcast %cst_12 : f32 to vector<2x8xf32>
    %11 = arith.maximumf %9, %10 : vector<2x8xf32>
    %c0_13 = arith.constant 0 : index
    %c0_14 = arith.constant 0 : index
    %c0_15 = arith.constant 0 : index
    %12 = vector.load %arg4[%c0_13, %c0_14, %c0_15] : memref<1x8x16xf32, #tpu.memory_space<vmem>>, vector<1x8x16xf32>
    %13 = vector.shape_cast %12 : vector<1x8x16xf32> to vector<8x16xf32>
    %cst_16 = arith.constant dense<0.000000e+00> : vector<2x16xf32>
    %14 = tpu.matmul %11, %13, %cst_16 {dimension_numbers = #tpu.dot_dimension_numbers<[1], [0], [0], [1], [0, 0, 1, 1], [], []>} : vector<2x8xf32>, vector<8x16xf32>, vector<2x16xf32> -> vector<2x16xf32>
    %cst_17 = arith.constant 0.000000e+00 : f32
    %15 = vector.broadcast %cst_17 : f32 to vector<2x16xf32>
    %16 = arith.subf %15, %14 : vector<2x16xf32>
    %17 = math.exp %16 : vector<2x16xf32>
    %cst_18 = arith.constant 1.000000e+00 : f32
    %18 = vector.broadcast %cst_18 : f32 to vector<2x16xf32>
    %19 = arith.addf %18, %17 : vector<2x16xf32>
    %cst_19 = arith.constant 1.000000e+00 : f32
    %20 = vector.broadcast %cst_19 : f32 to vector<2x16xf32>
    %21 = arith.divf %20, %19 : vector<2x16xf32>
    %22 = arith.mulf %3, %1 : vector<2x2x16xf32>
    %23 = vector.shape_cast %21 : vector<2x16xf32> to vector<2x1x16xf32>
    %24 = vector.broadcast %23 : vector<2x1x16xf32> to vector<2x2x16xf32>
    %25 = arith.mulf %22, %24 : vector<2x2x16xf32>
    %c0_20 = arith.constant 0 : index
    %c0_21 = arith.constant 0 : index
    %c0_22 = arith.constant 0 : index
    %c0_23 = arith.constant 0 : index
    %26 = vector.load %arg5[%c0_20, %c0_21, %c0_22, %c0_23] : memref<1x2x2x16xf32, #tpu.memory_space<vmem>>, vector<1x2x2x16xf32>
    %27 = vector.shape_cast %26 : vector<1x2x2x16xf32> to vector<2x2x16xf32>
    %28 = vector.shape_cast %25 : vector<2x2x16xf32> to vector<1x2x2x16xf32>
    tpu.vector_store %arg5[%c0_20, %c0_21, %c0_22, %c0_23], %28 {strides = array<i32>} : memref<1x2x2x16xf32, #tpu.memory_space<vmem>>, vector<1x2x2x16xf32>,
    return
  }
  func.func @transform_0(%arg0: i32) -> (i32, i32, i32, i32) {
    %c0_i32 = arith.constant 0 : i32
    %c0_i32_0 = arith.constant 0 : i32
    %c0_i32_1 = arith.constant 0 : i32
    %c0_i32_2 = arith.constant 0 : i32
    return %arg0, %c0_i32, %c0_i32_0, %c0_i32_1 : i32, i32, i32, i32
  }
  func.func @transform_1(%arg0: i32) -> (i32, i32, i32, i32) {
    %c0_i32 = arith.constant 0 : i32
    %c0_i32_0 = arith.constant 0 : i32
    %c0_i32_1 = arith.constant 0 : i32
    %c0_i32_2 = arith.constant 0 : i32
    return %arg0, %c0_i32, %c0_i32_0, %c0_i32_1 : i32, i32, i32, i32
  }
  func.func @transform_2(%arg0: i32) -> (i32, i32, i32) {
    %c0_i32 = arith.constant 0 : i32
    %c0_i32_0 = arith.constant 0 : i32
    %c0_i32_1 = arith.constant 0 : i32
    return %arg0, %c0_i32, %c0_i32_0 : i32, i32, i32
  }
  func.func @transform_3(%arg0: i32) -> (i32, i32, i32) {
    %c0_i32 = arith.constant 0 : i32
    %c0_i32_0 = arith.constant 0 : i32
    %c0_i32_1 = arith.constant 0 : i32
    return %arg0, %c0_i32, %c0_i32_0 : i32, i32, i32
  }
  func.func @transform_4(%arg0: i32) -> (i32, i32, i32, i32) {
    %c0_i32 = arith.constant 0 : i32
    %c0_i32_0 = arith.constant 0 : i32
    %c0_i32_1 = arith.constant 0 : i32
    %c0_i32_2 = arith.constant 0 : i32
    return %arg0, %c0_i32, %c0_i32_0, %c0_i32_1 : i32, i32, i32, i32
  }
}

</mosaic_0001>

<llo_original>
// kernel: tf_conv_block.11
$region0: #{tf_conv_block.11}
  #allocation0 [shape = 'u32[]', space=smem, size = 0x4, offset = 0x4, fixed_abs, tag = 'smem constant byte address 0x4 - core index']
  #allocation1 [shape = 'u32[144,128]{1,0:T(1,128)}', space=vmem, size = 0x12000, scoped, tag = 'internal scratch']
  %s0 = inlined_call_operand.vmem [shape: f32[4096,100], index: 0, kind: input, shape index: {}]
  %s1 = inlined_call_operand.vmem [shape: f32[100,64], index: 1, kind: input, shape index: {}]
  %s2 = inlined_call_operand.vmem [shape: f32[1,64], index: 2, kind: input, shape index: {}]
  %s3 = inlined_call_operand.vmem [shape: f32[4096,64], index: 3, kind: output, shape index: {}]
  %s4 = sld [smem:[#allocation0]]
  $region45: #{tf_conv_block.11} parent=0
    _
  %s6 = ssub.s32 1, %s4
  %s7 = scalar_select 0, %s6, %s4
  loop: start=0, step=1, limit=10
  $region2: #{tf_conv_block.11} parent=0 // loop_pre_header
    _
  $region3: #{tf_conv_block.11} parent=0 // loop_header
    %s9 = sphi 0, %s13
    %p10 = scmp.ge.s32.totalorder %s9, 10
    %s19 = sphi 0, %s21
    %s22 = sphi 0, %s19
    %s23 = sphi 0, %s22
    %s39 = sphi 0, %s23
    %s43 = sphi 0, %s43
    %s45 = sphi 0, %s43
    %s46 = sphi 0, %s45
    %s60 = sphi 0, %s46
    %s64 = sphi 0, %s64
    %s66 = sphi 0, %s64
    %s67 = sphi 0, %s66
    %s81 = sphi 0, %s67
    %s87 = sphi 0, %s89
    %s90 = sphi 0, %s87
    %s91 = sphi 0, %s90
    %s107 = sphi 0, %s91
  $region4: #{tf_conv_block.11} parent=0 // loop_header_branch
    %12 = sbr.rel (%p10) target = $region8
  $region5: #{tf_conv_block.11} parent=0 // loop_body
    %s14 = ssub.s32 %s9, 1
    %s15 = ssub.s32 %s9, 2
    %s16 = sadd.s32 %s9, 1
    %s17 = ssub.s32 %s9, %s16
    %p18 = scmp.eq.s32.totalorder %s17, 0
    %s20 = sadd.s32 %s19, 1
    %s21 = scalar_select %p18, %s19, %s20
    %p24 = pneg %p18
    %p25 = scmp.eq.s32.totalorder %s9, 7
    %p26 = por %p24, %p25
    %p27 = scmp.ne.s32.totalorder %s19, %s22
    %p28 = scmp.eq.s32.totalorder %s9, 0
    %p29 = por %p27, %p28
    %p30 = scmp.ne.s32.totalorder %s19, %s22
    %p31 = scmp.eq.s32.totalorder %s14, 7
    %p32 = por %p30, %p31
    %p33 = scmp.ne.s32.totalorder %s22, %s23
    %p34 = scmp.eq.s32.totalorder %s14, 0
    %p35 = por %p33, %p34
    %p36 = scmp.ne.s32.totalorder %s22, %s23
    %p37 = scmp.eq.s32.totalorder %s15, 7
    %p38 = por %p36, %p37
    %p40 = scmp.ne.s32.totalorder %s23, %s39
    %p41 = scmp.eq.s32.totalorder %s15, 0
    %p42 = por %p40, %p41
    %s44 = sadd.s32 %s43, 1
    %p47 = scmp.eq.s32.totalorder %s9, 7
    %p48 = scmp.ne.s32.totalorder %s43, %s45
    %p49 = scmp.eq.s32.totalorder %s9, 0
    %p50 = por %p48, %p49
    %p51 = scmp.ne.s32.totalorder %s43, %s45
    %p52 = scmp.eq.s32.totalorder %s14, 7
    %p53 = por %p51, %p52
    %p54 = scmp.ne.s32.totalorder %s45, %s46
    %p55 = scmp.eq.s32.totalorder %s14, 0
    %p56 = por %p54, %p55
    %p57 = scmp.ne.s32.totalorder %s45, %s46
    %p58 = scmp.eq.s32.totalorder %s15, 7
    %p59 = por %p57, %p58
    %p61 = scmp.ne.s32.totalorder %s46, %s60
    %p62 = scmp.eq.s32.totalorder %s15, 0
    %p63 = por %p61, %p62
    %s65 = sadd.s32 %s64, 1
    %p68 = scmp.eq.s32.totalorder %s9, 7
    %p69 = scmp.ne.s32.totalorder %s64, %s66
    %p70 = scmp.eq.s32.totalorder %s9, 0
    %p71 = por %p69, %p70
    %p72 = scmp.ne.s32.totalorder %s64, %s66
    %p73 = scmp.eq.s32.totalorder %s14, 7
    %p74 = por %p72, %p73
    %p75 = scmp.ne.s32.totalorder %s66, %s67
    %p76 = scmp.eq.s32.totalorder %s14, 0
    %p77 = por %p75, %p76
    %p78 = scmp.ne.s32.totalorder %s66, %s67
    %p79 = scmp.eq.s32.totalorder %s15, 7
    %p80 = por %p78, %p79
    %p82 = scmp.ne.s32.totalorder %s67, %s81
    %p83 = scmp.eq.s32.totalorder %s15, 0
    %p84 = por %p82, %p83
    %s85 = ssub.s32 %s9, %s16
    %p86 = scmp.eq.s32.totalorder %s85, 0
    %s88 = sadd.s32 %s87, 1
    %s89 = scalar_select %p86, %s87, %s88
    %p92 = pneg %p86
    %p93 = scmp.eq.s32.totalorder %s9, 7
    %p94 = por %p92, %p93
    %p95 = scmp.ne.s32.totalorder %s87, %s90
    %p96 = scmp.eq.s32.totalorder %s9, 0
    %p97 = por %p95, %p96
    %p98 = scmp.ne.s32.totalorder %s87, %s90
    %p99 = scmp.eq.s32.totalorder %s14, 7
    %p100 = por %p98, %p99
    %p101 = scmp.ne.s32.totalorder %s90, %s91
    %p102 = scmp.eq.s32.totalorder %s14, 0
    %p103 = por %p101, %p102
    %p104 = scmp.ne.s32.totalorder %s90, %s91
    %p105 = scmp.eq.s32.totalorder %s15, 7
    %p106 = por %p104, %p105
    %p108 = scmp.ne.s32.totalorder %s91, %s107
    %p109 = scmp.eq.s32.totalorder %s15, 0
    %p110 = por %p108, %p109
    %p111 = scmp.le.s32.totalorder 1, %s9
    %p112 = scmp.lt.s32.totalorder %s9, 9
    %p113 = pnand %p111, %p112
    %p114 = pneg %p113
    // Predicated region
    $region9: #{tf_conv_block.11} parent=5 // pred_check
      _
    $region10: #{tf_conv_block.11} parent=5 // pred_check_branch
      %116 = sbr.rel (%p113) target = $region12
    $region11: #{tf_conv_block.11} parent=5 // pred_region
      %s117 = ssub.s32 %s9, 1
      // Predicated region
      $region13: #{tf_conv_block.11} parent=11 // pred_check
        %p118 = pneg %p56
      $region14: #{tf_conv_block.11} parent=11 // pred_check_branch
        %120 = sbr.rel (%p118) target = $region16
      $region15: #{tf_conv_block.11} parent=11 // pred_region
        _
      $region16: #{tf_conv_block.11} parent=11 // pred_fallthru
        _
      // Predicated region
      $region17: #{tf_conv_block.11} parent=11 // pred_check
        %p121 = pneg %p77
      $region18: #{tf_conv_block.11} parent=11 // pred_check_branch
        %123 = sbr.rel (%p121) target = $region20
      $region19: #{tf_conv_block.11} parent=11 // pred_region
        _
      $region20: #{tf_conv_block.11} parent=11 // pred_fallthru
        _
    $region12: #{tf_conv_block.11} parent=5 // pred_fallthru
      _
    %p124 = scmp.lt.s32.totalorder %s9, 8
    // Predicated region
    $region21: #{tf_conv_block.11} parent=5 // pred_check
      %p125 = pneg %p124
    $region22: #{tf_conv_block.11} parent=5 // pred_check_branch
      %127 = sbr.rel (%p125) target = $region24
    $region23: #{tf_conv_block.11} parent=5 // pred_region
      // Predicated region
      $region25: #{tf_conv_block.11} parent=23 // pred_check
        %p128 = pneg %p29
      $region26: #{tf_conv_block.11} parent=23 // pred_check_branch
        %130 = sbr.rel (%p128) target = $region28
      $region27: #{tf_conv_block.11} parent=23 // pred_region
        %s131 = smul.u32 64, %s9
        %p132 = scmp.lt.s32.totalorder %s131, 511
        %s133 = scalar_select %p132, %s131, 511
        %s134 = smul.addr %s133, 8
        %s135 = scalar_lea.vmem %s0, %s134
        %s136 = smul.u32 64, %s9
      $region28: #{tf_conv_block.11} parent=23 // pred_fallthru
        _
    $region24: #{tf_conv_block.11} parent=5 // pred_fallthru
      _
    %p137 = scmp.le.s32.totalorder 1, %s9
    %p138 = scmp.lt.s32.totalorder %s9, 9
    %p139 = pnand %p137, %p138
    %p140 = pneg %p139
    // Predicated region
    $region29: #{tf_conv_block.11} parent=5 // pred_check
      _
    $region30: #{tf_conv_block.11} parent=5 // pred_check_branch
      %142 = sbr.rel (%p139) target = $region32
    $region31: #{tf_conv_block.11} parent=5 // pred_region
      %s143 = ssub.s32 %s9, 1
      %s144 = smul.u32 64, %s14
      %p145 = scmp.lt.s32.totalorder %s144, 511
      %s146 = scalar_select %p145, %s144, 511
      %s147 = smul.addr %s146, 8
      %s148 = scalar_lea.vmem %s0, %s147
      %p149 = pneg %p35
      %p150 = pneg %p32
      %p151 = pneg %p56
      %p152 = pneg %p53
      %p153 = pneg %p77
      %p154 = pneg %p74
      %p155 = pneg %p103
      %p156 = pneg %p100
      %s157 = smul.u32 64, %s14
      %p158 = scmp.lt.s32.totalorder %s157, 511
      %s159 = scalar_select %p158, %s157, 511
      %s160 = smul.addr %s159, 8
      %s161 = scalar_lea.vmem %s3, %s160
      %s162 = smul.u32 64, %s14
      %p163 = scmp.lt.s32.totalorder %s162, 511
      %s164 = scalar_select %p163, %s162, 511
      %s165 = smul.addr %s164, 8
      %s166 = scalar_lea.vmem %s0, %s165
      %s167 = smul.u32 64, %s14
      %s168 = smul.u32 64, %s14
      %p169 = scmp.lt.s32.totalorder %s168, 511
      %s170 = scalar_select %p169, %s168, 511
      %s171 = smul.addr %s170, 8
      %s172 = scalar_lea.vmem %s3, %s171
      %s173 = smul.u32 64, %s14
      %v174 = vld [vmem:[%s166] sm:$0xff]
      %v175 = vld [vmem:[%s166 + $0x8] sm:$0xff]
      %v176 = vld [vmem:[%s166 + $0x10] sm:$0xff]
      %v177 = vld [vmem:[%s166 + $0x18] sm:$0xff]
      %v178 = vld [vmem:[%s166 + $0x20] sm:$0xff]
      %v179 = vld [vmem:[%s166 + $0x28] sm:$0xff]
      %v180 = vld [vmem:[%s166 + $0x30] sm:$0xff]
      %v181 = vld [vmem:[%s166 + $0x38] sm:$0xff]
      %v182 = vld [vmem:[%s166 + $0x40] sm:$0xff]
      %v183 = vld [vmem:[%s166 + $0x48] sm:$0xff]
      %v184 = vld [vmem:[%s166 + $0x50] sm:$0xff]
      %v185 = vld [vmem:[%s166 + $0x58] sm:$0xff]
      %v186 = vld [vmem:[%s166 + $0x60] sm:$0xff]
      %v187 = vld [vmem:[%s166 + $0x68] sm:$0xff]
      %v188 = vld [vmem:[%s166 + $0x70] sm:$0xff]
      %v189 = vld [vmem:[%s166 + $0x78] sm:$0xff]
      %v190 = vld [vmem:[%s166 + $0x80] sm:$0xff]
      %v191 = vld [vmem:[%s166 + $0x88] sm:$0xff]
      %v192 = vld [vmem:[%s166 + $0x90] sm:$0xff]
      %v193 = vld [vmem:[%s166 + $0x98] sm:$0xff]
      %v194 = vld [vmem:[%s166 + $0xa0] sm:$0xff]
      %v195 = vld [vmem:[%s166 + $0xa8] sm:$0xff]
      %v196 = vld [vmem:[%s166 + $0xb0] sm:$0xff]
      %v197 = vld [vmem:[%s166 + $0xb8] sm:$0xff]
      %v198 = vld [vmem:[%s166 + $0xc0] sm:$0xff]
      %v199 = vld [vmem:[%s166 + $0xc8] sm:$0xff]
      %v200 = vld [vmem:[%s166 + $0xd0] sm:$0xff]
      %v201 = vld [vmem:[%s166 + $0xd8] sm:$0xff]
      %v202 = vld [vmem:[%s166 + $0xe0] sm:$0xff]
      %v203 = vld [vmem:[%s166 + $0xe8] sm:$0xff]
      %v204 = vld [vmem:[%s166 + $0xf0] sm:$0xff]
      %v205 = vld [vmem:[%s166 + $0xf8] sm:$0xff]
      %v206 = vld [vmem:[%s166 + $0x100] sm:$0xff]
      %v207 = vld [vmem:[%s166 + $0x108] sm:$0xff]
      %v208 = vld [vmem:[%s166 + $0x110] sm:$0xff]
      %v209 = vld [vmem:[%s166 + $0x118] sm:$0xff]
      %v210 = vld [vmem:[%s166 + $0x120] sm:$0xff]
      %v211 = vld [vmem:[%s166 + $0x128] sm:$0xff]
      %v212 = vld [vmem:[%s166 + $0x130] sm:$0xff]
      %v213 = vld [vmem:[%s166 + $0x138] sm:$0xff]
      %v214 = vld [vmem:[%s166 + $0x140] sm:$0xff]
      %v215 = vld [vmem:[%s166 + $0x148] sm:$0xff]
      %v216 = vld [vmem:[%s166 + $0x150] sm:$0xff]
      %v217 = vld [vmem:[%s166 + $0x158] sm:$0xff]
      %v218 = vld [vmem:[%s166 + $0x160] sm:$0xff]
      %v219 = vld [vmem:[%s166 + $0x168] sm:$0xff]
      %v220 = vld [vmem:[%s166 + $0x170] sm:$0xff]
      %v221 = vld [vmem:[%s166 + $0x178] sm:$0xff]
      %v222 = vld [vmem:[%s166 + $0x180] sm:$0xff]
      %v223 = vld [vmem:[%s166 + $0x188] sm:$0xff]
      %v224 = vld [vmem:[%s166 + $0x190] sm:$0xff]
      %v225 = vld [vmem:[%s166 + $0x198] sm:$0xff]
      %v226 = vld [vmem:[%s166 + $0x1a0] sm:$0xff]
      %v227 = vld [vmem:[%s166 + $0x1a8] sm:$0xff]
      %v228 = vld [vmem:[%s166 + $0x1b0] sm:$0xff]
      %v229 = vld [vmem:[%s166 + $0x1b8] sm:$0xff]
      %v230 = vld [vmem:[%s166 + $0x1c0] sm:$0xff]
      %v231 = vld [vmem:[%s166 + $0x1c8] sm:$0xff]
      %v232 = vld [vmem:[%s166 + $0x1d0] sm:$0xff]
      %v233 = vld [vmem:[%s166 + $0x1d8] sm:$0xff]
      %v234 = vld [vmem:[%s166 + $0x1e0] sm:$0xff]
      %v235 = vld [vmem:[%s166 + $0x1e8] sm:$0xff]
      %v236 = vld [vmem:[%s166 + $0x1f0] sm:$0xff]
      %v237 = vld [vmem:[%s166 + $0x1f8] sm:$0xff]
      %v238 = vld [vmem:[%s1] sm:$0xff]
      %v239 = vld [vmem:[%s1 + $0x8] sm:$0xff]
      %v240 = vld [vmem:[%s1 + $0x10] sm:$0xff]
      %v241 = vld [vmem:[%s1 + $0x18] sm:$0xff]
      %v242 = vld [vmem:[%s1 + $0x20] sm:$0xff]
      %v243 = vld [vmem:[%s1 + $0x28] sm:$0xff]
      %v244 = vld [vmem:[%s1 + $0x30] sm:$0xff]
      %v245 = vld [vmem:[%s1 + $0x38] sm:$0xff]
      %v246 = vld [vmem:[%s1 + $0x40] sm:$0xff]
      %v247 = vld [vmem:[%s1 + $0x48] sm:$0xff]
      %v248 = vld [vmem:[%s1 + $0x50] sm:$0xff]
      %v249 = vld [vmem:[%s1 + $0x58] sm:$0xff]
      %v250 = vld [vmem:[%s1 + $0x60] sm:$0xf]
      %v251 = vld [vmem:[%s2] sm:$0x1]
      %v253 = vlaneseq
      %v254 = vshrl.u32 %v253, 7
      %v255 = vsub.s32 0, %v254
      %v256 = vrot.slane %v251, %v255
      %vm258 = vcmask 818176
      %v260 = vsel %vm258, %v174, 0
      %v263 = vsel %vm258, %v175, 0
      %v266 = vsel %vm258, %v176, 0
      %v269 = vsel %vm258, %v177, 0
      %v272 = vsel %vm258, %v178, 0
      %v275 = vsel %vm258, %v179, 0
      %v278 = vsel %vm258, %v180, 0
      %v281 = vsel %vm258, %v181, 0
      %v284 = vsel %vm258, %v182, 0
      %v287 = vsel %vm258, %v183, 0
      %v290 = vsel %vm258, %v184, 0
      %v293 = vsel %vm258, %v185, 0
      %v296 = vsel %vm258, %v186, 0
      %v299 = vsel %vm258, %v187, 0
      %v302 = vsel %vm258, %v188, 0
      %v305 = vsel %vm258, %v189, 0
      %v308 = vsel %vm258, %v190, 0
      %v311 = vsel %vm258, %v191, 0
      %v314 = vsel %vm258, %v192, 0
      %v317 = vsel %vm258, %v193, 0
      %v320 = vsel %vm258, %v194, 0
      %v323 = vsel %vm258, %v195, 0
      %v326 = vsel %vm258, %v196, 0
      %v329 = vsel %vm258, %v197, 0
      %v332 = vsel %vm258, %v198, 0
      %v335 = vsel %vm258, %v199, 0
      %v338 = vsel %vm258, %v200, 0
      %v341 = vsel %vm258, %v201, 0
      %v344 = vsel %vm258, %v202, 0
      %v347 = vsel %vm258, %v203, 0
      %v350 = vsel %vm258, %v204, 0
      %v353 = vsel %vm258, %v205, 0
      %v356 = vsel %vm258, %v206, 0
      %v359 = vsel %vm258, %v207, 0
      %v362 = vsel %vm258, %v208, 0
      %v365 = vsel %vm258, %v209, 0
      %v368 = vsel %vm258, %v210, 0
      %v371 = vsel %vm258, %v211, 0
      %v374 = vsel %vm258, %v212, 0
      %v377 = vsel %vm258, %v213, 0
      %v380 = vsel %vm258, %v214, 0
      %v383 = vsel %vm258, %v215, 0
      %v386 = vsel %vm258, %v216, 0
      %v389 = vsel %vm258, %v217, 0
      %v392 = vsel %vm258, %v218, 0
      %v395 = vsel %vm258, %v219, 0
      %v398 = vsel %vm258, %v220, 0
      %v401 = vsel %vm258, %v221, 0
      %v404 = vsel %vm258, %v222, 0
      %v407 = vsel %vm258, %v223, 0
      %v410 = vsel %vm258, %v224, 0
      %v413 = vsel %vm258, %v225, 0
      %v416 = vsel %vm258, %v226, 0
      %v419 = vsel %vm258, %v227, 0
      %v422 = vsel %vm258, %v228, 0
      %v425 = vsel %vm258, %v229, 0
      %v428 = vsel %vm258, %v230, 0
      %v431 = vsel %vm258, %v231, 0
      %v434 = vsel %vm258, %v232, 0
      %v437 = vsel %vm258, %v233, 0
      %v440 = vsel %vm258, %v234, 0
      %v443 = vsel %vm258, %v235, 0
      %v446 = vsel %vm258, %v236, 0
      %v449 = vsel %vm258, %v237, 0
      %vm451 = vcmask 1043456
      %v453 = vsel %vm451, %v250, 0
      %455 = vmatprep.subr.mxu0 0.0
      %456 = vmatpush1.msra.mxu0 %v238
      %457 = vmatprep.subr.mxu0 0.0
      %458 = vmatpush1.msra.mxu0 %v239
      %459 = vmatprep.subr.mxu0 0.0
      %460 = vmatpush1.msra.mxu0 %v240
      %461 = vmatprep.subr.mxu0 0.0
      %462 = vmatpush1.msra.mxu0 %v241
      %463 = vmatprep.subr.mxu0 0.0
      %464 = vmatpush1.msra.mxu0 %v242
      %465 = vmatprep.subr.mxu0 0.0
      %466 = vmatpush1.msra.mxu0 %v243
      %467 = vmatprep.subr.mxu0 0.0
      %468 = vmatpush1.msra.mxu0 %v244
      %469 = vmatprep.subr.mxu0 0.0
      %470 = vmatpush1.msra.mxu0 %v245
      %471 = vmatprep.subr.mxu0 0.0
      %472 = vmatpush1.msra.mxu0 %v246
      %473 = vmatprep.subr.mxu0 0.0
      %474 = vmatpush1.msra.mxu0 %v247
      %475 = vmatprep.subr.mxu0 0.0
      %476 = vmatpush1.msra.mxu0 %v248
      %477 = vmatprep.subr.mxu0 0.0
      %478 = vmatpush1.msra.mxu0 %v249
      %479 = vmatprep.subr.mxu0 0.0
      %480 = vmatpush1.msra.mxu0 %v453
      %481 = vmatprep.subr.mxu0 0.0
      %482 = vmatpush1.msra.mxu0 0.0
      %483 = vmatprep.subr.mxu0 0.0
      %484 = vmatpush1.msra.mxu0 0.0
      %485 = vmatprep.subr.mxu0 0.0
      %486 = vmatpush1.msra.mxu0 0.0
      %487 = vmatprep.subr.mxu0 0.0
      %488 = vmatpush1.msra.mxu0 0.0
      %489 = vmatprep.subr.mxu0 0.0
      %490 = vmatpush1.msra.mxu0 0.0
      %491 = vmatprep.subr.mxu0 0.0
      %492 = vmatpush1.msra.mxu0 0.0
      %493 = vmatprep.subr.mxu0 0.0
      %494 = vmatpush1.msra.mxu0 0.0
      %495 = vmatprep.subr.mxu0 0.0
      %496 = vmatpush1.msra.mxu0 0.0
      %497 = vmatprep.subr.mxu0 0.0
      %498 = vmatpush1.msra.mxu0 0.0
      %499 = vmatprep.subr.mxu0 0.0
      %500 = vmatpush1.msra.mxu0 0.0
      %501 = vmatprep.subr.mxu0 0.0
      %502 = vmatpush1.msra.mxu0 0.0
      %503 = vmatprep.subr.mxu0 0.0
      %504 = vmatpush1.msra.mxu0 0.0
      %505 = vmatprep.subr.mxu0 0.0
      %506 = vmatpush1.msra.mxu0 0.0
      %507 = vmatprep.subr.mxu0 0.0
      %508 = vmatpush1.msra.mxu0 0.0
      %509 = vmatprep.subr.mxu0 0.0
      %510 = vmatpush1.msra.mxu0 0.0
      %511 = vmatprep.subr.mxu0 0.0
      %512 = vmatpush1.msra.mxu0 0.0
      %513 = vmatprep.subr.mxu0 0.0
      %514 = vmatpush1.msra.mxu0 0.0
      %515 = vmatprep.subr.mxu0 0.0
      %516 = vmatpush1.msra.mxu0 0.0
      %517 = vmatprep.subr.mxu0 0.0
      %518 = vmatpush1.msra.mxu0 0.0
      %519 = vmatprep.mubr.f32.mxu0 0.0
      %520 = vmatmul.mubr.f32.gmra.mrb[0].mxu0 %v260
      %v521 = vpop.f32.mrb[0].mxu0
      %v522 = vadd.f32 %v256, %v521
      %v523 = vpop.f32.mrb[0].mxu0
      %524 = vmatprep.mubr.f32.mxu0 0.0
      %525 = vmatmul.mubr.f32.gmra.mrb[0].mxu0 %v263
      %v526 = vpop.f32.mrb[0].mxu0
      %v527 = vadd.f32 %v256, %v526
      %v528 = vpop.f32.mrb[0].mxu0
      %529 = vmatprep.mubr.f32.mxu0 0.0
      %530 = vmatmul.mubr.f32.gmra.mrb[0].mxu0 %v266
      %v531 = vpop.f32.mrb[0].mxu0
      %v532 = vadd.f32 %v256, %v531
      %v533 = vpop.f32.mrb[0].mxu0
      %534 = vmatprep.mubr.f32.mxu0 0.0
      %535 = vmatmul.mubr.f32.gmra.mrb[0].mxu0 %v269
      %v536 = vpop.f32.mrb[0].mxu0
      %v537 = vadd.f32 %v256, %v536
      %v538 = vpop.f32.mrb[0].mxu0
      %539 = vmatprep.mubr.f32.mxu0 0.0
      %540 = vmatmul.mubr.f32.gmra.mrb[0].mxu0 %v272
      %v541 = vpop.f32.mrb[0].mxu0
      %v542 = vadd.f32 %v256, %v541
      %v543 = vpop.f32.mrb[0].mxu0
      %544 = vmatprep.mubr.f32.mxu0 0.0
      %545 = vmatmul.mubr.f32.gmra.mrb[0].mxu0 %v275
      %v546 = vpop.f32.mrb[0].mxu0
      %v547 = vadd.f32 %v256, %v546
      %v548 = vpop.f32.mrb[0].mxu0
      %549 = vmatprep.mubr.f32.mxu0 0.0
      %550 = vmatmul.mubr.f32.gmra.mrb[0].mxu0 %v278
      %v551 = vpop.f32.mrb[0].mxu0
      %v552 = vadd.f32 %v256, %v551
      %v553 = vpop.f32.mrb[0].mxu0
      %554 = vmatprep.mubr.f32.mxu0 0.0
      %555 = vmatmul.mubr.f32.gmra.mrb[0].mxu0 %v281
      %v556 = vpop.f32.mrb[0].mxu0
      %v557 = vadd.f32 %v256, %v556
      %v558 = vpop.f32.mrb[0].mxu0
      %559 = vmatprep.mubr.f32.mxu0 0.0
      %560 = vmatmul.mubr.f32.gmra.mrb[0].mxu0 %v284
      %v561 = vpop.f32.mrb[0].mxu0
      %v562 = vadd.f32 %v256, %v561
      %v563 = vpop.f32.mrb[0].mxu0
      %564 = vmatprep.mubr.f32.mxu0 0.0
      %565 = vmatmul.mubr.f32.gmra.mrb[0].mxu0 %v287
      %v566 = vpop.f32.mrb[0].mxu0
      %v567 = vadd.f32 %v256, %v566
      %v568 = vpop.f32.mrb[0].mxu0
      %569 = vmatprep.mubr.f32.mxu0 0.0
      %570 = vmatmul.mubr.f32.gmra.mrb[0].mxu0 %v290
      %v571 = vpop.f32.mrb[0].mxu0
      %v572 = vadd.f32 %v256, %v571
      %v573 = vpop.f32.mrb[0].mxu0
      %574 = vmatprep.mubr.f32.mxu0 0.0
      %575 = vmatmul.mubr.f32.gmra.mrb[0].mxu0 %v293
      %v576 = vpop.f32.mrb[0].mxu0
      %v577 = vadd.f32 %v256, %v576
      %v578 = vpop.f32.mrb[0].mxu0
      %579 = vmatprep.mubr.f32.mxu0 0.0
      %580 = vmatmul.mubr.f32.gmra.mrb[0].mxu0 %v296
      %v581 = vpop.f32.mrb[0].mxu0
      %v582 = vadd.f32 %v256, %v581
      %v583 = vpop.f32.mrb[0].mxu0
      %584 = vmatprep.mubr.f32.mxu0 0.0
      %585 = vmatmul.mubr.f32.gmra.mrb[0].mxu0 %v299
      %v586 = vpop.f32.mrb[0].mxu0
      %v587 = vadd.f32 %v256, %v586
      %v588 = vpop.f32.mrb[0].mxu0
      %589 = vmatprep.mubr.f32.mxu0 0.0
      %590 = vmatmul.mubr.f32.gmra.mrb[0].mxu0 %v302
      %v591 = vpop.f32.mrb[0].mxu0
      %v592 = vadd.f32 %v256, %v591
      %v593 = vpop.f32.mrb[0].mxu0
      %594 = vmatprep.mubr.f32.mxu0 0.0
      %595 = vmatmul.mubr.f32.gmra.mrb[0].mxu0 %v305
      %v596 = vpop.f32.mrb[0].mxu0
      %v597 = vadd.f32 %v256, %v596
      %v598 = vpop.f32.mrb[0].mxu0
      %599 = vmatprep.mubr.f32.mxu0 0.0
      %600 = vmatmul.mubr.f32.gmra.mrb[0].mxu0 %v308
      %v601 = vpop.f32.mrb[0].mxu0
      %v602 = vadd.f32 %v256, %v601
      %v603 = vpop.f32.mrb[0].mxu0
      %604 = vmatprep.mubr.f32.mxu0 0.0
      %605 = vmatmul.mubr.f32.gmra.mrb[0].mxu0 %v311
      %v606 = vpop.f32.mrb[0].mxu0
      %v607 = vadd.f32 %v256, %v606
      %v608 = vpop.f32.mrb[0].mxu0
      %609 = vmatprep.mubr.f32.mxu0 0.0
      %610 = vmatmul.mubr.f32.gmra.mrb[0].mxu0 %v314
      %v611 = vpop.f32.mrb[0].mxu0
      %v612 = vadd.f32 %v256, %v611
      %v613 = vpop.f32.mrb[0].mxu0
      %614 = vmatprep.mubr.f32.mxu0 0.0
      %615 = vmatmul.mubr.f32.gmra.mrb[0].mxu0 %v317
      %v616 = vpop.f32.mrb[0].mxu0
      %v617 = vadd.f32 %v256, %v616
      %v618 = vpop.f32.mrb[0].mxu0
      %619 = vmatprep.mubr.f32.mxu0 0.0
      %620 = vmatmul.mubr.f32.gmra.mrb[0].mxu0 %v320
      %v621 = vpop.f32.mrb[0].mxu0
      %v622 = vadd.f32 %v256, %v621
      %v623 = vpop.f32.mrb[0].mxu0
      %624 = vmatprep.mubr.f32.mxu0 0.0
      %625 = vmatmul.mubr.f32.gmra.mrb[0].mxu0 %v323
      %v626 = vpop.f32.mrb[0].mxu0
      %v627 = vadd.f32 %v256, %v626
      %v628 = vpop.f32.mrb[0].mxu0
      %629 = vmatprep.mubr.f32.mxu0 0.0
      %630 = vmatmul.mubr.f32.gmra.mrb[0].mxu0 %v326
      %v631 = vpop.f32.mrb[0].mxu0
      %v632 = vadd.f32 %v256, %v631
      %v633 = vpop.f32.mrb[0].mxu0
      %634 = vmatprep.mubr.f32.mxu0 0.0
      %635 = vmatmul.mubr.f32.gmra.mrb[0].mxu0 %v329
      %v636 = vpop.f32.mrb[0].mxu0
      %v637 = vadd.f32 %v256, %v636
      %v638 = vpop.f32.mrb[0].mxu0
      %639 = vmatprep.mubr.f32.mxu0 0.0
      %640 = vmatmul.mubr.f32.gmra.mrb[0].mxu0 %v332
      %v641 = vpop.f32.mrb[0].mxu0
      %v642 = vadd.f32 %v256, %v641
      %v643 = vpop.f32.mrb[0].mxu0
      %644 = vmatprep.mubr.f32.mxu0 0.0
      %645 = vmatmul.mubr.f32.gmra.mrb[0].mxu0 %v335
      %v646 = vpop.f32.mrb[0].mxu0
      %v647 = vadd.f32 %v256, %v646
      %v648 = vpop.f32.mrb[0].mxu0
      %649 = vmatprep.mubr.f32.mxu0 0.0
      %650 = vmatmul.mubr.f32.gmra.mrb[0].mxu0 %v338
      %v651 = vpop.f32.mrb[0].mxu0
      %v652 = vadd.f32 %v256, %v651
      %v653 = vpop.f32.mrb[0].mxu0
      %654 = vmatprep.mubr.f32.mxu0 0.0
      %655 = vmatmul.mubr.f32.gmra.mrb[0].mxu0 %v341
      %v656 = vpop.f32.mrb[0].mxu0
      %v657 = vadd.f32 %v256, %v656
      %v658 = vpop.f32.mrb[0].mxu0
      %659 = vmatprep.mubr.f32.mxu0 0.0
      %660 = vmatmul.mubr.f32.gmra.mrb[0].mxu0 %v344
      %v661 = vpop.f32.mrb[0].mxu0
      %v662 = vadd.f32 %v256, %v661
      %v663 = vpop.f32.mrb[0].mxu0
      %664 = vmatprep.mubr.f32.mxu0 0.0
      %665 = vmatmul.mubr.f32.gmra.mrb[0].mxu0 %v347
      %v666 = vpop.f32.mrb[0].mxu0
      %v667 = vadd.f32 %v256, %v666
      %v668 = vpop.f32.mrb[0].mxu0
      %669 = vmatprep.mubr.f32.mxu0 0.0
      %670 = vmatmul.mubr.f32.gmra.mrb[0].mxu0 %v350
      %v671 = vpop.f32.mrb[0].mxu0
      %v672 = vadd.f32 %v256, %v671
      %v673 = vpop.f32.mrb[0].mxu0
      %674 = vmatprep.mubr.f32.mxu0 0.0
      %675 = vmatmul.mubr.f32.gmra.mrb[0].mxu0 %v353
      %v676 = vpop.f32.mrb[0].mxu0
      %v677 = vadd.f32 %v256, %v676
      %v678 = vpop.f32.mrb[0].mxu0
      %679 = vmatprep.mubr.f32.mxu0 0.0
      %680 = vmatmul.mubr.f32.gmra.mrb[0].mxu0 %v356
      %v681 = vpop.f32.mrb[0].mxu0
      %v682 = vadd.f32 %v256, %v681
      %v683 = vpop.f32.mrb[0].mxu0
      %684 = vmatprep.mubr.f32.mxu0 0.0
      %685 = vmatmul.mubr.f32.gmra.mrb[0].mxu0 %v359
      %v686 = vpop.f32.mrb[0].mxu0
      %v687 = vadd.f32 %v256, %v686
      %v688 = vpop.f32.mrb[0].mxu0
      %689 = vmatprep.mubr.f32.mxu0 0.0
      %690 = vmatmul.mubr.f32.gmra.mrb[0].mxu0 %v362
      %v691 = vpop.f32.mrb[0].mxu0
      %v692 = vadd.f32 %v256, %v691
      %v693 = vpop.f32.mrb[0].mxu0
      %694 = vmatprep.mubr.f32.mxu0 0.0
      %695 = vmatmul.mubr.f32.gmra.mrb[0].mxu0 %v365
      %v696 = vpop.f32.mrb[0].mxu0
      %v697 = vadd.f32 %v256, %v696
      %v698 = vpop.f32.mrb[0].mxu0
      %699 = vmatprep.mubr.f32.mxu0 0.0
      %700 = vmatmul.mubr.f32.gmra.mrb[0].mxu0 %v368
      %v701 = vpop.f32.mrb[0].mxu0
      %v702 = vadd.f32 %v256, %v701
      %v703 = vpop.f32.mrb[0].mxu0
      %704 = vmatprep.mubr.f32.mxu0 0.0
      %705 = vmatmul.mubr.f32.gmra.mrb[0].mxu0 %v371
      %v706 = vpop.f32.mrb[0].mxu0
      %v707 = vadd.f32 %v256, %v706
      %v708 = vpop.f32.mrb[0].mxu0
      %709 = vmatprep.mubr.f32.mxu0 0.0
      %710 = vmatmul.mubr.f32.gmra.mrb[0].mxu0 %v374
      %v711 = vpop.f32.mrb[0].mxu0
      %v712 = vadd.f32 %v256, %v711
      %v713 = vpop.f32.mrb[0].mxu0
      %714 = vmatprep.mubr.f32.mxu0 0.0
      %715 = vmatmul.mubr.f32.gmra.mrb[0].mxu0 %v377
      %v716 = vpop.f32.mrb[0].mxu0
      %v717 = vadd.f32 %v256, %v716
      %v718 = vpop.f32.mrb[0].mxu0
      %719 = vmatprep.mubr.f32.mxu0 0.0
      %720 = vmatmul.mubr.f32.gmra.mrb[0].mxu0 %v380
      %v721 = vpop.f32.mrb[0].mxu0
      %v722 = vadd.f32 %v256, %v721
      %v723 = vpop.f32.mrb[0].mxu0
      %724 = vmatprep.mubr.f32.mxu0 0.0
      %725 = vmatmul.mubr.f32.gmra.mrb[0].mxu0 %v383
      %v726 = vpop.f32.mrb[0].mxu0
      %v727 = vadd.f32 %v256, %v726
      %v728 = vpop.f32.mrb[0].mxu0
      %729 = vmatprep.mubr.f32.mxu0 0.0
      %730 = vmatmul.mubr.f32.gmra.mrb[0].mxu0 %v386
      %v731 = vpop.f32.mrb[0].mxu0
      %v732 = vadd.f32 %v256, %v731
      %v733 = vpop.f32.mrb[0].mxu0
      %734 = vmatprep.mubr.f32.mxu0 0.0
      %735 = vmatmul.mubr.f32.gmra.mrb[0].mxu0 %v389
      %v736 = vpop.f32.mrb[0].mxu0
      %v737 = vadd.f32 %v256, %v736
      %v738 = vpop.f32.mrb[0].mxu0
      %739 = vmatprep.mubr.f32.mxu0 0.0
      %740 = vmatmul.mubr.f32.gmra.mrb[0].mxu0 %v392
      %v741 = vpop.f32.mrb[0].mxu0
      %v742 = vadd.f32 %v256, %v741
      %v743 = vpop.f32.mrb[0].mxu0
      %744 = vmatprep.mubr.f32.mxu0 0.0
      %745 = vmatmul.mubr.f32.gmra.mrb[0].mxu0 %v395
      %v746 = vpop.f32.mrb[0].mxu0
      %v747 = vadd.f32 %v256, %v746
      %v748 = vpop.f32.mrb[0].mxu0
      %749 = vmatprep.mubr.f32.mxu0 0.0
      %750 = vmatmul.mubr.f32.gmra.mrb[0].mxu0 %v398
      %v751 = vpop.f32.mrb[0].mxu0
      %v752 = vadd.f32 %v256, %v751
      %v753 = vpop.f32.mrb[0].mxu0
      %754 = vmatprep.mubr.f32.mxu0 0.0
      %755 = vmatmul.mubr.f32.gmra.mrb[0].mxu0 %v401
      %v756 = vpop.f32.mrb[0].mxu0
      %v757 = vadd.f32 %v256, %v756
      %v758 = vpop.f32.mrb[0].mxu0
      %759 = vmatprep.mubr.f32.mxu0 0.0
      %760 = vmatmul.mubr.f32.gmra.mrb[0].mxu0 %v404
      %v761 = vpop.f32.mrb[0].mxu0
      %v762 = vadd.f32 %v256, %v761
      %v763 = vpop.f32.mrb[0].mxu0
      %764 = vmatprep.mubr.f32.mxu0 0.0
      %765 = vmatmul.mubr.f32.gmra.mrb[0].mxu0 %v407
      %v766 = vpop.f32.mrb[0].mxu0
      %v767 = vadd.f32 %v256, %v766
      %v768 = vpop.f32.mrb[0].mxu0
      %769 = vmatprep.mubr.f32.mxu0 0.0
      %770 = vmatmul.mubr.f32.gmra.mrb[0].mxu0 %v410
      %v771 = vpop.f32.mrb[0].mxu0
      %v772 = vadd.f32 %v256, %v771
      %v773 = vpop.f32.mrb[0].mxu0
      %774 = vmatprep.mubr.f32.mxu0 0.0
      %775 = vmatmul.mubr.f32.gmra.mrb[0].mxu0 %v413
      %v776 = vpop.f32.mrb[0].mxu0
      %v777 = vadd.f32 %v256, %v776
      %v778 = vpop.f32.mrb[0].mxu0
      %779 = vmatprep.mubr.f32.mxu0 0.0
      %780 = vmatmul.mubr.f32.gmra.mrb[0].mxu0 %v416
      %v781 = vpop.f32.mrb[0].mxu0
      %v782 = vadd.f32 %v256, %v781
      %v783 = vpop.f32.mrb[0].mxu0
      %784 = vmatprep.mubr.f32.mxu0 0.0
      %785 = vmatmul.mubr.f32.gmra.mrb[0].mxu0 %v419
      %v786 = vpop.f32.mrb[0].mxu0
      %v787 = vadd.f32 %v256, %v786
      %v788 = vpop.f32.mrb[0].mxu0
      %789 = vmatprep.mubr.f32.mxu0 0.0
      %790 = vmatmul.mubr.f32.gmra.mrb[0].mxu0 %v422
      %v791 = vpop.f32.mrb[0].mxu0
      %v792 = vadd.f32 %v256, %v791
      %v793 = vpop.f32.mrb[0].mxu0
      %794 = vmatprep.mubr.f32.mxu0 0.0
      %795 = vmatmul.mubr.f32.gmra.mrb[0].mxu0 %v425
      %v796 = vpop.f32.mrb[0].mxu0
      %v797 = vadd.f32 %v256, %v796
      %v798 = vpop.f32.mrb[0].mxu0
      %799 = vmatprep.mubr.f32.mxu0 0.0
      %800 = vmatmul.mubr.f32.gmra.mrb[0].mxu0 %v428
      %v801 = vpop.f32.mrb[0].mxu0
      %v802 = vadd.f32 %v256, %v801
      %v803 = vpop.f32.mrb[0].mxu0
      %804 = vmatprep.mubr.f32.mxu0 0.0
      %805 = vmatmul.mubr.f32.gmra.mrb[0].mxu0 %v431
      %v806 = vpop.f32.mrb[0].mxu0
      %v807 = vadd.f32 %v256, %v806
      %v808 = vpop.f32.mrb[0].mxu0
      %809 = vmatprep.mubr.f32.mxu0 0.0
      %810 = vmatmul.mubr.f32.gmra.mrb[0].mxu0 %v434
      %v811 = vpop.f32.mrb[0].mxu0
      %v812 = vadd.f32 %v256, %v811
      %v813 = vpop.f32.mrb[0].mxu0
      %814 = vmatprep.mubr.f32.mxu0 0.0
      %815 = vmatmul.mubr.f32.gmra.mrb[0].mxu0 %v437
      %v816 = vpop.f32.mrb[0].mxu0
      %v817 = vadd.f32 %v256, %v816
      %v818 = vpop.f32.mrb[0].mxu0
      %819 = vmatprep.mubr.f32.mxu0 0.0
      %820 = vmatmul.mubr.f32.gmra.mrb[0].mxu0 %v440
      %v821 = vpop.f32.mrb[0].mxu0
      %v822 = vadd.f32 %v256, %v821
      %v823 = vpop.f32.mrb[0].mxu0
      %824 = vmatprep.mubr.f32.mxu0 0.0
      %825 = vmatmul.mubr.f32.gmra.mrb[0].mxu0 %v443
      %v826 = vpop.f32.mrb[0].mxu0
      %v827 = vadd.f32 %v256, %v826
      %v828 = vpop.f32.mrb[0].mxu0
      %829 = vmatprep.mubr.f32.mxu0 0.0
      %830 = vmatmul.mubr.f32.gmra.mrb[0].mxu0 %v446
      %v831 = vpop.f32.mrb[0].mxu0
      %v832 = vadd.f32 %v256, %v831
      %v833 = vpop.f32.mrb[0].mxu0
      %834 = vmatprep.mubr.f32.mxu0 0.0
      %835 = vmatmul.mubr.f32.gmra.mrb[0].mxu0 %v449
      %v836 = vpop.f32.mrb[0].mxu0
      %v837 = vadd.f32 %v256, %v836
      %v838 = vpop.f32.mrb[0].mxu0
      %839 = vdwg.mxu0
      %vm840 = vcmask 523264
      %841 = vst.msk [vmem:[%s172] sm:$0xff] %vm840, %v522
      %842 = vst.msk [vmem:[%s172 + $0x8] sm:$0xff] %vm840, %v527
      %843 = vst.msk [vmem:[%s172 + $0x10] sm:$0xff] %vm840, %v532
      %844 = vst.msk [vmem:[%s172 + $0x18] sm:$0xff] %vm840, %v537
      %845 = vst.msk [vmem:[%s172 + $0x20] sm:$0xff] %vm840, %v542
      %846 = vst.msk [vmem:[%s172 + $0x28] sm:$0xff] %vm840, %v547
      %847 = vst.msk [vmem:[%s172 + $0x30] sm:$0xff] %vm840, %v552
      %848 = vst.msk [vmem:[%s172 + $0x38] sm:$0xff] %vm840, %v557
      %849 = vst.msk [vmem:[%s172 + $0x40] sm:$0xff] %vm840, %v562
      %850 = vst.msk [vmem:[%s172 + $0x48] sm:$0xff] %vm840, %v567
      %851 = vst.msk [vmem:[%s172 + $0x50] sm:$0xff] %vm840, %v572
      %852 = vst.msk [vmem:[%s172 + $0x58] sm:$0xff] %vm840, %v577
      %853 = vst.msk [vmem:[%s172 + $0x60] sm:$0xff] %vm840, %v582
      %854 = vst.msk [vmem:[%s172 + $0x68] sm:$0xff] %vm840, %v587
      %855 = vst.msk [vmem:[%s172 + $0x70] sm:$0xff] %vm840, %v592
      %856 = vst.msk [vmem:[%s172 + $0x78] sm:$0xff] %vm840, %v597
      %857 = vst.msk [vmem:[%s172 + $0x80] sm:$0xff] %vm840, %v602
      %858 = vst.msk [vmem:[%s172 + $0x88] sm:$0xff] %vm840, %v607
      %859 = vst.msk [vmem:[%s172 + $0x90] sm:$0xff] %vm840, %v612
      %860 = vst.msk [vmem:[%s172 + $0x98] sm:$0xff] %vm840, %v617
      %861 = vst.msk [vmem:[%s172 + $0xa0] sm:$0xff] %vm840, %v622
      %862 = vst.msk [vmem:[%s172 + $0xa8] sm:$0xff] %vm840, %v627
      %863 = vst.msk [vmem:[%s172 + $0xb0] sm:$0xff] %vm840, %v632
      %864 = vst.msk [vmem:[%s172 + $0xb8] sm:$0xff] %vm840, %v637
      %865 = vst.msk [vmem:[%s172 + $0xc0] sm:$0xff] %vm840, %v642
      %866 = vst.msk [vmem:[%s172 + $0xc8] sm:$0xff] %vm840, %v647
      %867 = vst.msk [vmem:[%s172 + $0xd0] sm:$0xff] %vm840, %v652
      %868 = vst.msk [vmem:[%s172 + $0xd8] sm:$0xff] %vm840, %v657
      %869 = vst.msk [vmem:[%s172 + $0xe0] sm:$0xff] %vm840, %v662
      %870 = vst.msk [vmem:[%s172 + $0xe8] sm:$0xff] %vm840, %v667
      %871 = vst.msk [vmem:[%s172 + $0xf0] sm:$0xff] %vm840, %v672
      %872 = vst.msk [vmem:[%s172 + $0xf8] sm:$0xff] %vm840, %v677
      %873 = vst.msk [vmem:[%s172 + $0x100] sm:$0xff] %vm840, %v682
      %874 = vst.msk [vmem:[%s172 + $0x108] sm:$0xff] %vm840, %v687
      %875 = vst.msk [vmem:[%s172 + $0x110] sm:$0xff] %vm840, %v692
      %876 = vst.msk [vmem:[%s172 + $0x118] sm:$0xff] %vm840, %v697
      %877 = vst.msk [vmem:[%s172 + $0x120] sm:$0xff] %vm840, %v702
      %878 = vst.msk [vmem:[%s172 + $0x128] sm:$0xff] %vm840, %v707
      %879 = vst.msk [vmem:[%s172 + $0x130] sm:$0xff] %vm840, %v712
      %880 = vst.msk [vmem:[%s172 + $0x138] sm:$0xff] %vm840, %v717
      %881 = vst.msk [vmem:[%s172 + $0x140] sm:$0xff] %vm840, %v722
      %882 = vst.msk [vmem:[%s172 + $0x148] sm:$0xff] %vm840, %v727
      %883 = vst.msk [vmem:[%s172 + $0x150] sm:$0xff] %vm840, %v732
      %884 = vst.msk [vmem:[%s172 + $0x158] sm:$0xff] %vm840, %v737
      %885 = vst.msk [vmem:[%s172 + $0x160] sm:$0xff] %vm840, %v742
      %886 = vst.msk [vmem:[%s172 + $0x168] sm:$0xff] %vm840, %v747
      %887 = vst.msk [vmem:[%s172 + $0x170] sm:$0xff] %vm840, %v752
      %888 = vst.msk [vmem:[%s172 + $0x178] sm:$0xff] %vm840, %v757
      %889 = vst.msk [vmem:[%s172 + $0x180] sm:$0xff] %vm840, %v762
      %890 = vst.msk [vmem:[%s172 + $0x188] sm:$0xff] %vm840, %v767
      %891 = vst.msk [vmem:[%s172 + $0x190] sm:$0xff] %vm840, %v772
      %892 = vst.msk [vmem:[%s172 + $0x198] sm:$0xff] %vm840, %v777
      %893 = vst.msk [vmem:[%s172 + $0x1a0] sm:$0xff] %vm840, %v782
      %894 = vst.msk [vmem:[%s172 + $0x1a8] sm:$0xff] %vm840, %v787
      %895 = vst.msk [vmem:[%s172 + $0x1b0] sm:$0xff] %vm840, %v792
      %896 = vst.msk [vmem:[%s172 + $0x1b8] sm:$0xff] %vm840, %v797
      %897 = vst.msk [vmem:[%s172 + $0x1c0] sm:$0xff] %vm840, %v802
      %898 = vst.msk [vmem:[%s172 + $0x1c8] sm:$0xff] %vm840, %v807
      %899 = vst.msk [vmem:[%s172 + $0x1d0] sm:$0xff] %vm840, %v812
      %900 = vst.msk [vmem:[%s172 + $0x1d8] sm:$0xff] %vm840, %v817
      %901 = vst.msk [vmem:[%s172 + $0x1e0] sm:$0xff] %vm840, %v822
      %902 = vst.msk [vmem:[%s172 + $0x1e8] sm:$0xff] %vm840, %v827
      %903 = vst.msk [vmem:[%s172 + $0x1f0] sm:$0xff] %vm840, %v832
      %904 = vst.msk [vmem:[%s172 + $0x1f8] sm:$0xff] %vm840, %v837
      %s905 = smul.u32 64, %s14
      %p906 = scmp.lt.s32.totalorder %s905, 511
      %s907 = scalar_select %p906, %s905, 511
      %s908 = smul.addr %s907, 8
      %s909 = scalar_lea.vmem %s3, %s908
      // Predicated region
      $region33: #{tf_conv_block.11} parent=31 // pred_check
        %p910 = pneg %p100
      $region34: #{tf_conv_block.11} parent=31 // pred_check_branch
        %912 = sbr.rel (%p910) target = $region36
      $region35: #{tf_conv_block.11} parent=31 // pred_region
        %s913 = smul.u32 64, %s14
      $region36: #{tf_conv_block.11} parent=31 // pred_fallthru
        _
    $region32: #{tf_conv_block.11} parent=5 // pred_fallthru
      _
    %p914 = scmp.le.s32.totalorder 2, %s9
    // Predicated region
    $region37: #{tf_conv_block.11} parent=5 // pred_check
      %p915 = pneg %p914
    $region38: #{tf_conv_block.11} parent=5 // pred_check_branch
      %917 = sbr.rel (%p915) target = $region40
    $region39: #{tf_conv_block.11} parent=5 // pred_region
      %s918 = ssub.s32 %s9, 2
      // Predicated region
      $region41: #{tf_conv_block.11} parent=39 // pred_check
        %p919 = pneg %p106
      $region42: #{tf_conv_block.11} parent=39 // pred_check_branch
        %921 = sbr.rel (%p919) target = $region44
      $region43: #{tf_conv_block.11} parent=39 // pred_region
        %s922 = smul.u32 64, %s15
        %p923 = scmp.lt.s32.totalorder %s922, 511
        %s924 = scalar_select %p923, %s922, 511
        %s925 = smul.addr %s924, 8
        %s926 = scalar_lea.vmem %s3, %s925
      $region44: #{tf_conv_block.11} parent=39 // pred_fallthru
        _
    $region40: #{tf_conv_block.11} parent=5 // pred_fallthru
      _
  $region6: #{tf_conv_block.11} parent=0 // loop_footer
    %s13 = sadd.s32 1, %s9
  $region7: #{tf_conv_block.11} parent=0 // loop_footer_branch
    %8 = sbr.rel target = $region3
  $region8: #{tf_conv_block.11} parent=0 // loop_exit
    _

// kernel: tf_conv_block.12
$region0: #{tf_conv_block.12}
  #allocation0 [shape = 'u32[]', space=smem, size = 0x4, offset = 0x4, fixed_abs, tag = 'smem constant byte address 0x4 - core index']
  #allocation1 [shape = 'u32[144,128]{1,0:T(1,128)}', space=vmem, size = 0x12000, scoped, tag = 'internal scratch']
  %s0 = inlined_call_operand.vmem [shape: f32[160,576], index: 0, kind: input, shape index: {}]
  %s1 = inlined_call_operand.vmem [shape: f32[576,64], index: 1, kind: input, shape index: {}]
  %s2 = inlined_call_operand.vmem [shape: f32[1,64], index: 2, kind: input, shape index: {}]
  %s3 = inlined_call_operand.vmem [shape: f32[160,64], index: 3, kind: output, shape index: {}]
  %s4 = sld [smem:[#allocation0]]
  $region22: #{tf_conv_block.12} parent=0
    _
  %s6 = ssub.s32 1, %s4
  %s7 = scalar_select 0, %s6, %s4
  // Predicated region
  $region2: #{tf_conv_block.12} parent=0 // pred_check
    _
  $region3: #{tf_conv_block.12} parent=0 // pred_check_branch
    %9 = sbr.rel (0) target = $region5
  $region4: #{tf_conv_block.12} parent=0 // pred_region
    _
  $region5: #{tf_conv_block.12} parent=0 // pred_fallthru
    _
  // Predicated region
  $region6: #{tf_conv_block.12} parent=0 // pred_check
    _
  $region7: #{tf_conv_block.12} parent=0 // pred_check_branch
    %11 = sbr.rel (0) target = $region9
  $region8: #{tf_conv_block.12} parent=0 // pred_region
    _
  $region9: #{tf_conv_block.12} parent=0 // pred_fallthru
    _
  // Predicated region
  $region10: #{tf_conv_block.12} parent=0 // pred_check
    _
  $region11: #{tf_conv_block.12} parent=0 // pred_check_branch
    %13 = sbr.rel (0) target = $region13
  $region12: #{tf_conv_block.12} parent=0 // pred_region
    _
  $region13: #{tf_conv_block.12} parent=0 // pred_fallthru
    _
  %v14 = vld [vmem:[%s0] sm:$0xff]
  %v15 = vld [vmem:[%s0 + $0x8] sm:$0xff]
  %v16 = vld [vmem:[%s0 + $0x10] sm:$0xff]
  %v17 = vld [vmem:[%s0 + $0x18] sm:$0xff]
  %v18 = vld [vmem:[%s0 + $0x20] sm:$0xff]
  %v19 = vld [vmem:[%s0 + $0x28] sm:$0xff]
  %v20 = vld [vmem:[%s0 + $0x30] sm:$0xff]
  %v21 = vld [vmem:[%s0 + $0x38] sm:$0xff]
  %v22 = vld [vmem:[%s0 + $0x40] sm:$0xff]
  %v23 = vld [vmem:[%s0 + $0x48] sm:$0xff]
  %v24 = vld [vmem:[%s0 + $0x50] sm:$0xff]
  %v25 = vld [vmem:[%s0 + $0x58] sm:$0xff]
  %v26 = vld [vmem:[%s0 + $0x60] sm:$0xff]
  %v27 = vld [vmem:[%s0 + $0x68] sm:$0xff]
  %v28 = vld [vmem:[%s0 + $0x70] sm:$0xff]
  %v29 = vld [vmem:[%s0 + $0x78] sm:$0xff]
  %v30 = vld [vmem:[%s0 + $0x80] sm:$0xff]
  %v31 = vld [vmem:[%s0 + $0x88] sm:$0xff]
  %v32 = vld [vmem:[%s0 + $0x90] sm:$0xff]
  %v33 = vld [vmem:[%s0 + $0x98] sm:$0xff]
  %v34 = vld [vmem:[%s0 + $0xa0] sm:$0xff]
  %v35 = vld [vmem:[%s0 + $0xa8] sm:$0xff]
  %v36 = vld [vmem:[%s0 + $0xb0] sm:$0xff]
  %v37 = vld [vmem:[%s0 + $0xb8] sm:$0xff]
  %v38 = vld [vmem:[%s0 + $0xc0] sm:$0xff]
  %v39 = vld [vmem:[%s0 + $0xc8] sm:$0xff]
  %v40 = vld [vmem:[%s0 + $0xd0] sm:$0xff]
  %v41 = vld [vmem:[%s0 + $0xd8] sm:$0xff]
  %v42 = vld [vmem:[%s0 + $0xe0] sm:$0xff]
  %v43 = vld [vmem:[%s0 + $0xe8] sm:$0xff]
  %v44 = vld [vmem:[%s0 + $0xf0] sm:$0xff]
  %v45 = vld [vmem:[%s0 + $0xf8] sm:$0xff]
  %v46 = vld [vmem:[%s0 + $0x100] sm:$0xff]
  %v47 = vld [vmem:[%s0 + $0x108] sm:$0xff]
  %v48 = vld [vmem:[%s0 + $0x110] sm:$0xff]
  %v49 = vld [vmem:[%s0 + $0x118] sm:$0xff]
  %v50 = vld [vmem:[%s0 + $0x120] sm:$0xff]
  %v51 = vld [vmem:[%s0 + $0x128] sm:$0xff]
  %v52 = vld [vmem:[%s0 + $0x130] sm:$0xff]
  %v53 = vld [vmem:[%s0 + $0x138] sm:$0xff]
  %v54 = vld [vmem:[%s0 + $0x140] sm:$0xff]
  %v55 = vld [vmem:[%s0 + $0x148] sm:$0xff]
  %v56 = vld [vmem:[%s0 + $0x150] sm:$0xff]
  %v57 = vld [vmem:[%s0 + $0x158] sm:$0xff]
  %v58 = vld [vmem:[%s0 + $0x160] sm:$0xff]
  %v59 = vld [vmem:[%s0 + $0x168] sm:$0xff]
  %v60 = vld [vmem:[%s0 + $0x170] sm:$0xff]
  %v61 = vld [vmem:[%s0 + $0x178] sm:$0xff]
  %v62 = vld [vmem:[%s0 + $0x180] sm:$0xff]
  %v63 = vld [vmem:[%s0 + $0x188] sm:$0xff]
  %v64 = vld [vmem:[%s0 + $0x190] sm:$0xff]
  %v65 = vld [vmem:[%s0 + $0x198] sm:$0xff]
  %v66 = vld [vmem:[%s0 + $0x1a0] sm:$0xff]
  %v67 = vld [vmem:[%s0 + $0x1a8] sm:$0xff]
  %v68 = vld [vmem:[%s0 + $0x1b0] sm:$0xff]
  %v69 = vld [vmem:[%s0 + $0x1b8] sm:$0xff]
  %v70 = vld [vmem:[%s0 + $0x1c0] sm:$0xff]
  %v71 = vld [vmem:[%s0 + $0x1c8] sm:$0xff]
  %v72 = vld [vmem:[%s0 + $0x1d0] sm:$0xff]
  %v73 = vld [vmem:[%s0 + $0x1d8] sm:$0xff]
  %v74 = vld [vmem:[%s0 + $0x1e0] sm:$0xff]
  %v75 = vld [vmem:[%s0 + $0x1e8] sm:$0xff]
  %v76 = vld [vmem:[%s0 + $0x1f0] sm:$0xff]
  %v77 = vld [vmem:[%s0 + $0x1f8] sm:$0xff]
  %v78 = vld [vmem:[%s0 + $0x200] sm:$0xff]
  %v79 = vld [vmem:[%s0 + $0x208] sm:$0xff]
  %v80 = vld [vmem:[%s0 + $0x210] sm:$0xff]
  %v81 = vld [vmem:[%s0 + $0x218] sm:$0xff]
  %v82 = vld [vmem:[%s0 + $0x220] sm:$0xff]
  %v83 = vld [vmem:[%s0 + $0x228] sm:$0xff]
  %v84 = vld [vmem:[%s0 + $0x230] sm:$0xff]
  %v85 = vld [vmem:[%s0 + $0x238] sm:$0xff]
  %v86 = vld [vmem:[%s0 + $0x240] sm:$0xff]
  %v87 = vld [vmem:[%s0 + $0x248] sm:$0xff]
  %v88 = vld [vmem:[%s0 + $0x250] sm:$0xff]
  %v89 = vld [vmem:[%s0 + $0x258] sm:$0xff]
  %v90 = vld [vmem:[%s0 + $0x260] sm:$0xff]
  %v91 = vld [vmem:[%s0 + $0x268] sm:$0xff]
  %v92 = vld [vmem:[%s0 + $0x270] sm:$0xff]
  %v93 = vld [vmem:[%s0 + $0x278] sm:$0xff]
  %v94 = vld [vmem:[%s0 + $0x280] sm:$0xff]
  %v95 = vld [vmem:[%s0 + $0x288] sm:$0xff]
  %v96 = vld [vmem:[%s0 + $0x290] sm:$0xff]
  %v97 = vld [vmem:[%s0 + $0x298] sm:$0xff]
  %v98 = vld [vmem:[%s0 + $0x2a0] sm:$0xff]
  %v99 = vld [vmem:[%s0 + $0x2a8] sm:$0xff]
  %v100 = vld [vmem:[%s0 + $0x2b0] sm:$0xff]
  %v101 = vld [vmem:[%s0 + $0x2b8] sm:$0xff]
  %v102 = vld [vmem:[%s0 + $0x2c0] sm:$0xff]
  %v103 = vld [vmem:[%s0 + $0x2c8] sm:$0xff]
  %v104 = vld [vmem:[%s0 + $0x2d0] sm:$0xff]
  %v105 = vld [vmem:[%s0 + $0x2d8] sm:$0xff]
  %v106 = vld [vmem:[%s0 + $0x2e0] sm:$0xff]
  %v107 = vld [vmem:[%s0 + $0x2e8] sm:$0xff]
  %v108 = vld [vmem:[%s0 + $0x2f0] sm:$0xff]
  %v109 = vld [vmem:[%s0 + $0x2f8] sm:$0xff]
  %v110 = vld [vmem:[%s0 + $0x300] sm:$0xff]
  %v111 = vld [vmem:[%s0 + $0x308] sm:$0xff]
  %v112 = vld [vmem:[%s0 + $0x310] sm:$0xff]
  %v113 = vld [vmem:[%s0 + $0x318] sm:$0xff]
  %v114 = vld [vmem:[%s1] sm:$0xff]
  %v115 = vld [vmem:[%s1 + $0x8] sm:$0xff]
  %v116 = vld [vmem:[%s1 + $0x10] sm:$0xff]
  %v117 = vld [vmem:[%s1 + $0x18] sm:$0xff]
  %v118 = vld [vmem:[%s1 + $0x20] sm:$0xff]
  %v119 = vld [vmem:[%s1 + $0x28] sm:$0xff]
  %v120 = vld [vmem:[%s1 + $0x30] sm:$0xff]
  %v121 = vld [vmem:[%s1 + $0x38] sm:$0xff]
  %v122 = vld [vmem:[%s1 + $0x40] sm:$0xff]
  %v123 = vld [vmem:[%s1 + $0x48] sm:$0xff]
  %v124 = vld [vmem:[%s1 + $0x50] sm:$0xff]
  %v125 = vld [vmem:[%s1 + $0x58] sm:$0xff]
  %v126 = vld [vmem:[%s1 + $0x60] sm:$0xff]
  %v127 = vld [vmem:[%s1 + $0x68] sm:$0xff]
  %v128 = vld [vmem:[%s1 + $0x70] sm:$0xff]
  %v129 = vld [vmem:[%s1 + $0x78] sm:$0xff]
  %v130 = vld [vmem:[%s1 + $0x80] sm:$0xff]
  %v131 = vld [vmem:[%s1 + $0x88] sm:$0xff]
  %v132 = vld [vmem:[%s1 + $0x90] sm:$0xff]
  %v133 = vld [vmem:[%s1 + $0x98] sm:$0xff]
  %v134 = vld [vmem:[%s1 + $0xa0] sm:$0xff]
  %v135 = vld [vmem:[%s1 + $0xa8] sm:$0xff]
  %v136 = vld [vmem:[%s1 + $0xb0] sm:$0xff]
  %v137 = vld [vmem:[%s1 + $0xb8] sm:$0xff]
  %v138 = vld [vmem:[%s1 + $0xc0] sm:$0xff]
  %v139 = vld [vmem:[%s1 + $0xc8] sm:$0xff]
  %v140 = vld [vmem:[%s1 + $0xd0] sm:$0xff]
  %v141 = vld [vmem:[%s1 + $0xd8] sm:$0xff]
  %v142 = vld [vmem:[%s1 + $0xe0] sm:$0xff]
  %v143 = vld [vmem:[%s1 + $0xe8] sm:$0xff]
  %v144 = vld [vmem:[%s1 + $0xf0] sm:$0xff]
  %v145 = vld [vmem:[%s1 + $0xf8] sm:$0xff]
  %v146 = vld [vmem:[%s1 + $0x100] sm:$0xff]
  %v147 = vld [vmem:[%s1 + $0x108] sm:$0xff]
  %v148 = vld [vmem:[%s1 + $0x110] sm:$0xff]
  %v149 = vld [vmem:[%s1 + $0x118] sm:$0xff]
  %v150 = vld [vmem:[%s1 + $0x120] sm:$0xff]
  %v151 = vld [vmem:[%s1 + $0x128] sm:$0xff]
  %v152 = vld [vmem:[%s1 + $0x130] sm:$0xff]
  %v153 = vld [vmem:[%s1 + $0x138] sm:$0xff]
  %v154 = vld [vmem:[%s1 + $0x140] sm:$0xff]
  %v155 = vld [vmem:[%s1 + $0x148] sm:$0xff]
  %v156 = vld [vmem:[%s1 + $0x150] sm:$0xff]
  %v157 = vld [vmem:[%s1 + $0x158] sm:$0xff]
  %v158 = vld [vmem:[%s1 + $0x160] sm:$0xff]
  %v159 = vld [vmem:[%s1 + $0x168] sm:$0xff]
  %v160 = vld [vmem:[%s1 + $0x170] sm:$0xff]
  %v161 = vld [vmem:[%s1 + $0x178] sm:$0xff]
  %v162 = vld [vmem:[%s1 + $0x180] sm:$0xff]
  %v163 = vld [vmem:[%s1 + $0x188] sm:$0xff]
  %v164 = vld [vmem:[%s1 + $0x190] sm:$0xff]
  %v165 = vld [vmem:[%s1 + $0x198] sm:$0xff]
  %v166 = vld [vmem:[%s1 + $0x1a0] sm:$0xff]
  %v167 = vld [vmem:[%s1 + $0x1a8] sm:$0xff]
  %v168 = vld [vmem:[%s1 + $0x1b0] sm:$0xff]
  %v169 = vld [vmem:[%s1 + $0x1b8] sm:$0xff]
  %v170 = vld [vmem:[%s1 + $0x1c0] sm:$0xff]
  %v171 = vld [vmem:[%s1 + $0x1c8] sm:$0xff]
  %v172 = vld [vmem:[%s1 + $0x1d0] sm:$0xff]
  %v173 = vld [vmem:[%s1 + $0x1d8] sm:$0xff]
  %v174 = vld [vmem:[%s1 + $0x1e0] sm:$0xff]
  %v175 = vld [vmem:[%s1 + $0x1e8] sm:$0xff]
  %v176 = vld [vmem:[%s1 + $0x1f0] sm:$0xff]
  %v177 = vld [vmem:[%s1 + $0x1f8] sm:$0xff]
  %v178 = vld [vmem:[%s1 + $0x200] sm:$0xff]
  %v179 = vld [vmem:[%s1 + $0x208] sm:$0xff]
  %v180 = vld [vmem:[%s1 + $0x210] sm:$0xff]
  %v181 = vld [vmem:[%s1 + $0x218] sm:$0xff]
  %v182 = vld [vmem:[%s1 + $0x220] sm:$0xff]
  %v183 = vld [vmem:[%s1 + $0x228] sm:$0xff]
  %v184 = vld [vmem:[%s1 + $0x230] sm:$0xff]
  %v185 = vld [vmem:[%s1 + $0x238] sm:$0xff]
  %v186 = vld [vmem:[%s2] sm:$0x1]
  %v188 = vlaneseq
  %v189 = vshrl.u32 %v188, 7
  %v190 = vsub.s32 0, %v189
  %v191 = vrot.slane %v186, %v190
  %vm193 = vcmask 523264
  %v195 = vsel %vm193, %v18, 0
  %v198 = vsel %vm193, %v23, 0
  %v201 = vsel %vm193, %v28, 0
  %v204 = vsel %vm193, %v33, 0
  %v207 = vsel %vm193, %v38, 0
  %v210 = vsel %vm193, %v43, 0
  %v213 = vsel %vm193, %v48, 0
  %v216 = vsel %vm193, %v53, 0
  %v219 = vsel %vm193, %v58, 0
  %v222 = vsel %vm193, %v63, 0
  %v225 = vsel %vm193, %v68, 0
  %v228 = vsel %vm193, %v73, 0
  %v231 = vsel %vm193, %v78, 0
  %v234 = vsel %vm193, %v83, 0
  %v237 = vsel %vm193, %v88, 0
  %v240 = vsel %vm193, %v93, 0
  %v243 = vsel %vm193, %v98, 0
  %v246 = vsel %vm193, %v103, 0
  %v249 = vsel %vm193, %v108, 0
  %v252 = vsel %vm193, %v113, 0
  %254 = vmatprep.subr.mxu0 0.0
  %255 = vmatpush1.msra.mxu0 %v114
  %256 = vmatprep.subr.mxu0 0.0
  %257 = vmatpush1.msra.mxu0 %v115
  %258 = vmatprep.subr.mxu0 0.0
  %259 = vmatpush1.msra.mxu0 %v116
  %260 = vmatprep.subr.mxu0 0.0
  %261 = vmatpush1.msra.mxu0 %v117
  %262 = vmatprep.subr.mxu0 0.0
  %263 = vmatpush1.msra.mxu0 %v118
  %264 = vmatprep.subr.mxu0 0.0
  %265 = vmatpush1.msra.mxu0 %v119
  %266 = vmatprep.subr.mxu0 0.0
  %267 = vmatpush1.msra.mxu0 %v120
  %268 = vmatprep.subr.mxu0 0.0
  %269 = vmatpush1.msra.mxu0 %v121
  %270 = vmatprep.subr.mxu0 0.0
  %271 = vmatpush1.msra.mxu0 %v122
  %272 = vmatprep.subr.mxu0 0.0
  %273 = vmatpush1.msra.mxu0 %v123
  %274 = vmatprep.subr.mxu0 0.0
  %275 = vmatpush1.msra.mxu0 %v124
  %276 = vmatprep.subr.mxu0 0.0
  %277 = vmatpush1.msra.mxu0 %v125
  %278 = vmatprep.subr.mxu0 0.0
  %279 = vmatpush1.msra.mxu0 %v126
  %280 = vmatprep.subr.mxu0 0.0
  %281 = vmatpush1.msra.mxu0 %v127
  %282 = vmatprep.subr.mxu0 0.0
  %283 = vmatpush1.msra.mxu0 %v128
  %284 = vmatprep.subr.mxu0 0.0
  %285 = vmatpush1.msra.mxu0 %v129
  %286 = vmatprep.subr.mxu0 0.0
  %287 = vmatpush1.msra.mxu0 %v130
  %288 = vmatprep.subr.mxu0 0.0
  %289 = vmatpush1.msra.mxu0 %v131
  %290 = vmatprep.subr.mxu0 0.0
  %291 = vmatpush1.msra.mxu0 %v132
  %292 = vmatprep.subr.mxu0 0.0
  %293 = vmatpush1.msra.mxu0 %v133
  %294 = vmatprep.subr.mxu0 0.0
  %295 = vmatpush1.msra.mxu0 %v134
  %296 = vmatprep.subr.mxu0 0.0
  %297 = vmatpush1.msra.mxu0 %v135
  %298 = vmatprep.subr.mxu0 0.0
  %299 = vmatpush1.msra.mxu0 %v136
  %300 = vmatprep.subr.mxu0 0.0
  %301 = vmatpush1.msra.mxu0 %v137
  %302 = vmatprep.subr.mxu0 0.0
  %303 = vmatpush1.msra.mxu0 %v138
  %304 = vmatprep.subr.mxu0 0.0
  %305 = vmatpush1.msra.mxu0 %v139
  %306 = vmatprep.subr.mxu0 0.0
  %307 = vmatpush1.msra.mxu0 %v140
  %308 = vmatprep.subr.mxu0 0.0
  %309 = vmatpush1.msra.mxu0 %v141
  %310 = vmatprep.subr.mxu0 0.0
  %311 = vmatpush1.msra.mxu0 %v142
  %312 = vmatprep.subr.mxu0 0.0
  %313 = vmatpush1.msra.mxu0 %v143
  %314 = vmatprep.subr.mxu0 0.0
  %315 = vmatpush1.msra.mxu0 %v144
  %316 = vmatprep.subr.mxu0 0.0
  %317 = vmatpush1.msra.mxu0 %v145
  %318 = vmatprep.mubr.f32.mxu0 %v15
  %319 = vmatmul.mubr.f32.gmra.mrb[0].mxu0 %v14
  %v320 = vpop.f32.mrb[0].mxu0
  %v321 = vadd.f32 %v191, %v320
  %v322 = vpop.f32.mrb[0].mxu0
  %323 = vmatprep.mubr.f32.mxu0 %v20
  %324 = vmatmul.mubr.f32.gmra.mrb[0].mxu0 %v19
  %v325 = vpop.f32.mrb[0].mxu0
  %v326 = vadd.f32 %v191, %v325
  %v327 = vpop.f32.mrb[0].mxu0
  %328 = vmatprep.mubr.f32.mxu0 %v25
  %329 = vmatmul.mubr.f32.gmra.mrb[0].mxu0 %v24
  %v330 = vpop.f32.mrb[0].mxu0
  %v331 = vadd.f32 %v191, %v330
  %v332 = vpop.f32.mrb[0].mxu0
  %333 = vmatprep.mubr.f32.mxu0 %v30
  %334 = vmatmul.mubr.f32.gmra.mrb[0].mxu0 %v29
  %v335 = vpop.f32.mrb[0].mxu0
  %v336 = vadd.f32 %v191, %v335
  %v337 = vpop.f32.mrb[0].mxu0
  %338 = vmatprep.mubr.f32.mxu0 %v35
  %339 = vmatmul.mubr.f32.gmra.mrb[0].mxu0 %v34
  %v340 = vpop.f32.mrb[0].mxu0
  %v341 = vadd.f32 %v191, %v340
  %v342 = vpop.f32.mrb[0].mxu0
  %343 = vmatprep.mubr.f32.mxu0 %v40
  %344 = vmatmul.mubr.f32.gmra.mrb[0].mxu0 %v39
  %v345 = vpop.f32.mrb[0].mxu0
  %v346 = vadd.f32 %v191, %v345
  %v347 = vpop.f32.mrb[0].mxu0
  %348 = vmatprep.mubr.f32.mxu0 %v45
  %349 = vmatmul.mubr.f32.gmra.mrb[0].mxu0 %v44
  %v350 = vpop.f32.mrb[0].mxu0
  %v351 = vadd.f32 %v191, %v350
  %v352 = vpop.f32.mrb[0].mxu0
  %353 = vmatprep.mubr.f32.mxu0 %v50
  %354 = vmatmul.mubr.f32.gmra.mrb[0].mxu0 %v49
  %v355 = vpop.f32.mrb[0].mxu0
  %v356 = vadd.f32 %v191, %v355
  %v357 = vpop.f32.mrb[0].mxu0
  %358 = vmatprep.mubr.f32.mxu0 %v55
  %359 = vmatmul.mubr.f32.gmra.mrb[0].mxu0 %v54
  %v360 = vpop.f32.mrb[0].mxu0
  %v361 = vadd.f32 %v191, %v360
  %v362 = vpop.f32.mrb[0].mxu0
  %363 = vmatprep.mubr.f32.mxu0 %v60
  %364 = vmatmul.mubr.f32.gmra.mrb[0].mxu0 %v59
  %v365 = vpop.f32.mrb[0].mxu0
  %v366 = vadd.f32 %v191, %v365
  %v367 = vpop.f32.mrb[0].mxu0
  %368 = vmatprep.mubr.f32.mxu0 %v65
  %369 = vmatmul.mubr.f32.gmra.mrb[0].mxu0 %v64
  %v370 = vpop.f32.mrb[0].mxu0
  %v371 = vadd.f32 %v191, %v370
  %v372 = vpop.f32.mrb[0].mxu0
  %373 = vmatprep.mubr.f32.mxu0 %v70
  %374 = vmatmul.mubr.f32.gmra.mrb[0].mxu0 %v69
  %v375 = vpop.f32.mrb[0].mxu0
  %v376 = vadd.f32 %v191, %v375
  %v377 = vpop.f32.mrb[0].mxu0
  %378 = vmatprep.mubr.f32.mxu0 %v75
  %379 = vmatmul.mubr.f32.gmra.mrb[0].mxu0 %v74
  %v380 = vpop.f32.mrb[0].mxu0
  %v381 = vadd.f32 %v191, %v380
  %v382 = vpop.f32.mrb[0].mxu0
  %383 = vmatprep.mubr.f32.mxu0 %v80
  %384 = vmatmul.mubr.f32.gmra.mrb[0].mxu0 %v79
  %v385 = vpop.f32.mrb[0].mxu0
  %v386 = vadd.f32 %v191, %v385
  %v387 = vpop.f32.mrb[0].mxu0
  %388 = vmatprep.mubr.f32.mxu0 %v85
  %389 = vmatmul.mubr.f32.gmra.mrb[0].mxu0 %v84
  %v390 = vpop.f32.mrb[0].mxu0
  %v391 = vadd.f32 %v191, %v390
  %v392 = vpop.f32.mrb[0].mxu0
  %393 = vmatprep.mubr.f32.mxu0 %v90
  %394 = vmatmul.mubr.f32.gmra.mrb[0].mxu0 %v89
  %v395 = vpop.f32.mrb[0].mxu0
  %v396 = vadd.f32 %v191, %v395
  %v397 = vpop.f32.mrb[0].mxu0
  %398 = vmatprep.mubr.f32.mxu0 %v95
  %399 = vmatmul.mubr.f32.gmra.mrb[0].mxu0 %v94
  %v400 = vpop.f32.mrb[0].mxu0
  %v401 = vadd.f32 %v191, %v400
  %v402 = vpop.f32.mrb[0].mxu0
  %403 = vmatprep.mubr.f32.mxu0 %v100
  %404 = vmatmul.mubr.f32.gmra.mrb[0].mxu0 %v99
  %v405 = vpop.f32.mrb[0].mxu0
  %v406 = vadd.f32 %v191, %v405
  %v407 = vpop.f32.mrb[0].mxu0
  %408 = vmatprep.mubr.f32.mxu0 %v105
  %409 = vmatmul.mubr.f32.gmra.mrb[0].mxu0 %v104
  %v410 = vpop.f32.mrb[0].mxu0
  %v411 = vadd.f32 %v191, %v410
  %v412 = vpop.f32.mrb[0].mxu0
  %413 = vmatprep.mubr.f32.mxu0 %v110
  %414 = vmatmul.mubr.f32.gmra.mrb[0].mxu0 %v109
  %v415 = vpop.f32.mrb[0].mxu0
  %v416 = vadd.f32 %v191, %v415
  %v417 = vpop.f32.mrb[0].mxu0
  %418 = vdwg.mxu0
  %419 = vmatprep.subr.mxu0 0.0
  %420 = vmatpush1.msra.mxu0 %v146
  %421 = vmatprep.subr.mxu0 0.0
  %422 = vmatpush1.msra.mxu0 %v147
  %423 = vmatprep.subr.mxu0 0.0
  %424 = vmatpush1.msra.mxu0 %v148
  %425 = vmatprep.subr.mxu0 0.0
  %426 = vmatpush1.msra.mxu0 %v149
  %427 = vmatprep.subr.mxu0 0.0
  %428 = vmatpush1.msra.mxu0 %v150
  %429 = vmatprep.subr.mxu0 0.0
  %430 = vmatpush1.msra.mxu0 %v151
  %431 = vmatprep.subr.mxu0 0.0
  %432 = vmatpush1.msra.mxu0 %v152
  %433 = vmatprep.subr.mxu0 0.0
  %434 = vmatpush1.msra.mxu0 %v153
  %435 = vmatprep.subr.mxu0 0.0
  %436 = vmatpush1.msra.mxu0 %v154
  %437 = vmatprep.subr.mxu0 0.0
  %438 = vmatpush1.msra.mxu0 %v155
  %439 = vmatprep.subr.mxu0 0.0
  %440 = vmatpush1.msra.mxu0 %v156
  %441 = vmatprep.subr.mxu0 0.0
  %442 = vmatpush1.msra.mxu0 %v157
  %443 = vmatprep.subr.mxu0 0.0
  %444 = vmatpush1.msra.mxu0 %v158
  %445 = vmatprep.subr.mxu0 0.0
  %446 = vmatpush1.msra.mxu0 %v159
  %447 = vmatprep.subr.mxu0 0.0
  %448 = vmatpush1.msra.mxu0 %v160
  %449 = vmatprep.subr.mxu0 0.0
  %450 = vmatpush1.msra.mxu0 %v161
  %451 = vmatprep.subr.mxu0 0.0
  %452 = vmatpush1.msra.mxu0 %v162
  %453 = vmatprep.subr.mxu0 0.0
  %454 = vmatpush1.msra.mxu0 %v163
  %455 = vmatprep.subr.mxu0 0.0
  %456 = vmatpush1.msra.mxu0 %v164
  %457 = vmatprep.subr.mxu0 0.0
  %458 = vmatpush1.msra.mxu0 %v165
  %459 = vmatprep.subr.mxu0 0.0
  %460 = vmatpush1.msra.mxu0 %v166
  %461 = vmatprep.subr.mxu0 0.0
  %462 = vmatpush1.msra.mxu0 %v167
  %463 = vmatprep.subr.mxu0 0.0
  %464 = vmatpush1.msra.mxu0 %v168
  %465 = vmatprep.subr.mxu0 0.0
  %466 = vmatpush1.msra.mxu0 %v169
  %467 = vmatprep.subr.mxu0 0.0
  %468 = vmatpush1.msra.mxu0 %v170
  %469 = vmatprep.subr.mxu0 0.0
  %470 = vmatpush1.msra.mxu0 %v171
  %471 = vmatprep.subr.mxu0 0.0
  %472 = vmatpush1.msra.mxu0 %v172
  %473 = vmatprep.subr.mxu0 0.0
  %474 = vmatpush1.msra.mxu0 %v173
  %475 = vmatprep.subr.mxu0 0.0
  %476 = vmatpush1.msra.mxu0 %v174
  %477 = vmatprep.subr.mxu0 0.0
  %478 = vmatpush1.msra.mxu0 %v175
  %479 = vmatprep.subr.mxu0 0.0
  %480 = vmatpush1.msra.mxu0 %v176
  %481 = vmatprep.subr.mxu0 0.0
  %482 = vmatpush1.msra.mxu0 %v177
  %483 = vmatprep.mubr.f32.mxu0 %v17
  %484 = vmatmul.mubr.f32.gmra.mrb[0].mxu0 %v16
  %v485 = vpop.f32.mrb[0].mxu0
  %v486 = vadd.f32 %v321, %v485
  %v487 = vpop.f32.mrb[0].mxu0
  %488 = vmatprep.mubr.f32.mxu0 %v22
  %489 = vmatmul.mubr.f32.gmra.mrb[0].mxu0 %v21
  %v490 = vpop.f32.mrb[0].mxu0
  %v491 = vadd.f32 %v326, %v490
  %v492 = vpop.f32.mrb[0].mxu0
  %493 = vmatprep.mubr.f32.mxu0 %v27
  %494 = vmatmul.mubr.f32.gmra.mrb[0].mxu0 %v26
  %v495 = vpop.f32.mrb[0].mxu0
  %v496 = vadd.f32 %v331, %v495
  %v497 = vpop.f32.mrb[0].mxu0
  %498 = vmatprep.mubr.f32.mxu0 %v32
  %499 = vmatmul.mubr.f32.gmra.mrb[0].mxu0 %v31
  %v500 = vpop.f32.mrb[0].mxu0
  %v501 = vadd.f32 %v336, %v500
  %v502 = vpop.f32.mrb[0].mxu0
  %503 = vmatprep.mubr.f32.mxu0 %v37
  %504 = vmatmul.mubr.f32.gmra.mrb[0].mxu0 %v36
  %v505 = vpop.f32.mrb[0].mxu0
  %v506 = vadd.f32 %v341, %v505
  %v507 = vpop.f32.mrb[0].mxu0
  %508 = vmatprep.mubr.f32.mxu0 %v42
  %509 = vmatmul.mubr.f32.gmra.mrb[0].mxu0 %v41
  %v510 = vpop.f32.mrb[0].mxu0
  %v511 = vadd.f32 %v346, %v510
  %v512 = vpop.f32.mrb[0].mxu0
  %513 = vmatprep.mubr.f32.mxu0 %v47
  %514 = vmatmul.mubr.f32.gmra.mrb[0].mxu0 %v46
  %v515 = vpop.f32.mrb[0].mxu0
  %v516 = vadd.f32 %v351, %v515
  %v517 = vpop.f32.mrb[0].mxu0
  %518 = vmatprep.mubr.f32.mxu0 %v52
  %519 = vmatmul.mubr.f32.gmra.mrb[0].mxu0 %v51
  %v520 = vpop.f32.mrb[0].mxu0
  %v521 = vadd.f32 %v356, %v520
  %v522 = vpop.f32.mrb[0].mxu0
  %523 = vmatprep.mubr.f32.mxu0 %v57
  %524 = vmatmul.mubr.f32.gmra.mrb[0].mxu0 %v56
  %v525 = vpop.f32.mrb[0].mxu0
  %v526 = vadd.f32 %v361, %v525
  %v527 = vpop.f32.mrb[0].mxu0
  %528 = vmatprep.mubr.f32.mxu0 %v62
  %529 = vmatmul.mubr.f32.gmra.mrb[0].mxu0 %v61
  %v530 = vpop.f32.mrb[0].mxu0
  %v531 = vadd.f32 %v366, %v530
  %v532 = vpop.f32.mrb[0].mxu0
  %533 = vmatprep.mubr.f32.mxu0 %v67
  %534 = vmatmul.mubr.f32.gmra.mrb[0].mxu0 %v66
  %v535 = vpop.f32.mrb[0].mxu0
  %v536 = vadd.f32 %v371, %v535
  %v537 = vpop.f32.mrb[0].mxu0
  %538 = vmatprep.mubr.f32.mxu0 %v72
  %539 = vmatmul.mubr.f32.gmra.mrb[0].mxu0 %v71
  %v540 = vpop.f32.mrb[0].mxu0
  %v541 = vadd.f32 %v376, %v540
  %v542 = vpop.f32.mrb[0].mxu0
  %543 = vmatprep.mubr.f32.mxu0 %v77
  %544 = vmatmul.mubr.f32.gmra.mrb[0].mxu0 %v76
  %v545 = vpop.f32.mrb[0].mxu0
  %v546 = vadd.f32 %v381, %v545
  %v547 = vpop.f32.mrb[0].mxu0
  %548 = vmatprep.mubr.f32.mxu0 %v82
  %549 = vmatmul.mubr.f32.gmra.mrb[0].mxu0 %v81
  %v550 = vpop.f32.mrb[0].mxu0
  %v551 = vadd.f32 %v386, %v550
  %v552 = vpop.f32.mrb[0].mxu0
  %553 = vmatprep.mubr.f32.mxu0 %v87
  %554 = vmatmul.mubr.f32.gmra.mrb[0].mxu0 %v86
  %v555 = vpop.f32.mrb[0].mxu0
  %v556 = vadd.f32 %v391, %v555
  %v557 = vpop.f32.mrb[0].mxu0
  %558 = vmatprep.mubr.f32.mxu0 %v92
  %559 = vmatmul.mubr.f32.gmra.mrb[0].mxu0 %v91
  %v560 = vpop.f32.mrb[0].mxu0
  %v561 = vadd.f32 %v396, %v560
  %v562 = vpop.f32.mrb[0].mxu0
  %563 = vmatprep.mubr.f32.mxu0 %v97
  %564 = vmatmul.mubr.f32.gmra.mrb[0].mxu0 %v96
  %v565 = vpop.f32.mrb[0].mxu0
  %v566 = vadd.f32 %v401, %v565
  %v567 = vpop.f32.mrb[0].mxu0
  %568 = vmatprep.mubr.f32.mxu0 %v102
  %569 = vmatmul.mubr.f32.gmra.mrb[0].mxu0 %v101
  %v570 = vpop.f32.mrb[0].mxu0
  %v571 = vadd.f32 %v406, %v570
  %v572 = vpop.f32.mrb[0].mxu0
  %573 = vmatprep.mubr.f32.mxu0 %v107
  %574 = vmatmul.mubr.f32.gmra.mrb[0].mxu0 %v106
  %v575 = vpop.f32.mrb[0].mxu0
  %v576 = vadd.f32 %v411, %v575
  %v577 = vpop.f32.mrb[0].mxu0
  %578 = vmatprep.mubr.f32.mxu0 %v112
  %579 = vmatmul.mubr.f32.gmra.mrb[0].mxu0 %v111
  %v580 = vpop.f32.mrb[0].mxu0
  %v581 = vadd.f32 %v416, %v580
  %v582 = vpop.f32.mrb[0].mxu0
  %583 = vdwg.mxu0
  %584 = vmatprep.subr.mxu0 0.0
  %585 = vmatpush1.msra.mxu0 %v178
  %586 = vmatprep.subr.mxu0 0.0
  %587 = vmatpush1.msra.mxu0 %v179
  %588 = vmatprep.subr.mxu0 0.0
  %589 = vmatpush1.msra.mxu0 %v180
  %590 = vmatprep.subr.mxu0 0.0
  %591 = vmatpush1.msra.mxu0 %v181
  %592 = vmatprep.subr.mxu0 0.0
  %593 = vmatpush1.msra.mxu0 %v182
  %594 = vmatprep.subr.mxu0 0.0
  %595 = vmatpush1.msra.mxu0 %v183
  %596 = vmatprep.subr.mxu0 0.0
  %597 = vmatpush1.msra.mxu0 %v184
  %598 = vmatprep.subr.mxu0 0.0
  %599 = vmatpush1.msra.mxu0 %v185
  %600 = vmatprep.subr.mxu0 0.0
  %601 = vmatpush1.msra.mxu0 0.0
  %602 = vmatprep.subr.mxu0 0.0
  %603 = vmatpush1.msra.mxu0 0.0
  %604 = vmatprep.subr.mxu0 0.0
  %605 = vmatpush1.msra.mxu0 0.0
  %606 = vmatprep.subr.mxu0 0.0
  %607 = vmatpush1.msra.mxu0 0.0
  %608 = vmatprep.subr.mxu0 0.0
  %609 = vmatpush1.msra.mxu0 0.0
  %610 = vmatprep.subr.mxu0 0.0
  %611 = vmatpush1.msra.mxu0 0.0
  %612 = vmatprep.subr.mxu0 0.0
  %613 = vmatpush1.msra.mxu0 0.0
  %614 = vmatprep.subr.mxu0 0.0
  %615 = vmatpush1.msra.mxu0 0.0
  %616 = vmatprep.subr.mxu0 0.0
  %617 = vmatpush1.msra.mxu0 0.0
  %618 = vmatprep.subr.mxu0 0.0
  %619 = vmatpush1.msra.mxu0 0.0
  %620 = vmatprep.subr.mxu0 0.0
  %621 = vmatpush1.msra.mxu0 0.0
  %622 = vmatprep.subr.mxu0 0.0
  %623 = vmatpush1.msra.mxu0 0.0
  %624 = vmatprep.subr.mxu0 0.0
  %625 = vmatpush1.msra.mxu0 0.0
  %626 = vmatprep.subr.mxu0 0.0
  %627 = vmatpush1.msra.mxu0 0.0
  %628 = vmatprep.subr.mxu0 0.0
  %629 = vmatpush1.msra.mxu0 0.0
  %630 = vmatprep.subr.mxu0 0.0
  %631 = vmatpush1.msra.mxu0 0.0
  %632 = vmatprep.subr.mxu0 0.0
  %633 = vmatpush1.msra.mxu0 0.0
  %634 = vmatprep.subr.mxu0 0.0
  %635 = vmatpush1.msra.mxu0 0.0
  %636 = vmatprep.subr.mxu0 0.0
  %637 = vmatpush1.msra.mxu0 0.0
  %638 = vmatprep.subr.mxu0 0.0
  %639 = vmatpush1.msra.mxu0 0.0
  %640 = vmatprep.subr.mxu0 0.0
  %641 = vmatpush1.msra.mxu0 0.0
  %642 = vmatprep.subr.mxu0 0.0
  %643 = vmatpush1.msra.mxu0 0.0
  %644 = vmatprep.subr.mxu0 0.0
  %645 = vmatpush1.msra.mxu0 0.0
  %646 = vmatprep.subr.mxu0 0.0
  %647 = vmatpush1.msra.mxu0 0.0
  %648 = vmatprep.mubr.f32.mxu0 0.0
  %649 = vmatmul.mubr.f32.gmra.mrb[0].mxu0 %v195
  %v650 = vpop.f32.mrb[0].mxu0
  %v651 = vadd.f32 %v486, %v650
  %v652 = vpop.f32.mrb[0].mxu0
  %653 = vmatprep.mubr.f32.mxu0 0.0
  %654 = vmatmul.mubr.f32.gmra.mrb[0].mxu0 %v198
  %v655 = vpop.f32.mrb[0].mxu0
  %v656 = vadd.f32 %v491, %v655
  %v657 = vpop.f32.mrb[0].mxu0
  %658 = vmatprep.mubr.f32.mxu0 0.0
  %659 = vmatmul.mubr.f32.gmra.mrb[0].mxu0 %v201
  %v660 = vpop.f32.mrb[0].mxu0
  %v661 = vadd.f32 %v496, %v660
  %v662 = vpop.f32.mrb[0].mxu0
  %663 = vmatprep.mubr.f32.mxu0 0.0
  %664 = vmatmul.mubr.f32.gmra.mrb[0].mxu0 %v204
  %v665 = vpop.f32.mrb[0].mxu0
  %v666 = vadd.f32 %v501, %v665
  %v667 = vpop.f32.mrb[0].mxu0
  %668 = vmatprep.mubr.f32.mxu0 0.0
  %669 = vmatmul.mubr.f32.gmra.mrb[0].mxu0 %v207
  %v670 = vpop.f32.mrb[0].mxu0
  %v671 = vadd.f32 %v506, %v670
  %v672 = vpop.f32.mrb[0].mxu0
  %673 = vmatprep.mubr.f32.mxu0 0.0
  %674 = vmatmul.mubr.f32.gmra.mrb[0].mxu0 %v210
  %v675 = vpop.f32.mrb[0].mxu0
  %v676 = vadd.f32 %v511, %v675
  %v677 = vpop.f32.mrb[0].mxu0
  %678 = vmatprep.mubr.f32.mxu0 0.0
  %679 = vmatmul.mubr.f32.gmra.mrb[0].mxu0 %v213
  %v680 = vpop.f32.mrb[0].mxu0
  %v681 = vadd.f32 %v516, %v680
  %v682 = vpop.f32.mrb[0].mxu0
  %683 = vmatprep.mubr.f32.mxu0 0.0
  %684 = vmatmul.mubr.f32.gmra.mrb[0].mxu0 %v216
  %v685 = vpop.f32.mrb[0].mxu0
  %v686 = vadd.f32 %v521, %v685
  %v687 = vpop.f32.mrb[0].mxu0
  %688 = vmatprep.mubr.f32.mxu0 0.0
  %689 = vmatmul.mubr.f32.gmra.mrb[0].mxu0 %v219
  %v690 = vpop.f32.mrb[0].mxu0
  %v691 = vadd.f32 %v526, %v690
  %v692 = vpop.f32.mrb[0].mxu0
  %693 = vmatprep.mubr.f32.mxu0 0.0
  %694 = vmatmul.mubr.f32.gmra.mrb[0].mxu0 %v222
  %v695 = vpop.f32.mrb[0].mxu0
  %v696 = vadd.f32 %v531, %v695
  %v697 = vpop.f32.mrb[0].mxu0
  %698 = vmatprep.mubr.f32.mxu0 0.0
  %699 = vmatmul.mubr.f32.gmra.mrb[0].mxu0 %v225
  %v700 = vpop.f32.mrb[0].mxu0
  %v701 = vadd.f32 %v536, %v700
  %v702 = vpop.f32.mrb[0].mxu0
  %703 = vmatprep.mubr.f32.mxu0 0.0
  %704 = vmatmul.mubr.f32.gmra.mrb[0].mxu0 %v228
  %v705 = vpop.f32.mrb[0].mxu0
  %v706 = vadd.f32 %v541, %v705
  %v707 = vpop.f32.mrb[0].mxu0
  %708 = vmatprep.mubr.f32.mxu0 0.0
  %709 = vmatmul.mubr.f32.gmra.mrb[0].mxu0 %v231
  %v710 = vpop.f32.mrb[0].mxu0
  %v711 = vadd.f32 %v546, %v710
  %v712 = vpop.f32.mrb[0].mxu0
  %713 = vmatprep.mubr.f32.mxu0 0.0
  %714 = vmatmul.mubr.f32.gmra.mrb[0].mxu0 %v234
  %v715 = vpop.f32.mrb[0].mxu0
  %v716 = vadd.f32 %v551, %v715
  %v717 = vpop.f32.mrb[0].mxu0
  %718 = vmatprep.mubr.f32.mxu0 0.0
  %719 = vmatmul.mubr.f32.gmra.mrb[0].mxu0 %v237
  %v720 = vpop.f32.mrb[0].mxu0
  %v721 = vadd.f32 %v556, %v720
  %v722 = vpop.f32.mrb[0].mxu0
  %723 = vmatprep.mubr.f32.mxu0 0.0
  %724 = vmatmul.mubr.f32.gmra.mrb[0].mxu0 %v240
  %v725 = vpop.f32.mrb[0].mxu0
  %v726 = vadd.f32 %v561, %v725
  %v727 = vpop.f32.mrb[0].mxu0
  %728 = vmatprep.mubr.f32.mxu0 0.0
  %729 = vmatmul.mubr.f32.gmra.mrb[0].mxu0 %v243
  %v730 = vpop.f32.mrb[0].mxu0
  %v731 = vadd.f32 %v566, %v730
  %v732 = vpop.f32.mrb[0].mxu0
  %733 = vmatprep.mubr.f32.mxu0 0.0
  %734 = vmatmul.mubr.f32.gmra.mrb[0].mxu0 %v246
  %v735 = vpop.f32.mrb[0].mxu0
  %v736 = vadd.f32 %v571, %v735
  %v737 = vpop.f32.mrb[0].mxu0
  %738 = vmatprep.mubr.f32.mxu0 0.0
  %739 = vmatmul.mubr.f32.gmra.mrb[0].mxu0 %v249
  %v740 = vpop.f32.mrb[0].mxu0
  %v741 = vadd.f32 %v576, %v740
  %v742 = vpop.f32.mrb[0].mxu0
  %743 = vmatprep.mubr.f32.mxu0 0.0
  %744 = vmatmul.mubr.f32.gmra.mrb[0].mxu0 %v252
  %v745 = vpop.f32.mrb[0].mxu0
  %v746 = vadd.f32 %v581, %v745
  %v747 = vpop.f32.mrb[0].mxu0
  %748 = vdwg.mxu0
  %749 = vst.msk [vmem:[%s3] sm:$0xff] %vm193, %v651
  %750 = vst.msk [vmem:[%s3 + $0x8] sm:$0xff] %vm193, %v656
  %751 = vst.msk [vmem:[%s3 + $0x10] sm:$0xff] %vm193, %v661
  %752 = vst.msk [vmem:[%s3 + $0x18] sm:$0xff] %vm193, %v666
  %753 = vst.msk [vmem:[%s3 + $0x20] sm:$0xff] %vm193, %v671
  %754 = vst.msk [vmem:[%s3 + $0x28] sm:$0xff] %vm193, %v676
  %755 = vst.msk [vmem:[%s3 + $0x30] sm:$0xff] %vm193, %v681
  %756 = vst.msk [vmem:[%s3 + $0x38] sm:$0xff] %vm193, %v686
  %757 = vst.msk [vmem:[%s3 + $0x40] sm:$0xff] %vm193, %v691
  %758 = vst.msk [vmem:[%s3 + $0x48] sm:$0xff] %vm193, %v696
  %759 = vst.msk [vmem:[%s3 + $0x50] sm:$0xff] %vm193, %v701
  %760 = vst.msk [vmem:[%s3 + $0x58] sm:$0xff] %vm193, %v706
  %761 = vst.msk [vmem:[%s3 + $0x60] sm:$0xff] %vm193, %v711
  %762 = vst.msk [vmem:[%s3 + $0x68] sm:$0xff] %vm193, %v716
  %763 = vst.msk [vmem:[%s3 + $0x70] sm:$0xff] %vm193, %v721
  %764 = vst.msk [vmem:[%s3 + $0x78] sm:$0xff] %vm193, %v726
  %765 = vst.msk [vmem:[%s3 + $0x80] sm:$0xff] %vm193, %v731
  %766 = vst.msk [vmem:[%s3 + $0x88] sm:$0xff] %vm193, %v736
  %767 = vst.msk [vmem:[%s3 + $0x90] sm:$0xff] %vm193, %v741
  %768 = vst.msk [vmem:[%s3 + $0x98] sm:$0xff] %vm193, %v746
  // Predicated region
  $region14: #{tf_conv_block.12} parent=0 // pred_check
    _
  $region15: #{tf_conv_block.12} parent=0 // pred_check_branch
    %770 = sbr.rel (0) target = $region17
  $region16: #{tf_conv_block.12} parent=0 // pred_region
    _
  $region17: #{tf_conv_block.12} parent=0 // pred_fallthru
    _
  // Predicated region
  $region18: #{tf_conv_block.12} parent=0 // pred_check
    _
  $region19: #{tf_conv_block.12} parent=0 // pred_check_branch
    %772 = sbr.rel (0) target = $region21
  $region20: #{tf_conv_block.12} parent=0 // pred_region
    _
  $region21: #{tf_conv_block.12} parent=0 // pred_fallthru
    _

// kernel: tf_conv_block.13
$region0: #{tf_conv_block.13}
  #allocation0 [shape = 'u32[]', space=smem, size = 0x4, offset = 0x4, fixed_abs, tag = 'smem constant byte address 0x4 - core index']
  #allocation1 [shape = 'u32[144,128]{1,0:T(1,128)}', space=vmem, size = 0x12000, scoped, tag = 'internal scratch']
  %s0 = inlined_call_operand.vmem [shape: f32[16,576], index: 0, kind: input, shape index: {}]
  %s1 = inlined_call_operand.vmem [shape: f32[576,64], index: 1, kind: input, shape index: {}]
  %s2 = inlined_call_operand.vmem [shape: f32[1,64], index: 2, kind: input, shape index: {}]
  %s3 = inlined_call_operand.vmem [shape: f32[16,64], index: 3, kind: output, shape index: {}]
  %s4 = sld [smem:[#allocation0]]
  $region22: #{tf_conv_block.13} parent=0
    _
  %s6 = ssub.s32 1, %s4
  %s7 = scalar_select 0, %s6, %s4
  // Predicated region
  $region2: #{tf_conv_block.13} parent=0 // pred_check
    _
  $region3: #{tf_conv_block.13} parent=0 // pred_check_branch
    %9 = sbr.rel (0) target = $region5
  $region4: #{tf_conv_block.13} parent=0 // pred_region
    _
  $region5: #{tf_conv_block.13} parent=0 // pred_fallthru
    _
  // Predicated region
  $region6: #{tf_conv_block.13} parent=0 // pred_check
    _
  $region7: #{tf_conv_block.13} parent=0 // pred_check_branch
    %11 = sbr.rel (0) target = $region9
  $region8: #{tf_conv_block.13} parent=0 // pred_region
    _
  $region9: #{tf_conv_block.13} parent=0 // pred_fallthru
    _
  // Predicated region
  $region10: #{tf_conv_block.13} parent=0 // pred_check
    _
  $region11: #{tf_conv_block.13} parent=0 // pred_check_branch
    %13 = sbr.rel (0) target = $region13
  $region12: #{tf_conv_block.13} parent=0 // pred_region
    _
  $region13: #{tf_conv_block.13} parent=0 // pred_fallthru
    _
  %v14 = vld [vmem:[%s0] sm:$0xff]
  %v15 = vld [vmem:[%s0 + $0x8] sm:$0xff]
  %v16 = vld [vmem:[%s0 + $0x10] sm:$0xff]
  %v17 = vld [vmem:[%s0 + $0x18] sm:$0xff]
  %v18 = vld [vmem:[%s0 + $0x20] sm:$0xff]
  %v19 = vld [vmem:[%s0 + $0x28] sm:$0xff]
  %v20 = vld [vmem:[%s0 + $0x30] sm:$0xff]
  %v21 = vld [vmem:[%s0 + $0x38] sm:$0xff]
  %v22 = vld [vmem:[%s0 + $0x40] sm:$0xff]
  %v23 = vld [vmem:[%s0 + $0x48] sm:$0xff]
  %v24 = vld [vmem:[%s1] sm:$0xff]
  %v25 = vld [vmem:[%s1 + $0x8] sm:$0xff]
  %v26 = vld [vmem:[%s1 + $0x10] sm:$0xff]
  %v27 = vld [vmem:[%s1 + $0x18] sm:$0xff]
  %v28 = vld [vmem:[%s1 + $0x20] sm:$0xff]
  %v29 = vld [vmem:[%s1 + $0x28] sm:$0xff]
  %v30 = vld [vmem:[%s1 + $0x30] sm:$0xff]
  %v31 = vld [vmem:[%s1 + $0x38] sm:$0xff]
  %v32 = vld [vmem:[%s1 + $0x40] sm:$0xff]
  %v33 = vld [vmem:[%s1 + $0x48] sm:$0xff]
  %v34 = vld [vmem:[%s1 + $0x50] sm:$0xff]
  %v35 = vld [vmem:[%s1 + $0x58] sm:$0xff]
  %v36 = vld [vmem:[%s1 + $0x60] sm:$0xff]
  %v37 = vld [vmem:[%s1 + $0x68] sm:$0xff]
  %v38 = vld [vmem:[%s1 + $0x70] sm:$0xff]
  %v39 = vld [vmem:[%s1 + $0x78] sm:$0xff]
  %v40 = vld [vmem:[%s1 + $0x80] sm:$0xff]
  %v41 = vld [vmem:[%s1 + $0x88] sm:$0xff]
  %v42 = vld [vmem:[%s1 + $0x90] sm:$0xff]
  %v43 = vld [vmem:[%s1 + $0x98] sm:$0xff]
  %v44 = vld [vmem:[%s1 + $0xa0] sm:$0xff]
  %v45 = vld [vmem:[%s1 + $0xa8] sm:$0xff]
  %v46 = vld [vmem:[%s1 + $0xb0] sm:$0xff]
  %v47 = vld [vmem:[%s1 + $0xb8] sm:$0xff]
  %v48 = vld [vmem:[%s1 + $0xc0] sm:$0xff]
  %v49 = vld [vmem:[%s1 + $0xc8] sm:$0xff]
  %v50 = vld [vmem:[%s1 + $0xd0] sm:$0xff]
  %v51 = vld [vmem:[%s1 + $0xd8] sm:$0xff]
  %v52 = vld [vmem:[%s1 + $0xe0] sm:$0xff]
  %v53 = vld [vmem:[%s1 + $0xe8] sm:$0xff]
  %v54 = vld [vmem:[%s1 + $0xf0] sm:$0xff]
  %v55 = vld [vmem:[%s1 + $0xf8] sm:$0xff]
  %v56 = vld [vmem:[%s1 + $0x100] sm:$0xff]
  %v57 = vld [vmem:[%s1 + $0x108] sm:$0xff]
  %v58 = vld [vmem:[%s1 + $0x110] sm:$0xff]
  %v59 = vld [vmem:[%s1 + $0x118] sm:$0xff]
  %v60 = vld [vmem:[%s1 + $0x120] sm:$0xff]
  %v61 = vld [vmem:[%s1 + $0x128] sm:$0xff]
  %v62 = vld [vmem:[%s1 + $0x130] sm:$0xff]
  %v63 = vld [vmem:[%s1 + $0x138] sm:$0xff]
  %v64 = vld [vmem:[%s1 + $0x140] sm:$0xff]
  %v65 = vld [vmem:[%s1 + $0x148] sm:$0xff]
  %v66 = vld [vmem:[%s1 + $0x150] sm:$0xff]
  %v67 = vld [vmem:[%s1 + $0x158] sm:$0xff]
  %v68 = vld [vmem:[%s1 + $0x160] sm:$0xff]
  %v69 = vld [vmem:[%s1 + $0x168] sm:$0xff]
  %v70 = vld [vmem:[%s1 + $0x170] sm:$0xff]
  %v71 = vld [vmem:[%s1 + $0x178] sm:$0xff]
  %v72 = vld [vmem:[%s1 + $0x180] sm:$0xff]
  %v73 = vld [vmem:[%s1 + $0x188] sm:$0xff]
  %v74 = vld [vmem:[%s1 + $0x190] sm:$0xff]
  %v75 = vld [vmem:[%s1 + $0x198] sm:$0xff]
  %v76 = vld [vmem:[%s1 + $0x1a0] sm:$0xff]
  %v77 = vld [vmem:[%s1 + $0x1a8] sm:$0xff]
  %v78 = vld [vmem:[%s1 + $0x1b0] sm:$0xff]
  %v79 = vld [vmem:[%s1 + $0x1b8] sm:$0xff]
  %v80 = vld [vmem:[%s1 + $0x1c0] sm:$0xff]
  %v81 = vld [vmem:[%s1 + $0x1c8] sm:$0xff]
  %v82 = vld [vmem:[%s1 + $0x1d0] sm:$0xff]
  %v83 = vld [vmem:[%s1 + $0x1d8] sm:$0xff]
  %v84 = vld [vmem:[%s1 + $0x1e0] sm:$0xff]
  %v85 = vld [vmem:[%s1 + $0x1e8] sm:$0xff]
  %v86 = vld [vmem:[%s1 + $0x1f0] sm:$0xff]
  %v87 = vld [vmem:[%s1 + $0x1f8] sm:$0xff]
  %v88 = vld [vmem:[%s1 + $0x200] sm:$0xff]
  %v89 = vld [vmem:[%s1 + $0x208] sm:$0xff]
  %v90 = vld [vmem:[%s1 + $0x210] sm:$0xff]
  %v91 = vld [vmem:[%s1 + $0x218] sm:$0xff]
  %v92 = vld [vmem:[%s1 + $0x220] sm:$0xff]
  %v93 = vld [vmem:[%s1 + $0x228] sm:$0xff]
  %v94 = vld [vmem:[%s1 + $0x230] sm:$0xff]
  %v95 = vld [vmem:[%s1 + $0x238] sm:$0xff]
  %v96 = vld [vmem:[%s2] sm:$0x1]
  %v98 = vlaneseq
  %v99 = vshrl.u32 %v98, 7
  %v100 = vsub.s32 0, %v99
  %v101 = vrot.slane %v96, %v100
  %vm103 = vcmask 523264
  %v105 = vsel %vm103, %v18, 0
  %v108 = vsel %vm103, %v23, 0
  %110 = vmatprep.subr.mxu0 0.0
  %111 = vmatpush1.msra.mxu0 %v24
  %112 = vmatprep.subr.mxu0 0.0
  %113 = vmatpush1.msra.mxu0 %v25
  %114 = vmatprep.subr.mxu0 0.0
  %115 = vmatpush1.msra.mxu0 %v26
  %116 = vmatprep.subr.mxu0 0.0
  %117 = vmatpush1.msra.mxu0 %v27
  %118 = vmatprep.subr.mxu0 0.0
  %119 = vmatpush1.msra.mxu0 %v28
  %120 = vmatprep.subr.mxu0 0.0
  %121 = vmatpush1.msra.mxu0 %v29
  %122 = vmatprep.subr.mxu0 0.0
  %123 = vmatpush1.msra.mxu0 %v30
  %124 = vmatprep.subr.mxu0 0.0
  %125 = vmatpush1.msra.mxu0 %v31
  %126 = vmatprep.subr.mxu0 0.0
  %127 = vmatpush1.msra.mxu0 %v32
  %128 = vmatprep.subr.mxu0 0.0
  %129 = vmatpush1.msra.mxu0 %v33
  %130 = vmatprep.subr.mxu0 0.0
  %131 = vmatpush1.msra.mxu0 %v34
  %132 = vmatprep.subr.mxu0 0.0
  %133 = vmatpush1.msra.mxu0 %v35
  %134 = vmatprep.subr.mxu0 0.0
  %135 = vmatpush1.msra.mxu0 %v36
  %136 = vmatprep.subr.mxu0 0.0
  %137 = vmatpush1.msra.mxu0 %v37
  %138 = vmatprep.subr.mxu0 0.0
  %139 = vmatpush1.msra.mxu0 %v38
  %140 = vmatprep.subr.mxu0 0.0
  %141 = vmatpush1.msra.mxu0 %v39
  %142 = vmatprep.subr.mxu0 0.0
  %143 = vmatpush1.msra.mxu0 %v40
  %144 = vmatprep.subr.mxu0 0.0
  %145 = vmatpush1.msra.mxu0 %v41
  %146 = vmatprep.subr.mxu0 0.0
  %147 = vmatpush1.msra.mxu0 %v42
  %148 = vmatprep.subr.mxu0 0.0
  %149 = vmatpush1.msra.mxu0 %v43
  %150 = vmatprep.subr.mxu0 0.0
  %151 = vmatpush1.msra.mxu0 %v44
  %152 = vmatprep.subr.mxu0 0.0
  %153 = vmatpush1.msra.mxu0 %v45
  %154 = vmatprep.subr.mxu0 0.0
  %155 = vmatpush1.msra.mxu0 %v46
  %156 = vmatprep.subr.mxu0 0.0
  %157 = vmatpush1.msra.mxu0 %v47
  %158 = vmatprep.subr.mxu0 0.0
  %159 = vmatpush1.msra.mxu0 %v48
  %160 = vmatprep.subr.mxu0 0.0
  %161 = vmatpush1.msra.mxu0 %v49
  %162 = vmatprep.subr.mxu0 0.0
  %163 = vmatpush1.msra.mxu0 %v50
  %164 = vmatprep.subr.mxu0 0.0
  %165 = vmatpush1.msra.mxu0 %v51
  %166 = vmatprep.subr.mxu0 0.0
  %167 = vmatpush1.msra.mxu0 %v52
  %168 = vmatprep.subr.mxu0 0.0
  %169 = vmatpush1.msra.mxu0 %v53
  %170 = vmatprep.subr.mxu0 0.0
  %171 = vmatpush1.msra.mxu0 %v54
  %172 = vmatprep.subr.mxu0 0.0
  %173 = vmatpush1.msra.mxu0 %v55
  %174 = vmatprep.mubr.f32.mxu0 %v15
  %175 = vmatmul.mubr.f32.gmra.mrb[0].mxu0 %v14
  %v176 = vpop.f32.mrb[0].mxu0
  %v177 = vadd.f32 %v101, %v176
  %v178 = vpop.f32.mrb[0].mxu0
  %179 = vmatprep.mubr.f32.mxu0 %v20
  %180 = vmatmul.mubr.f32.gmra.mrb[0].mxu0 %v19
  %v181 = vpop.f32.mrb[0].mxu0
  %v182 = vadd.f32 %v101, %v181
  %v183 = vpop.f32.mrb[0].mxu0
  %184 = vdwg.mxu0
  %185 = vmatprep.subr.mxu0 0.0
  %186 = vmatpush1.msra.mxu0 %v56
  %187 = vmatprep.subr.mxu0 0.0
  %188 = vmatpush1.msra.mxu0 %v57
  %189 = vmatprep.subr.mxu0 0.0
  %190 = vmatpush1.msra.mxu0 %v58
  %191 = vmatprep.subr.mxu0 0.0
  %192 = vmatpush1.msra.mxu0 %v59
  %193 = vmatprep.subr.mxu0 0.0
  %194 = vmatpush1.msra.mxu0 %v60
  %195 = vmatprep.subr.mxu0 0.0
  %196 = vmatpush1.msra.mxu0 %v61
  %197 = vmatprep.subr.mxu0 0.0
  %198 = vmatpush1.msra.mxu0 %v62
  %199 = vmatprep.subr.mxu0 0.0
  %200 = vmatpush1.msra.mxu0 %v63
  %201 = vmatprep.subr.mxu0 0.0
  %202 = vmatpush1.msra.mxu0 %v64
  %203 = vmatprep.subr.mxu0 0.0
  %204 = vmatpush1.msra.mxu0 %v65
  %205 = vmatprep.subr.mxu0 0.0
  %206 = vmatpush1.msra.mxu0 %v66
  %207 = vmatprep.subr.mxu0 0.0
  %208 = vmatpush1.msra.mxu0 %v67
  %209 = vmatprep.subr.mxu0 0.0
  %210 = vmatpush1.msra.mxu0 %v68
  %211 = vmatprep.subr.mxu0 0.0
  %212 = vmatpush1.msra.mxu0 %v69
  %213 = vmatprep.subr.mxu0 0.0
  %214 = vmatpush1.msra.mxu0 %v70
  %215 = vmatprep.subr.mxu0 0.0
  %216 = vmatpush1.msra.mxu0 %v71
  %217 = vmatprep.subr.mxu0 0.0
  %218 = vmatpush1.msra.mxu0 %v72
  %219 = vmatprep.subr.mxu0 0.0
  %220 = vmatpush1.msra.mxu0 %v73
  %221 = vmatprep.subr.mxu0 0.0
  %222 = vmatpush1.msra.mxu0 %v74
  %223 = vmatprep.subr.mxu0 0.0
  %224 = vmatpush1.msra.mxu0 %v75
  %225 = vmatprep.subr.mxu0 0.0
  %226 = vmatpush1.msra.mxu0 %v76
  %227 = vmatprep.subr.mxu0 0.0
  %228 = vmatpush1.msra.mxu0 %v77
  %229 = vmatprep.subr.mxu0 0.0
  %230 = vmatpush1.msra.mxu0 %v78
  %231 = vmatprep.subr.mxu0 0.0
  %232 = vmatpush1.msra.mxu0 %v79
  %233 = vmatprep.subr.mxu0 0.0
  %234 = vmatpush1.msra.mxu0 %v80
  %235 = vmatprep.subr.mxu0 0.0
  %236 = vmatpush1.msra.mxu0 %v81
  %237 = vmatprep.subr.mxu0 0.0
  %238 = vmatpush1.msra.mxu0 %v82
  %239 = vmatprep.subr.mxu0 0.0
  %240 = vmatpush1.msra.mxu0 %v83
  %241 = vmatprep.subr.mxu0 0.0
  %242 = vmatpush1.msra.mxu0 %v84
  %243 = vmatprep.subr.mxu0 0.0
  %244 = vmatpush1.msra.mxu0 %v85
  %245 = vmatprep.subr.mxu0 0.0
  %246 = vmatpush1.msra.mxu0 %v86
  %247 = vmatprep.subr.mxu0 0.0
  %248 = vmatpush1.msra.mxu0 %v87
  %249 = vmatprep.mubr.f32.mxu0 %v17
  %250 = vmatmul.mubr.f32.gmra.mrb[0].mxu0 %v16
  %v251 = vpop.f32.mrb[0].mxu0
  %v252 = vadd.f32 %v177, %v251
  %v253 = vpop.f32.mrb[0].mxu0
  %254 = vmatprep.mubr.f32.mxu0 %v22
  %255 = vmatmul.mubr.f32.gmra.mrb[0].mxu0 %v21
  %v256 = vpop.f32.mrb[0].mxu0
  %v257 = vadd.f32 %v182, %v256
  %v258 = vpop.f32.mrb[0].mxu0
  %259 = vdwg.mxu0
  %260 = vmatprep.subr.mxu0 0.0
  %261 = vmatpush1.msra.mxu0 %v88
  %262 = vmatprep.subr.mxu0 0.0
  %263 = vmatpush1.msra.mxu0 %v89
  %264 = vmatprep.subr.mxu0 0.0
  %265 = vmatpush1.msra.mxu0 %v90
  %266 = vmatprep.subr.mxu0 0.0
  %267 = vmatpush1.msra.mxu0 %v91
  %268 = vmatprep.subr.mxu0 0.0
  %269 = vmatpush1.msra.mxu0 %v92
  %270 = vmatprep.subr.mxu0 0.0
  %271 = vmatpush1.msra.mxu0 %v93
  %272 = vmatprep.subr.mxu0 0.0
  %273 = vmatpush1.msra.mxu0 %v94
  %274 = vmatprep.subr.mxu0 0.0
  %275 = vmatpush1.msra.mxu0 %v95
  %276 = vmatprep.subr.mxu0 0.0
  %277 = vmatpush1.msra.mxu0 0.0
  %278 = vmatprep.subr.mxu0 0.0
  %279 = vmatpush1.msra.mxu0 0.0
  %280 = vmatprep.subr.mxu0 0.0
  %281 = vmatpush1.msra.mxu0 0.0
  %282 = vmatprep.subr.mxu0 0.0
  %283 = vmatpush1.msra.mxu0 0.0
  %284 = vmatprep.subr.mxu0 0.0
  %285 = vmatpush1.msra.mxu0 0.0
  %286 = vmatprep.subr.mxu0 0.0
  %287 = vmatpush1.msra.mxu0 0.0
  %288 = vmatprep.subr.mxu0 0.0
  %289 = vmatpush1.msra.mxu0 0.0
  %290 = vmatprep.subr.mxu0 0.0
  %291 = vmatpush1.msra.mxu0 0.0
  %292 = vmatprep.subr.mxu0 0.0
  %293 = vmatpush1.msra.mxu0 0.0
  %294 = vmatprep.subr.mxu0 0.0
  %295 = vmatpush1.msra.mxu0 0.0
  %296 = vmatprep.subr.mxu0 0.0
  %297 = vmatpush1.msra.mxu0 0.0
  %298 = vmatprep.subr.mxu0 0.0
  %299 = vmatpush1.msra.mxu0 0.0
  %300 = vmatprep.subr.mxu0 0.0
  %301 = vmatpush1.msra.mxu0 0.0
  %302 = vmatprep.subr.mxu0 0.0
  %303 = vmatpush1.msra.mxu0 0.0
  %304 = vmatprep.subr.mxu0 0.0
  %305 = vmatpush1.msra.mxu0 0.0
  %306 = vmatprep.subr.mxu0 0.0
  %307 = vmatpush1.msra.mxu0 0.0
  %308 = vmatprep.subr.mxu0 0.0
  %309 = vmatpush1.msra.mxu0 0.0
  %310 = vmatprep.subr.mxu0 0.0
  %311 = vmatpush1.msra.mxu0 0.0
  %312 = vmatprep.subr.mxu0 0.0
  %313 = vmatpush1.msra.mxu0 0.0
  %314 = vmatprep.subr.mxu0 0.0
  %315 = vmatpush1.msra.mxu0 0.0
  %316 = vmatprep.subr.mxu0 0.0
  %317 = vmatpush1.msra.mxu0 0.0
  %318 = vmatprep.subr.mxu0 0.0
  %319 = vmatpush1.msra.mxu0 0.0
  %320 = vmatprep.subr.mxu0 0.0
  %321 = vmatpush1.msra.mxu0 0.0
  %322 = vmatprep.subr.mxu0 0.0
  %323 = vmatpush1.msra.mxu0 0.0
  %324 = vmatprep.mubr.f32.mxu0 0.0
  %325 = vmatmul.mubr.f32.gmra.mrb[0].mxu0 %v105
  %v326 = vpop.f32.mrb[0].mxu0
  %v327 = vadd.f32 %v252, %v326
  %v328 = vpop.f32.mrb[0].mxu0
  %329 = vmatprep.mubr.f32.mxu0 0.0
  %330 = vmatmul.mubr.f32.gmra.mrb[0].mxu0 %v108
  %v331 = vpop.f32.mrb[0].mxu0
  %v332 = vadd.f32 %v257, %v331
  %v333 = vpop.f32.mrb[0].mxu0
  %334 = vdwg.mxu0
  %v335 = vmax.f32 %v327, 0.0
  %v336 = vmax.f32 %v332, 0.0
  %337 = vst.msk [vmem:[%s3] sm:$0xff] %vm103, %v335
  %338 = vst.msk [vmem:[%s3 + $0x8] sm:$0xff] %vm103, %v336
  // Predicated region
  $region14: #{tf_conv_block.13} parent=0 // pred_check
    _
  $region15: #{tf_conv_block.13} parent=0 // pred_check_branch
    %340 = sbr.rel (0) target = $region17
  $region16: #{tf_conv_block.13} parent=0 // pred_region
    _
  $region17: #{tf_conv_block.13} parent=0 // pred_fallthru
    _
  // Predicated region
  $region18: #{tf_conv_block.13} parent=0 // pred_check
    _
  $region19: #{tf_conv_block.13} parent=0 // pred_check_branch
    %342 = sbr.rel (0) target = $region21
  $region20: #{tf_conv_block.13} parent=0 // pred_region
    _
  $region21: #{tf_conv_block.13} parent=0 // pred_fallthru
    _

// kernel: tf_conv_block.14
$region0: #{tf_conv_block.14}
  #allocation0 [shape = 'u32[]', space=smem, size = 0x4, offset = 0x4, fixed_abs, tag = 'smem constant byte address 0x4 - core index']
  #allocation1 [shape = 'u32[144,128]{1,0:T(1,128)}', space=vmem, size = 0x12000, scoped, tag = 'internal scratch']
  %s0 = inlined_call_operand.vmem [shape: f32[8,576], index: 0, kind: input, shape index: {}]
  %s1 = inlined_call_operand.vmem [shape: f32[576,64], index: 1, kind: input, shape index: {}]
  %s2 = inlined_call_operand.vmem [shape: f32[1,64], index: 2, kind: input, shape index: {}]
  %s3 = inlined_call_operand.vmem [shape: f32[8,64], index: 3, kind: output, shape index: {}]
  %s4 = sld [smem:[#allocation0]]
  $region22: #{tf_conv_block.14} parent=0
    _
  %s6 = ssub.s32 1, %s4
  %s7 = scalar_select 0, %s6, %s4
  // Predicated region
  $region2: #{tf_conv_block.14} parent=0 // pred_check
    _
  $region3: #{tf_conv_block.14} parent=0 // pred_check_branch
    %9 = sbr.rel (0) target = $region5
  $region4: #{tf_conv_block.14} parent=0 // pred_region
    _
  $region5: #{tf_conv_block.14} parent=0 // pred_fallthru
    _
  // Predicated region
  $region6: #{tf_conv_block.14} parent=0 // pred_check
    _
  $region7: #{tf_conv_block.14} parent=0 // pred_check_branch
    %11 = sbr.rel (0) target = $region9
  $region8: #{tf_conv_block.14} parent=0 // pred_region
    _
  $region9: #{tf_conv_block.14} parent=0 // pred_fallthru
    _
  // Predicated region
  $region10: #{tf_conv_block.14} parent=0 // pred_check
    _
  $region11: #{tf_conv_block.14} parent=0 // pred_check_branch
    %13 = sbr.rel (0) target = $region13
  $region12: #{tf_conv_block.14} parent=0 // pred_region
    _
  $region13: #{tf_conv_block.14} parent=0 // pred_fallthru
    _
  %v14 = vld [vmem:[%s0] sm:$0xff]
  %v15 = vld [vmem:[%s0 + $0x8] sm:$0xff]
  %v16 = vld [vmem:[%s0 + $0x10] sm:$0xff]
  %v17 = vld [vmem:[%s0 + $0x18] sm:$0xff]
  %v18 = vld [vmem:[%s0 + $0x20] sm:$0xff]
  %v19 = vld [vmem:[%s1] sm:$0xff]
  %v20 = vld [vmem:[%s1 + $0x8] sm:$0xff]
  %v21 = vld [vmem:[%s1 + $0x10] sm:$0xff]
  %v22 = vld [vmem:[%s1 + $0x18] sm:$0xff]
  %v23 = vld [vmem:[%s1 + $0x20] sm:$0xff]
  %v24 = vld [vmem:[%s1 + $0x28] sm:$0xff]
  %v25 = vld [vmem:[%s1 + $0x30] sm:$0xff]
  %v26 = vld [vmem:[%s1 + $0x38] sm:$0xff]
  %v27 = vld [vmem:[%s1 + $0x40] sm:$0xff]
  %v28 = vld [vmem:[%s1 + $0x48] sm:$0xff]
  %v29 = vld [vmem:[%s1 + $0x50] sm:$0xff]
  %v30 = vld [vmem:[%s1 + $0x58] sm:$0xff]
  %v31 = vld [vmem:[%s1 + $0x60] sm:$0xff]
  %v32 = vld [vmem:[%s1 + $0x68] sm:$0xff]
  %v33 = vld [vmem:[%s1 + $0x70] sm:$0xff]
  %v34 = vld [vmem:[%s1 + $0x78] sm:$0xff]
  %v35 = vld [vmem:[%s1 + $0x80] sm:$0xff]
  %v36 = vld [vmem:[%s1 + $0x88] sm:$0xff]
  %v37 = vld [vmem:[%s1 + $0x90] sm:$0xff]
  %v38 = vld [vmem:[%s1 + $0x98] sm:$0xff]
  %v39 = vld [vmem:[%s1 + $0xa0] sm:$0xff]
  %v40 = vld [vmem:[%s1 + $0xa8] sm:$0xff]
  %v41 = vld [vmem:[%s1 + $0xb0] sm:$0xff]
  %v42 = vld [vmem:[%s1 + $0xb8] sm:$0xff]
  %v43 = vld [vmem:[%s1 + $0xc0] sm:$0xff]
  %v44 = vld [vmem:[%s1 + $0xc8] sm:$0xff]
  %v45 = vld [vmem:[%s1 + $0xd0] sm:$0xff]
  %v46 = vld [vmem:[%s1 + $0xd8] sm:$0xff]
  %v47 = vld [vmem:[%s1 + $0xe0] sm:$0xff]
  %v48 = vld [vmem:[%s1 + $0xe8] sm:$0xff]
  %v49 = vld [vmem:[%s1 + $0xf0] sm:$0xff]
  %v50 = vld [vmem:[%s1 + $0xf8] sm:$0xff]
  %v51 = vld [vmem:[%s1 + $0x100] sm:$0xff]
  %v52 = vld [vmem:[%s1 + $0x108] sm:$0xff]
  %v53 = vld [vmem:[%s1 + $0x110] sm:$0xff]
  %v54 = vld [vmem:[%s1 + $0x118] sm:$0xff]
  %v55 = vld [vmem:[%s1 + $0x120] sm:$0xff]
  %v56 = vld [vmem:[%s1 + $0x128] sm:$0xff]
  %v57 = vld [vmem:[%s1 + $0x130] sm:$0xff]
  %v58 = vld [vmem:[%s1 + $0x138] sm:$0xff]
  %v59 = vld [vmem:[%s1 + $0x140] sm:$0xff]
  %v60 = vld [vmem:[%s1 + $0x148] sm:$0xff]
  %v61 = vld [vmem:[%s1 + $0x150] sm:$0xff]
  %v62 = vld [vmem:[%s1 + $0x158] sm:$0xff]
  %v63 = vld [vmem:[%s1 + $0x160] sm:$0xff]
  %v64 = vld [vmem:[%s1 + $0x168] sm:$0xff]
  %v65 = vld [vmem:[%s1 + $0x170] sm:$0xff]
  %v66 = vld [vmem:[%s1 + $0x178] sm:$0xff]
  %v67 = vld [vmem:[%s1 + $0x180] sm:$0xff]
  %v68 = vld [vmem:[%s1 + $0x188] sm:$0xff]
  %v69 = vld [vmem:[%s1 + $0x190] sm:$0xff]
  %v70 = vld [vmem:[%s1 + $0x198] sm:$0xff]
  %v71 = vld [vmem:[%s1 + $0x1a0] sm:$0xff]
  %v72 = vld [vmem:[%s1 + $0x1a8] sm:$0xff]
  %v73 = vld [vmem:[%s1 + $0x1b0] sm:$0xff]
  %v74 = vld [vmem:[%s1 + $0x1b8] sm:$0xff]
  %v75 = vld [vmem:[%s1 + $0x1c0] sm:$0xff]
  %v76 = vld [vmem:[%s1 + $0x1c8] sm:$0xff]
  %v77 = vld [vmem:[%s1 + $0x1d0] sm:$0xff]
  %v78 = vld [vmem:[%s1 + $0x1d8] sm:$0xff]
  %v79 = vld [vmem:[%s1 + $0x1e0] sm:$0xff]
  %v80 = vld [vmem:[%s1 + $0x1e8] sm:$0xff]
  %v81 = vld [vmem:[%s1 + $0x1f0] sm:$0xff]
  %v82 = vld [vmem:[%s1 + $0x1f8] sm:$0xff]
  %v83 = vld [vmem:[%s1 + $0x200] sm:$0xff]
  %v84 = vld [vmem:[%s1 + $0x208] sm:$0xff]
  %v85 = vld [vmem:[%s1 + $0x210] sm:$0xff]
  %v86 = vld [vmem:[%s1 + $0x218] sm:$0xff]
  %v87 = vld [vmem:[%s1 + $0x220] sm:$0xff]
  %v88 = vld [vmem:[%s1 + $0x228] sm:$0xff]
  %v89 = vld [vmem:[%s1 + $0x230] sm:$0xff]
  %v90 = vld [vmem:[%s1 + $0x238] sm:$0xff]
  %v91 = vld [vmem:[%s2] sm:$0x1]
  %v93 = vlaneseq
  %v94 = vshrl.u32 %v93, 7
  %v95 = vsub.s32 0, %v94
  %v96 = vrot.slane %v91, %v95
  %vm98 = vcmask 523264
  %v100 = vsel %vm98, %v18, 0
  %102 = vmatprep.subr.mxu0 0.0
  %103 = vmatpush1.msra.mxu0 %v19
  %104 = vmatprep.subr.mxu0 0.0
  %105 = vmatpush1.msra.mxu0 %v20
  %106 = vmatprep.subr.mxu0 0.0
  %107 = vmatpush1.msra.mxu0 %v21
  %108 = vmatprep.subr.mxu0 0.0
  %109 = vmatpush1.msra.mxu0 %v22
  %110 = vmatprep.subr.mxu0 0.0
  %111 = vmatpush1.msra.mxu0 %v23
  %112 = vmatprep.subr.mxu0 0.0
  %113 = vmatpush1.msra.mxu0 %v24
  %114 = vmatprep.subr.mxu0 0.0
  %115 = vmatpush1.msra.mxu0 %v25
  %116 = vmatprep.subr.mxu0 0.0
  %117 = vmatpush1.msra.mxu0 %v26
  %118 = vmatprep.subr.mxu0 0.0
  %119 = vmatpush1.msra.mxu0 %v27
  %120 = vmatprep.subr.mxu0 0.0
  %121 = vmatpush1.msra.mxu0 %v28
  %122 = vmatprep.subr.mxu0 0.0
  %123 = vmatpush1.msra.mxu0 %v29
  %124 = vmatprep.subr.mxu0 0.0
  %125 = vmatpush1.msra.mxu0 %v30
  %126 = vmatprep.subr.mxu0 0.0
  %127 = vmatpush1.msra.mxu0 %v31
  %128 = vmatprep.subr.mxu0 0.0
  %129 = vmatpush1.msra.mxu0 %v32
  %130 = vmatprep.subr.mxu0 0.0
  %131 = vmatpush1.msra.mxu0 %v33
  %132 = vmatprep.subr.mxu0 0.0
  %133 = vmatpush1.msra.mxu0 %v34
  %134 = vmatprep.subr.mxu0 0.0
  %135 = vmatpush1.msra.mxu0 %v35
  %136 = vmatprep.subr.mxu0 0.0
  %137 = vmatpush1.msra.mxu0 %v36
  %138 = vmatprep.subr.mxu0 0.0
  %139 = vmatpush1.msra.mxu0 %v37
  %140 = vmatprep.subr.mxu0 0.0
  %141 = vmatpush1.msra.mxu0 %v38
  %142 = vmatprep.subr.mxu0 0.0
  %143 = vmatpush1.msra.mxu0 %v39
  %144 = vmatprep.subr.mxu0 0.0
  %145 = vmatpush1.msra.mxu0 %v40
  %146 = vmatprep.subr.mxu0 0.0
  %147 = vmatpush1.msra.mxu0 %v41
  %148 = vmatprep.subr.mxu0 0.0
  %149 = vmatpush1.msra.mxu0 %v42
  %150 = vmatprep.subr.mxu0 0.0
  %151 = vmatpush1.msra.mxu0 %v43
  %152 = vmatprep.subr.mxu0 0.0
  %153 = vmatpush1.msra.mxu0 %v44
  %154 = vmatprep.subr.mxu0 0.0
  %155 = vmatpush1.msra.mxu0 %v45
  %156 = vmatprep.subr.mxu0 0.0
  %157 = vmatpush1.msra.mxu0 %v46
  %158 = vmatprep.subr.mxu0 0.0
  %159 = vmatpush1.msra.mxu0 %v47
  %160 = vmatprep.subr.mxu0 0.0
  %161 = vmatpush1.msra.mxu0 %v48
  %162 = vmatprep.subr.mxu0 0.0
  %163 = vmatpush1.msra.mxu0 %v49
  %164 = vmatprep.subr.mxu0 0.0
  %165 = vmatpush1.msra.mxu0 %v50
  %166 = vmatprep.mubr.f32.mxu0 %v15
  %167 = vmatmul.mubr.f32.gmra.mrb[0].mxu0 %v14
  %v168 = vpop.f32.mrb[0].mxu0
  %v169 = vadd.f32 %v96, %v168
  %v170 = vpop.f32.mrb[0].mxu0
  %171 = vdwg.mxu0
  %172 = vmatprep.subr.mxu0 0.0
  %173 = vmatpush1.msra.mxu0 %v51
  %174 = vmatprep.subr.mxu0 0.0
  %175 = vmatpush1.msra.mxu0 %v52
  %176 = vmatprep.subr.mxu0 0.0
  %177 = vmatpush1.msra.mxu0 %v53
  %178 = vmatprep.subr.mxu0 0.0
  %179 = vmatpush1.msra.mxu0 %v54
  %180 = vmatprep.subr.mxu0 0.0
  %181 = vmatpush1.msra.mxu0 %v55
  %182 = vmatprep.subr.mxu0 0.0
  %183 = vmatpush1.msra.mxu0 %v56
  %184 = vmatprep.subr.mxu0 0.0
  %185 = vmatpush1.msra.mxu0 %v57
  %186 = vmatprep.subr.mxu0 0.0
  %187 = vmatpush1.msra.mxu0 %v58
  %188 = vmatprep.subr.mxu0 0.0
  %189 = vmatpush1.msra.mxu0 %v59
  %190 = vmatprep.subr.mxu0 0.0
  %191 = vmatpush1.msra.mxu0 %v60
  %192 = vmatprep.subr.mxu0 0.0
  %193 = vmatpush1.msra.mxu0 %v61
  %194 = vmatprep.subr.mxu0 0.0
  %195 = vmatpush1.msra.mxu0 %v62
  %196 = vmatprep.subr.mxu0 0.0
  %197 = vmatpush1.msra.mxu0 %v63
  %198 = vmatprep.subr.mxu0 0.0
  %199 = vmatpush1.msra.mxu0 %v64
  %200 = vmatprep.subr.mxu0 0.0
  %201 = vmatpush1.msra.mxu0 %v65
  %202 = vmatprep.subr.mxu0 0.0
  %203 = vmatpush1.msra.mxu0 %v66
  %204 = vmatprep.subr.mxu0 0.0
  %205 = vmatpush1.msra.mxu0 %v67
  %206 = vmatprep.subr.mxu0 0.0
  %207 = vmatpush1.msra.mxu0 %v68
  %208 = vmatprep.subr.mxu0 0.0
  %209 = vmatpush1.msra.mxu0 %v69
  %210 = vmatprep.subr.mxu0 0.0
  %211 = vmatpush1.msra.mxu0 %v70
  %212 = vmatprep.subr.mxu0 0.0
  %213 = vmatpush1.msra.mxu0 %v71
  %214 = vmatprep.subr.mxu0 0.0
  %215 = vmatpush1.msra.mxu0 %v72
  %216 = vmatprep.subr.mxu0 0.0
  %217 = vmatpush1.msra.mxu0 %v73
  %218 = vmatprep.subr.mxu0 0.0
  %219 = vmatpush1.msra.mxu0 %v74
  %220 = vmatprep.subr.mxu0 0.0
  %221 = vmatpush1.msra.mxu0 %v75
  %222 = vmatprep.subr.mxu0 0.0
  %223 = vmatpush1.msra.mxu0 %v76
  %224 = vmatprep.subr.mxu0 0.0
  %225 = vmatpush1.msra.mxu0 %v77
  %226 = vmatprep.subr.mxu0 0.0
  %227 = vmatpush1.msra.mxu0 %v78
  %228 = vmatprep.subr.mxu0 0.0
  %229 = vmatpush1.msra.mxu0 %v79
  %230 = vmatprep.subr.mxu0 0.0
  %231 = vmatpush1.msra.mxu0 %v80
  %232 = vmatprep.subr.mxu0 0.0
  %233 = vmatpush1.msra.mxu0 %v81
  %234 = vmatprep.subr.mxu0 0.0
  %235 = vmatpush1.msra.mxu0 %v82
  %236 = vmatprep.mubr.f32.mxu0 %v17
  %237 = vmatmul.mubr.f32.gmra.mrb[0].mxu0 %v16
  %v238 = vpop.f32.mrb[0].mxu0
  %v239 = vadd.f32 %v169, %v238
  %v240 = vpop.f32.mrb[0].mxu0
  %241 = vdwg.mxu0
  %242 = vmatprep.subr.mxu0 0.0
  %243 = vmatpush1.msra.mxu0 %v83
  %244 = vmatprep.subr.mxu0 0.0
  %245 = vmatpush1.msra.mxu0 %v84
  %246 = vmatprep.subr.mxu0 0.0
  %247 = vmatpush1.msra.mxu0 %v85
  %248 = vmatprep.subr.mxu0 0.0
  %249 = vmatpush1.msra.mxu0 %v86
  %250 = vmatprep.subr.mxu0 0.0
  %251 = vmatpush1.msra.mxu0 %v87
  %252 = vmatprep.subr.mxu0 0.0
  %253 = vmatpush1.msra.mxu0 %v88
  %254 = vmatprep.subr.mxu0 0.0
  %255 = vmatpush1.msra.mxu0 %v89
  %256 = vmatprep.subr.mxu0 0.0
  %257 = vmatpush1.msra.mxu0 %v90
  %258 = vmatprep.subr.mxu0 0.0
  %259 = vmatpush1.msra.mxu0 0.0
  %260 = vmatprep.subr.mxu0 0.0
  %261 = vmatpush1.msra.mxu0 0.0
  %262 = vmatprep.subr.mxu0 0.0
  %263 = vmatpush1.msra.mxu0 0.0
  %264 = vmatprep.subr.mxu0 0.0
  %265 = vmatpush1.msra.mxu0 0.0
  %266 = vmatprep.subr.mxu0 0.0
  %267 = vmatpush1.msra.mxu0 0.0
  %268 = vmatprep.subr.mxu0 0.0
  %269 = vmatpush1.msra.mxu0 0.0
  %270 = vmatprep.subr.mxu0 0.0
  %271 = vmatpush1.msra.mxu0 0.0
  %272 = vmatprep.subr.mxu0 0.0
  %273 = vmatpush1.msra.mxu0 0.0
  %274 = vmatprep.subr.mxu0 0.0
  %275 = vmatpush1.msra.mxu0 0.0
  %276 = vmatprep.subr.mxu0 0.0
  %277 = vmatpush1.msra.mxu0 0.0
  %278 = vmatprep.subr.mxu0 0.0
  %279 = vmatpush1.msra.mxu0 0.0
  %280 = vmatprep.subr.mxu0 0.0
  %281 = vmatpush1.msra.mxu0 0.0
  %282 = vmatprep.subr.mxu0 0.0
  %283 = vmatpush1.msra.mxu0 0.0
  %284 = vmatprep.subr.mxu0 0.0
  %285 = vmatpush1.msra.mxu0 0.0
  %286 = vmatprep.subr.mxu0 0.0
  %287 = vmatpush1.msra.mxu0 0.0
  %288 = vmatprep.subr.mxu0 0.0
  %289 = vmatpush1.msra.mxu0 0.0
  %290 = vmatprep.subr.mxu0 0.0
  %291 = vmatpush1.msra.mxu0 0.0
  %292 = vmatprep.subr.mxu0 0.0
  %293 = vmatpush1.msra.mxu0 0.0
  %294 = vmatprep.subr.mxu0 0.0
  %295 = vmatpush1.msra.mxu0 0.0
  %296 = vmatprep.subr.mxu0 0.0
  %297 = vmatpush1.msra.mxu0 0.0
  %298 = vmatprep.subr.mxu0 0.0
  %299 = vmatpush1.msra.mxu0 0.0
  %300 = vmatprep.subr.mxu0 0.0
  %301 = vmatpush1.msra.mxu0 0.0
  %302 = vmatprep.subr.mxu0 0.0
  %303 = vmatpush1.msra.mxu0 0.0
  %304 = vmatprep.subr.mxu0 0.0
  %305 = vmatpush1.msra.mxu0 0.0
  %306 = vmatprep.mubr.f32.mxu0 0.0
  %307 = vmatmul.mubr.f32.gmra.mrb[0].mxu0 %v100
  %v308 = vpop.f32.mrb[0].mxu0
  %v309 = vadd.f32 %v239, %v308
  %v310 = vpop.f32.mrb[0].mxu0
  %311 = vdwg.mxu0
  %312 = vst.msk [vmem:[%s3] sm:$0xff] %vm98, %v309
  // Predicated region
  $region14: #{tf_conv_block.14} parent=0 // pred_check
    _
  $region15: #{tf_conv_block.14} parent=0 // pred_check_branch
    %314 = sbr.rel (0) target = $region17
  $region16: #{tf_conv_block.14} parent=0 // pred_region
    _
  $region17: #{tf_conv_block.14} parent=0 // pred_fallthru
    _
  // Predicated region
  $region18: #{tf_conv_block.14} parent=0 // pred_check
    _
  $region19: #{tf_conv_block.14} parent=0 // pred_check_branch
    %316 = sbr.rel (0) target = $region21
  $region20: #{tf_conv_block.14} parent=0 // pred_region
    _
  $region21: #{tf_conv_block.14} parent=0 // pred_fallthru
    _

// kernel: tf_conv_block.15
$region0: #{tf_conv_block.15}
  #allocation0 [shape = 'u32[]', space=smem, size = 0x4, offset = 0x4, fixed_abs, tag = 'smem constant byte address 0x4 - core index']
  #allocation1 [shape = 'u32[144,128]{1,0:T(1,128)}', space=vmem, size = 0x12000, scoped, tag = 'internal scratch']
  %s0 = inlined_call_operand.vmem [shape: f32[8,576], index: 0, kind: input, shape index: {}]
  %s1 = inlined_call_operand.vmem [shape: f32[576,64], index: 1, kind: input, shape index: {}]
  %s2 = inlined_call_operand.vmem [shape: f32[1,64], index: 2, kind: input, shape index: {}]
  %s3 = inlined_call_operand.vmem [shape: f32[8,64], index: 3, kind: output, shape index: {}]
  %s4 = sld [smem:[#allocation0]]
  $region22: #{tf_conv_block.15} parent=0
    _
  %s6 = ssub.s32 1, %s4
  %s7 = scalar_select 0, %s6, %s4
  // Predicated region
  $region2: #{tf_conv_block.15} parent=0 // pred_check
    _
  $region3: #{tf_conv_block.15} parent=0 // pred_check_branch
    %9 = sbr.rel (0) target = $region5
  $region4: #{tf_conv_block.15} parent=0 // pred_region
    _
  $region5: #{tf_conv_block.15} parent=0 // pred_fallthru
    _
  // Predicated region
  $region6: #{tf_conv_block.15} parent=0 // pred_check
    _
  $region7: #{tf_conv_block.15} parent=0 // pred_check_branch
    %11 = sbr.rel (0) target = $region9
  $region8: #{tf_conv_block.15} parent=0 // pred_region
    _
  $region9: #{tf_conv_block.15} parent=0 // pred_fallthru
    _
  // Predicated region
  $region10: #{tf_conv_block.15} parent=0 // pred_check
    _
  $region11: #{tf_conv_block.15} parent=0 // pred_check_branch
    %13 = sbr.rel (0) target = $region13
  $region12: #{tf_conv_block.15} parent=0 // pred_region
    _
  $region13: #{tf_conv_block.15} parent=0 // pred_fallthru
    _
  %v14 = vld [vmem:[%s0] sm:$0xff]
  %v15 = vld [vmem:[%s0 + $0x8] sm:$0xff]
  %v16 = vld [vmem:[%s0 + $0x10] sm:$0xff]
  %v17 = vld [vmem:[%s0 + $0x18] sm:$0xff]
  %v18 = vld [vmem:[%s0 + $0x20] sm:$0xff]
  %v19 = vld [vmem:[%s1] sm:$0xff]
  %v20 = vld [vmem:[%s1 + $0x8] sm:$0xff]
  %v21 = vld [vmem:[%s1 + $0x10] sm:$0xff]
  %v22 = vld [vmem:[%s1 + $0x18] sm:$0xff]
  %v23 = vld [vmem:[%s1 + $0x20] sm:$0xff]
  %v24 = vld [vmem:[%s1 + $0x28] sm:$0xff]
  %v25 = vld [vmem:[%s1 + $0x30] sm:$0xff]
  %v26 = vld [vmem:[%s1 + $0x38] sm:$0xff]
  %v27 = vld [vmem:[%s1 + $0x40] sm:$0xff]
  %v28 = vld [vmem:[%s1 + $0x48] sm:$0xff]
  %v29 = vld [vmem:[%s1 + $0x50] sm:$0xff]
  %v30 = vld [vmem:[%s1 + $0x58] sm:$0xff]
  %v31 = vld [vmem:[%s1 + $0x60] sm:$0xff]
  %v32 = vld [vmem:[%s1 + $0x68] sm:$0xff]
  %v33 = vld [vmem:[%s1 + $0x70] sm:$0xff]
  %v34 = vld [vmem:[%s1 + $0x78] sm:$0xff]
  %v35 = vld [vmem:[%s1 + $0x80] sm:$0xff]
  %v36 = vld [vmem:[%s1 + $0x88] sm:$0xff]
  %v37 = vld [vmem:[%s1 + $0x90] sm:$0xff]
  %v38 = vld [vmem:[%s1 + $0x98] sm:$0xff]
  %v39 = vld [vmem:[%s1 + $0xa0] sm:$0xff]
  %v40 = vld [vmem:[%s1 + $0xa8] sm:$0xff]
  %v41 = vld [vmem:[%s1 + $0xb0] sm:$0xff]
  %v42 = vld [vmem:[%s1 + $0xb8] sm:$0xff]
  %v43 = vld [vmem:[%s1 + $0xc0] sm:$0xff]
  %v44 = vld [vmem:[%s1 + $0xc8] sm:$0xff]
  %v45 = vld [vmem:[%s1 + $0xd0] sm:$0xff]
  %v46 = vld [vmem:[%s1 + $0xd8] sm:$0xff]
  %v47 = vld [vmem:[%s1 + $0xe0] sm:$0xff]
  %v48 = vld [vmem:[%s1 + $0xe8] sm:$0xff]
  %v49 = vld [vmem:[%s1 + $0xf0] sm:$0xff]
  %v50 = vld [vmem:[%s1 + $0xf8] sm:$0xff]
  %v51 = vld [vmem:[%s1 + $0x100] sm:$0xff]
  %v52 = vld [vmem:[%s1 + $0x108] sm:$0xff]
  %v53 = vld [vmem:[%s1 + $0x110] sm:$0xff]
  %v54 = vld [vmem:[%s1 + $0x118] sm:$0xff]
  %v55 = vld [vmem:[%s1 + $0x120] sm:$0xff]
  %v56 = vld [vmem:[%s1 + $0x128] sm:$0xff]
  %v57 = vld [vmem:[%s1 + $0x130] sm:$0xff]
  %v58 = vld [vmem:[%s1 + $0x138] sm:$0xff]
  %v59 = vld [vmem:[%s1 + $0x140] sm:$0xff]
  %v60 = vld [vmem:[%s1 + $0x148] sm:$0xff]
  %v61 = vld [vmem:[%s1 + $0x150] sm:$0xff]
  %v62 = vld [vmem:[%s1 + $0x158] sm:$0xff]
  %v63 = vld [vmem:[%s1 + $0x160] sm:$0xff]
  %v64 = vld [vmem:[%s1 + $0x168] sm:$0xff]
  %v65 = vld [vmem:[%s1 + $0x170] sm:$0xff]
  %v66 = vld [vmem:[%s1 + $0x178] sm:$0xff]
  %v67 = vld [vmem:[%s1 + $0x180] sm:$0xff]
  %v68 = vld [vmem:[%s1 + $0x188] sm:$0xff]
  %v69 = vld [vmem:[%s1 + $0x190] sm:$0xff]
  %v70 = vld [vmem:[%s1 + $0x198] sm:$0xff]
  %v71 = vld [vmem:[%s1 + $0x1a0] sm:$0xff]
  %v72 = vld [vmem:[%s1 + $0x1a8] sm:$0xff]
  %v73 = vld [vmem:[%s1 + $0x1b0] sm:$0xff]
  %v74 = vld [vmem:[%s1 + $0x1b8] sm:$0xff]
  %v75 = vld [vmem:[%s1 + $0x1c0] sm:$0xff]
  %v76 = vld [vmem:[%s1 + $0x1c8] sm:$0xff]
  %v77 = vld [vmem:[%s1 + $0x1d0] sm:$0xff]
  %v78 = vld [vmem:[%s1 + $0x1d8] sm:$0xff]
  %v79 = vld [vmem:[%s1 + $0x1e0] sm:$0xff]
  %v80 = vld [vmem:[%s1 + $0x1e8] sm:$0xff]
  %v81 = vld [vmem:[%s1 + $0x1f0] sm:$0xff]
  %v82 = vld [vmem:[%s1 + $0x1f8] sm:$0xff]
  %v83 = vld [vmem:[%s1 + $0x200] sm:$0xff]
  %v84 = vld [vmem:[%s1 + $0x208] sm:$0xff]
  %v85 = vld [vmem:[%s1 + $0x210] sm:$0xff]
  %v86 = vld [vmem:[%s1 + $0x218] sm:$0xff]
  %v87 = vld [vmem:[%s1 + $0x220] sm:$0xff]
  %v88 = vld [vmem:[%s1 + $0x228] sm:$0xff]
  %v89 = vld [vmem:[%s1 + $0x230] sm:$0xff]
  %v90 = vld [vmem:[%s1 + $0x238] sm:$0xff]
  %v91 = vld [vmem:[%s2] sm:$0x1]
  %v93 = vlaneseq
  %v94 = vshrl.u32 %v93, 7
  %v95 = vsub.s32 0, %v94
  %v96 = vrot.slane %v91, %v95
  %vm98 = vcmask 523264
  %v100 = vsel %vm98, %v18, 0
  %102 = vmatprep.subr.mxu0 0.0
  %103 = vmatpush1.msra.mxu0 %v19
  %104 = vmatprep.subr.mxu0 0.0
  %105 = vmatpush1.msra.mxu0 %v20
  %106 = vmatprep.subr.mxu0 0.0
  %107 = vmatpush1.msra.mxu0 %v21
  %108 = vmatprep.subr.mxu0 0.0
  %109 = vmatpush1.msra.mxu0 %v22
  %110 = vmatprep.subr.mxu0 0.0
  %111 = vmatpush1.msra.mxu0 %v23
  %112 = vmatprep.subr.mxu0 0.0
  %113 = vmatpush1.msra.mxu0 %v24
  %114 = vmatprep.subr.mxu0 0.0
  %115 = vmatpush1.msra.mxu0 %v25
  %116 = vmatprep.subr.mxu0 0.0
  %117 = vmatpush1.msra.mxu0 %v26
  %118 = vmatprep.subr.mxu0 0.0
  %119 = vmatpush1.msra.mxu0 %v27
  %120 = vmatprep.subr.mxu0 0.0
  %121 = vmatpush1.msra.mxu0 %v28
  %122 = vmatprep.subr.mxu0 0.0
  %123 = vmatpush1.msra.mxu0 %v29
  %124 = vmatprep.subr.mxu0 0.0
  %125 = vmatpush1.msra.mxu0 %v30
  %126 = vmatprep.subr.mxu0 0.0
  %127 = vmatpush1.msra.mxu0 %v31
  %128 = vmatprep.subr.mxu0 0.0
  %129 = vmatpush1.msra.mxu0 %v32
  %130 = vmatprep.subr.mxu0 0.0
  %131 = vmatpush1.msra.mxu0 %v33
  %132 = vmatprep.subr.mxu0 0.0
  %133 = vmatpush1.msra.mxu0 %v34
  %134 = vmatprep.subr.mxu0 0.0
  %135 = vmatpush1.msra.mxu0 %v35
  %136 = vmatprep.subr.mxu0 0.0
  %137 = vmatpush1.msra.mxu0 %v36
  %138 = vmatprep.subr.mxu0 0.0
  %139 = vmatpush1.msra.mxu0 %v37
  %140 = vmatprep.subr.mxu0 0.0
  %141 = vmatpush1.msra.mxu0 %v38
  %142 = vmatprep.subr.mxu0 0.0
  %143 = vmatpush1.msra.mxu0 %v39
  %144 = vmatprep.subr.mxu0 0.0
  %145 = vmatpush1.msra.mxu0 %v40
  %146 = vmatprep.subr.mxu0 0.0
  %147 = vmatpush1.msra.mxu0 %v41
  %148 = vmatprep.subr.mxu0 0.0
  %149 = vmatpush1.msra.mxu0 %v42
  %150 = vmatprep.subr.mxu0 0.0
  %151 = vmatpush1.msra.mxu0 %v43
  %152 = vmatprep.subr.mxu0 0.0
  %153 = vmatpush1.msra.mxu0 %v44
  %154 = vmatprep.subr.mxu0 0.0
  %155 = vmatpush1.msra.mxu0 %v45
  %156 = vmatprep.subr.mxu0 0.0
  %157 = vmatpush1.msra.mxu0 %v46
  %158 = vmatprep.subr.mxu0 0.0
  %159 = vmatpush1.msra.mxu0 %v47
  %160 = vmatprep.subr.mxu0 0.0
  %161 = vmatpush1.msra.mxu0 %v48
  %162 = vmatprep.subr.mxu0 0.0
  %163 = vmatpush1.msra.mxu0 %v49
  %164 = vmatprep.subr.mxu0 0.0
  %165 = vmatpush1.msra.mxu0 %v50
  %166 = vmatprep.mubr.f32.mxu0 %v15
  %167 = vmatmul.mubr.f32.gmra.mrb[0].mxu0 %v14
  %v168 = vpop.f32.mrb[0].mxu0
  %v169 = vadd.f32 %v96, %v168
  %v170 = vpop.f32.mrb[0].mxu0
  %171 = vdwg.mxu0
  %172 = vmatprep.subr.mxu0 0.0
  %173 = vmatpush1.msra.mxu0 %v51
  %174 = vmatprep.subr.mxu0 0.0
  %175 = vmatpush1.msra.mxu0 %v52
  %176 = vmatprep.subr.mxu0 0.0
  %177 = vmatpush1.msra.mxu0 %v53
  %178 = vmatprep.subr.mxu0 0.0
  %179 = vmatpush1.msra.mxu0 %v54
  %180 = vmatprep.subr.mxu0 0.0
  %181 = vmatpush1.msra.mxu0 %v55
  %182 = vmatprep.subr.mxu0 0.0
  %183 = vmatpush1.msra.mxu0 %v56
  %184 = vmatprep.subr.mxu0 0.0
  %185 = vmatpush1.msra.mxu0 %v57
  %186 = vmatprep.subr.mxu0 0.0
  %187 = vmatpush1.msra.mxu0 %v58
  %188 = vmatprep.subr.mxu0 0.0
  %189 = vmatpush1.msra.mxu0 %v59
  %190 = vmatprep.subr.mxu0 0.0
  %191 = vmatpush1.msra.mxu0 %v60
  %192 = vmatprep.subr.mxu0 0.0
  %193 = vmatpush1.msra.mxu0 %v61
  %194 = vmatprep.subr.mxu0 0.0
  %195 = vmatpush1.msra.mxu0 %v62
  %196 = vmatprep.subr.mxu0 0.0
  %197 = vmatpush1.msra.mxu0 %v63
  %198 = vmatprep.subr.mxu0 0.0
  %199 = vmatpush1.msra.mxu0 %v64
  %200 = vmatprep.subr.mxu0 0.0
  %201 = vmatpush1.msra.mxu0 %v65
  %202 = vmatprep.subr.mxu0 0.0
  %203 = vmatpush1.msra.mxu0 %v66
  %204 = vmatprep.subr.mxu0 0.0
  %205 = vmatpush1.msra.mxu0 %v67
  %206 = vmatprep.subr.mxu0 0.0
  %207 = vmatpush1.msra.mxu0 %v68
  %208 = vmatprep.subr.mxu0 0.0
  %209 = vmatpush1.msra.mxu0 %v69
  %210 = vmatprep.subr.mxu0 0.0
  %211 = vmatpush1.msra.mxu0 %v70
  %212 = vmatprep.subr.mxu0 0.0
  %213 = vmatpush1.msra.mxu0 %v71
  %214 = vmatprep.subr.mxu0 0.0
  %215 = vmatpush1.msra.mxu0 %v72
  %216 = vmatprep.subr.mxu0 0.0
  %217 = vmatpush1.msra.mxu0 %v73
  %218 = vmatprep.subr.mxu0 0.0
  %219 = vmatpush1.msra.mxu0 %v74
  %220 = vmatprep.subr.mxu0 0.0
  %221 = vmatpush1.msra.mxu0 %v75
  %222 = vmatprep.subr.mxu0 0.0
  %223 = vmatpush1.msra.mxu0 %v76
  %224 = vmatprep.subr.mxu0 0.0
  %225 = vmatpush1.msra.mxu0 %v77
  %226 = vmatprep.subr.mxu0 0.0
  %227 = vmatpush1.msra.mxu0 %v78
  %228 = vmatprep.subr.mxu0 0.0
  %229 = vmatpush1.msra.mxu0 %v79
  %230 = vmatprep.subr.mxu0 0.0
  %231 = vmatpush1.msra.mxu0 %v80
  %232 = vmatprep.subr.mxu0 0.0
  %233 = vmatpush1.msra.mxu0 %v81
  %234 = vmatprep.subr.mxu0 0.0
  %235 = vmatpush1.msra.mxu0 %v82
  %236 = vmatprep.mubr.f32.mxu0 %v17
  %237 = vmatmul.mubr.f32.gmra.mrb[0].mxu0 %v16
  %v238 = vpop.f32.mrb[0].mxu0
  %v239 = vadd.f32 %v169, %v238
  %v240 = vpop.f32.mrb[0].mxu0
  %241 = vdwg.mxu0
  %242 = vmatprep.subr.mxu0 0.0
  %243 = vmatpush1.msra.mxu0 %v83
  %244 = vmatprep.subr.mxu0 0.0
  %245 = vmatpush1.msra.mxu0 %v84
  %246 = vmatprep.subr.mxu0 0.0
  %247 = vmatpush1.msra.mxu0 %v85
  %248 = vmatprep.subr.mxu0 0.0
  %249 = vmatpush1.msra.mxu0 %v86
  %250 = vmatprep.subr.mxu0 0.0
  %251 = vmatpush1.msra.mxu0 %v87
  %252 = vmatprep.subr.mxu0 0.0
  %253 = vmatpush1.msra.mxu0 %v88
  %254 = vmatprep.subr.mxu0 0.0
  %255 = vmatpush1.msra.mxu0 %v89
  %256 = vmatprep.subr.mxu0 0.0
  %257 = vmatpush1.msra.mxu0 %v90
  %258 = vmatprep.subr.mxu0 0.0
  %259 = vmatpush1.msra.mxu0 0.0
  %260 = vmatprep.subr.mxu0 0.0
  %261 = vmatpush1.msra.mxu0 0.0
  %262 = vmatprep.subr.mxu0 0.0
  %263 = vmatpush1.msra.mxu0 0.0
  %264 = vmatprep.subr.mxu0 0.0
  %265 = vmatpush1.msra.mxu0 0.0
  %266 = vmatprep.subr.mxu0 0.0
  %267 = vmatpush1.msra.mxu0 0.0
  %268 = vmatprep.subr.mxu0 0.0
  %269 = vmatpush1.msra.mxu0 0.0
  %270 = vmatprep.subr.mxu0 0.0
  %271 = vmatpush1.msra.mxu0 0.0
  %272 = vmatprep.subr.mxu0 0.0
  %273 = vmatpush1.msra.mxu0 0.0
  %274 = vmatprep.subr.mxu0 0.0
  %275 = vmatpush1.msra.mxu0 0.0
  %276 = vmatprep.subr.mxu0 0.0
  %277 = vmatpush1.msra.mxu0 0.0
  %278 = vmatprep.subr.mxu0 0.0
  %279 = vmatpush1.msra.mxu0 0.0
  %280 = vmatprep.subr.mxu0 0.0
  %281 = vmatpush1.msra.mxu0 0.0
  %282 = vmatprep.subr.mxu0 0.0
  %283 = vmatpush1.msra.mxu0 0.0
  %284 = vmatprep.subr.mxu0 0.0
  %285 = vmatpush1.msra.mxu0 0.0
  %286 = vmatprep.subr.mxu0 0.0
  %287 = vmatpush1.msra.mxu0 0.0
  %288 = vmatprep.subr.mxu0 0.0
  %289 = vmatpush1.msra.mxu0 0.0
  %290 = vmatprep.subr.mxu0 0.0
  %291 = vmatpush1.msra.mxu0 0.0
  %292 = vmatprep.subr.mxu0 0.0
  %293 = vmatpush1.msra.mxu0 0.0
  %294 = vmatprep.subr.mxu0 0.0
  %295 = vmatpush1.msra.mxu0 0.0
  %296 = vmatprep.subr.mxu0 0.0
  %297 = vmatpush1.msra.mxu0 0.0
  %298 = vmatprep.subr.mxu0 0.0
  %299 = vmatpush1.msra.mxu0 0.0
  %300 = vmatprep.subr.mxu0 0.0
  %301 = vmatpush1.msra.mxu0 0.0
  %302 = vmatprep.subr.mxu0 0.0
  %303 = vmatpush1.msra.mxu0 0.0
  %304 = vmatprep.subr.mxu0 0.0
  %305 = vmatpush1.msra.mxu0 0.0
  %306 = vmatprep.mubr.f32.mxu0 0.0
  %307 = vmatmul.mubr.f32.gmra.mrb[0].mxu0 %v100
  %v308 = vpop.f32.mrb[0].mxu0
  %v309 = vadd.f32 %v239, %v308
  %v310 = vpop.f32.mrb[0].mxu0
  %311 = vdwg.mxu0
  %v312 = vmax.f32 %v309, 0.0
  %313 = vst.msk [vmem:[%s3] sm:$0xff] %vm98, %v312
  // Predicated region
  $region14: #{tf_conv_block.15} parent=0 // pred_check
    _
  $region15: #{tf_conv_block.15} parent=0 // pred_check_branch
    %315 = sbr.rel (0) target = $region17
  $region16: #{tf_conv_block.15} parent=0 // pred_region
    _
  $region17: #{tf_conv_block.15} parent=0 // pred_fallthru
    _
  // Predicated region
  $region18: #{tf_conv_block.15} parent=0 // pred_check
    _
  $region19: #{tf_conv_block.15} parent=0 // pred_check_branch
    %317 = sbr.rel (0) target = $region21
  $region20: #{tf_conv_block.15} parent=0 // pred_region
    _
  $region21: #{tf_conv_block.15} parent=0 // pred_fallthru
    _

// kernel: tf_conv_block.16
$region0: #{tf_conv_block.16}
  #allocation0 [shape = 'u32[]', space=smem, size = 0x4, offset = 0x4, fixed_abs, tag = 'smem constant byte address 0x4 - core index']
  #allocation1 [shape = 'u32[144,128]{1,0:T(1,128)}', space=vmem, size = 0x12000, scoped, tag = 'internal scratch']
  %s0 = inlined_call_operand.vmem [shape: f32[8,64], index: 0, kind: input, shape index: {}]
  %s1 = inlined_call_operand.vmem [shape: f32[64,64], index: 1, kind: input, shape index: {}]
  %s2 = inlined_call_operand.vmem [shape: f32[1,64], index: 2, kind: input, shape index: {}]
  %s3 = inlined_call_operand.vmem [shape: f32[8,64], index: 3, kind: output, shape index: {}]
  %s4 = sld [smem:[#allocation0]]
  $region22: #{tf_conv_block.16} parent=0
    _
  %s6 = ssub.s32 1, %s4
  %s7 = scalar_select 0, %s6, %s4
  // Predicated region
  $region2: #{tf_conv_block.16} parent=0 // pred_check
    _
  $region3: #{tf_conv_block.16} parent=0 // pred_check_branch
    %9 = sbr.rel (0) target = $region5
  $region4: #{tf_conv_block.16} parent=0 // pred_region
    _
  $region5: #{tf_conv_block.16} parent=0 // pred_fallthru
    _
  // Predicated region
  $region6: #{tf_conv_block.16} parent=0 // pred_check
    _
  $region7: #{tf_conv_block.16} parent=0 // pred_check_branch
    %11 = sbr.rel (0) target = $region9
  $region8: #{tf_conv_block.16} parent=0 // pred_region
    _
  $region9: #{tf_conv_block.16} parent=0 // pred_fallthru
    _
  // Predicated region
  $region10: #{tf_conv_block.16} parent=0 // pred_check
    _
  $region11: #{tf_conv_block.16} parent=0 // pred_check_branch
    %13 = sbr.rel (0) target = $region13
  $region12: #{tf_conv_block.16} parent=0 // pred_region
    _
  $region13: #{tf_conv_block.16} parent=0 // pred_fallthru
    _
  %v14 = vld [vmem:[%s0] sm:$0xff]
  %v15 = vld [vmem:[%s1] sm:$0xff]
  %v16 = vld [vmem:[%s1 + $0x8] sm:$0xff]
  %v17 = vld [vmem:[%s1 + $0x10] sm:$0xff]
  %v18 = vld [vmem:[%s1 + $0x18] sm:$0xff]
  %v19 = vld [vmem:[%s1 + $0x20] sm:$0xff]
  %v20 = vld [vmem:[%s1 + $0x28] sm:$0xff]
  %v21 = vld [vmem:[%s1 + $0x30] sm:$0xff]
  %v22 = vld [vmem:[%s1 + $0x38] sm:$0xff]
  %v23 = vld [vmem:[%s2] sm:$0x1]
  %v25 = vlaneseq
  %v26 = vshrl.u32 %v25, 7
  %v27 = vsub.s32 0, %v26
  %v28 = vrot.slane %v23, %v27
  %vm30 = vcmask 523264
  %v32 = vsel %vm30, %v14, 0
  %34 = vmatprep.subr.mxu0 0.0
  %35 = vmatpush1.msra.mxu0 %v15
  %36 = vmatprep.subr.mxu0 0.0
  %37 = vmatpush1.msra.mxu0 %v16
  %38 = vmatprep.subr.mxu0 0.0
  %39 = vmatpush1.msra.mxu0 %v17
  %40 = vmatprep.subr.mxu0 0.0
  %41 = vmatpush1.msra.mxu0 %v18
  %42 = vmatprep.subr.mxu0 0.0
  %43 = vmatpush1.msra.mxu0 %v19
  %44 = vmatprep.subr.mxu0 0.0
  %45 = vmatpush1.msra.mxu0 %v20
  %46 = vmatprep.subr.mxu0 0.0
  %47 = vmatpush1.msra.mxu0 %v21
  %48 = vmatprep.subr.mxu0 0.0
  %49 = vmatpush1.msra.mxu0 %v22
  %50 = vmatprep.subr.mxu0 0.0
  %51 = vmatpush1.msra.mxu0 0.0
  %52 = vmatprep.subr.mxu0 0.0
  %53 = vmatpush1.msra.mxu0 0.0
  %54 = vmatprep.subr.mxu0 0.0
  %55 = vmatpush1.msra.mxu0 0.0
  %56 = vmatprep.subr.mxu0 0.0
  %57 = vmatpush1.msra.mxu0 0.0
  %58 = vmatprep.subr.mxu0 0.0
  %59 = vmatpush1.msra.mxu0 0.0
  %60 = vmatprep.subr.mxu0 0.0
  %61 = vmatpush1.msra.mxu0 0.0
  %62 = vmatprep.subr.mxu0 0.0
  %63 = vmatpush1.msra.mxu0 0.0
  %64 = vmatprep.subr.mxu0 0.0
  %65 = vmatpush1.msra.mxu0 0.0
  %66 = vmatprep.subr.mxu0 0.0
  %67 = vmatpush1.msra.mxu0 0.0
  %68 = vmatprep.subr.mxu0 0.0
  %69 = vmatpush1.msra.mxu0 0.0
  %70 = vmatprep.subr.mxu0 0.0
  %71 = vmatpush1.msra.mxu0 0.0
  %72 = vmatprep.subr.mxu0 0.0
  %73 = vmatpush1.msra.mxu0 0.0
  %74 = vmatprep.subr.mxu0 0.0
  %75 = vmatpush1.msra.mxu0 0.0
  %76 = vmatprep.subr.mxu0 0.0
  %77 = vmatpush1.msra.mxu0 0.0
  %78 = vmatprep.subr.mxu0 0.0
  %79 = vmatpush1.msra.mxu0 0.0
  %80 = vmatprep.subr.mxu0 0.0
  %81 = vmatpush1.msra.mxu0 0.0
  %82 = vmatprep.subr.mxu0 0.0
  %83 = vmatpush1.msra.mxu0 0.0
  %84 = vmatprep.subr.mxu0 0.0
  %85 = vmatpush1.msra.mxu0 0.0
  %86 = vmatprep.subr.mxu0 0.0
  %87 = vmatpush1.msra.mxu0 0.0
  %88 = vmatprep.subr.mxu0 0.0
  %89 = vmatpush1.msra.mxu0 0.0
  %90 = vmatprep.subr.mxu0 0.0
  %91 = vmatpush1.msra.mxu0 0.0
  %92 = vmatprep.subr.mxu0 0.0
  %93 = vmatpush1.msra.mxu0 0.0
  %94 = vmatprep.subr.mxu0 0.0
  %95 = vmatpush1.msra.mxu0 0.0
  %96 = vmatprep.subr.mxu0 0.0
  %97 = vmatpush1.msra.mxu0 0.0
  %98 = vmatprep.mubr.f32.mxu0 0.0
  %99 = vmatmul.mubr.f32.gmra.mrb[0].mxu0 %v32
  %v100 = vpop.f32.mrb[0].mxu0
  %v101 = vadd.f32 %v28, %v100
  %v102 = vpop.f32.mrb[0].mxu0
  %103 = vdwg.mxu0
  %104 = vst.msk [vmem:[%s3] sm:$0xff] %vm30, %v101
  // Predicated region
  $region14: #{tf_conv_block.16} parent=0 // pred_check
    _
  $region15: #{tf_conv_block.16} parent=0 // pred_check_branch
    %106 = sbr.rel (0) target = $region17
  $region16: #{tf_conv_block.16} parent=0 // pred_region
    _
  $region17: #{tf_conv_block.16} parent=0 // pred_fallthru
    _
  // Predicated region
  $region18: #{tf_conv_block.16} parent=0 // pred_check
    _
  $region19: #{tf_conv_block.16} parent=0 // pred_check_branch
    %108 = sbr.rel (0) target = $region21
  $region20: #{tf_conv_block.16} parent=0 // pred_region
    _
  $region21: #{tf_conv_block.16} parent=0 // pred_fallthru
    _

// kernel: tf_conv_block.17
$region0: #{tf_conv_block.17}
  #allocation0 [shape = 'u32[]', space=smem, size = 0x4, offset = 0x4, fixed_abs, tag = 'smem constant byte address 0x4 - core index']
  #allocation1 [shape = 'u32[144,128]{1,0:T(1,128)}', space=vmem, size = 0x12000, scoped, tag = 'internal scratch']
  %s0 = inlined_call_operand.vmem [shape: f32[8,144], index: 0, kind: input, shape index: {}]
  %s1 = inlined_call_operand.vmem [shape: f32[144,16], index: 1, kind: input, shape index: {}]
  %s2 = inlined_call_operand.vmem [shape: f32[1,16], index: 2, kind: input, shape index: {}]
  %s3 = inlined_call_operand.vmem [shape: f32[8,16], index: 3, kind: output, shape index: {}]
  %s4 = sld [smem:[#allocation0]]
  $region22: #{tf_conv_block.17} parent=0
    _
  %s6 = ssub.s32 1, %s4
  %s7 = scalar_select 0, %s6, %s4
  // Predicated region
  $region2: #{tf_conv_block.17} parent=0 // pred_check
    _
  $region3: #{tf_conv_block.17} parent=0 // pred_check_branch
    %9 = sbr.rel (0) target = $region5
  $region4: #{tf_conv_block.17} parent=0 // pred_region
    _
  $region5: #{tf_conv_block.17} parent=0 // pred_fallthru
    _
  // Predicated region
  $region6: #{tf_conv_block.17} parent=0 // pred_check
    _
  $region7: #{tf_conv_block.17} parent=0 // pred_check_branch
    %11 = sbr.rel (0) target = $region9
  $region8: #{tf_conv_block.17} parent=0 // pred_region
    _
  $region9: #{tf_conv_block.17} parent=0 // pred_fallthru
    _
  // Predicated region
  $region10: #{tf_conv_block.17} parent=0 // pred_check
    _
  $region11: #{tf_conv_block.17} parent=0 // pred_check_branch
    %13 = sbr.rel (0) target = $region13
  $region12: #{tf_conv_block.17} parent=0 // pred_region
    _
  $region13: #{tf_conv_block.17} parent=0 // pred_fallthru
    _
  %v14 = vld [vmem:[%s0] sm:$0xff]
  %v15 = vld [vmem:[%s0 + $0x8] sm:$0xff]
  %v16 = vld [vmem:[%s1] sm:$0xff]
  %v17 = vld [vmem:[%s1 + $0x8] sm:$0xff]
  %v18 = vld [vmem:[%s1 + $0x10] sm:$0xff]
  %v19 = vld [vmem:[%s1 + $0x18] sm:$0xff]
  %v20 = vld [vmem:[%s1 + $0x20] sm:$0xff]
  %v21 = vld [vmem:[%s1 + $0x28] sm:$0xff]
  %v22 = vld [vmem:[%s1 + $0x30] sm:$0xff]
  %v23 = vld [vmem:[%s1 + $0x38] sm:$0xff]
  %v24 = vld [vmem:[%s1 + $0x40] sm:$0xff]
  %v25 = vld [vmem:[%s1 + $0x48] sm:$0xff]
  %v26 = vld [vmem:[%s1 + $0x50] sm:$0xff]
  %v27 = vld [vmem:[%s1 + $0x58] sm:$0xff]
  %v28 = vld [vmem:[%s1 + $0x60] sm:$0xff]
  %v29 = vld [vmem:[%s1 + $0x68] sm:$0xff]
  %v30 = vld [vmem:[%s1 + $0x70] sm:$0xff]
  %v31 = vld [vmem:[%s1 + $0x78] sm:$0xff]
  %v32 = vld [vmem:[%s1 + $0x80] sm:$0xff]
  %v33 = vld [vmem:[%s1 + $0x88] sm:$0xff]
  %v34 = vld [vmem:[%s2] sm:$0x1]
  %v36 = vlaneseq
  %v37 = vshrl.u32 %v36, 7
  %v38 = vsub.s32 0, %v37
  %v39 = vrot.slane %v34, %v38
  %vm41 = vcmask 130048
  %v43 = vsel %vm41, %v15, 0
  %45 = vmatprep.subr.mxu0 0.0
  %46 = vmatpush1.msra.mxu0 %v16
  %47 = vmatprep.subr.mxu0 0.0
  %48 = vmatpush1.msra.mxu0 %v17
  %49 = vmatprep.subr.mxu0 0.0
  %50 = vmatpush1.msra.mxu0 %v18
  %51 = vmatprep.subr.mxu0 0.0
  %52 = vmatpush1.msra.mxu0 %v19
  %53 = vmatprep.subr.mxu0 0.0
  %54 = vmatpush1.msra.mxu0 %v20
  %55 = vmatprep.subr.mxu0 0.0
  %56 = vmatpush1.msra.mxu0 %v21
  %57 = vmatprep.subr.mxu0 0.0
  %58 = vmatpush1.msra.mxu0 %v22
  %59 = vmatprep.subr.mxu0 0.0
  %60 = vmatpush1.msra.mxu0 %v23
  %61 = vmatprep.subr.mxu0 0.0
  %62 = vmatpush1.msra.mxu0 %v24
  %63 = vmatprep.subr.mxu0 0.0
  %64 = vmatpush1.msra.mxu0 %v25
  %65 = vmatprep.subr.mxu0 0.0
  %66 = vmatpush1.msra.mxu0 %v26
  %67 = vmatprep.subr.mxu0 0.0
  %68 = vmatpush1.msra.mxu0 %v27
  %69 = vmatprep.subr.mxu0 0.0
  %70 = vmatpush1.msra.mxu0 %v28
  %71 = vmatprep.subr.mxu0 0.0
  %72 = vmatpush1.msra.mxu0 %v29
  %73 = vmatprep.subr.mxu0 0.0
  %74 = vmatpush1.msra.mxu0 %v30
  %75 = vmatprep.subr.mxu0 0.0
  %76 = vmatpush1.msra.mxu0 %v31
  %77 = vmatprep.subr.mxu0 0.0
  %78 = vmatpush1.msra.mxu0 %v32
  %79 = vmatprep.subr.mxu0 0.0
  %80 = vmatpush1.msra.mxu0 %v33
  %81 = vmatprep.subr.mxu0 0.0
  %82 = vmatpush1.msra.mxu0 0.0
  %83 = vmatprep.subr.mxu0 0.0
  %84 = vmatpush1.msra.mxu0 0.0
  %85 = vmatprep.subr.mxu0 0.0
  %86 = vmatpush1.msra.mxu0 0.0
  %87 = vmatprep.subr.mxu0 0.0
  %88 = vmatpush1.msra.mxu0 0.0
  %89 = vmatprep.subr.mxu0 0.0
  %90 = vmatpush1.msra.mxu0 0.0
  %91 = vmatprep.subr.mxu0 0.0
  %92 = vmatpush1.msra.mxu0 0.0
  %93 = vmatprep.subr.mxu0 0.0
  %94 = vmatpush1.msra.mxu0 0.0
  %95 = vmatprep.subr.mxu0 0.0
  %96 = vmatpush1.msra.mxu0 0.0
  %97 = vmatprep.subr.mxu0 0.0
  %98 = vmatpush1.msra.mxu0 0.0
  %99 = vmatprep.subr.mxu0 0.0
  %100 = vmatpush1.msra.mxu0 0.0
  %101 = vmatprep.subr.mxu0 0.0
  %102 = vmatpush1.msra.mxu0 0.0
  %103 = vmatprep.subr.mxu0 0.0
  %104 = vmatpush1.msra.mxu0 0.0
  %105 = vmatprep.subr.mxu0 0.0
  %106 = vmatpush1.msra.mxu0 0.0
  %107 = vmatprep.subr.mxu0 0.0
  %108 = vmatpush1.msra.mxu0 0.0
  %109 = vmatprep.mubr.f32.mxu0 %v43
  %110 = vmatmul.mubr.f32.gmra.mrb[0].mxu0 %v14
  %v111 = vpop.f32.mrb[0].mxu0
  %v112 = vadd.f32 %v39, %v111
  %v113 = vpop.f32.mrb[0].mxu0
  %114 = vdwg.mxu0
  %115 = vst.msk [vmem:[%s3] sm:$0xff] %vm41, %v112
  // Predicated region
  $region14: #{tf_conv_block.17} parent=0 // pred_check
    _
  $region15: #{tf_conv_block.17} parent=0 // pred_check_branch
    %117 = sbr.rel (0) target = $region17
  $region16: #{tf_conv_block.17} parent=0 // pred_region
    _
  $region17: #{tf_conv_block.17} parent=0 // pred_fallthru
    _
  // Predicated region
  $region18: #{tf_conv_block.17} parent=0 // pred_check
    _
  $region19: #{tf_conv_block.17} parent=0 // pred_check_branch
    %119 = sbr.rel (0) target = $region21
  $region20: #{tf_conv_block.17} parent=0 // pred_region
    _
  $region21: #{tf_conv_block.17} parent=0 // pred_fallthru
    _

// kernel: tf_conv_block.18
$region0: #{tf_conv_block.18}
  #allocation0 [shape = 'u32[]', space=smem, size = 0x4, offset = 0x4, fixed_abs, tag = 'smem constant byte address 0x4 - core index']
  #allocation1 [shape = 'u32[144,128]{1,0:T(1,128)}', space=vmem, size = 0x12000, scoped, tag = 'internal scratch']
  %s0 = inlined_call_operand.vmem [shape: f32[8,400], index: 0, kind: input, shape index: {}]
  %s1 = inlined_call_operand.vmem [shape: f32[400,16], index: 1, kind: input, shape index: {}]
  %s2 = inlined_call_operand.vmem [shape: f32[1,16], index: 2, kind: input, shape index: {}]
  %s3 = inlined_call_operand.vmem [shape: f32[8,16], index: 3, kind: output, shape index: {}]
  %s4 = sld [smem:[#allocation0]]
  $region22: #{tf_conv_block.18} parent=0
    _
  %s6 = ssub.s32 1, %s4
  %s7 = scalar_select 0, %s6, %s4
  // Predicated region
  $region2: #{tf_conv_block.18} parent=0 // pred_check
    _
  $region3: #{tf_conv_block.18} parent=0 // pred_check_branch
    %9 = sbr.rel (0) target = $region5
  $region4: #{tf_conv_block.18} parent=0 // pred_region
    _
  $region5: #{tf_conv_block.18} parent=0 // pred_fallthru
    _
  // Predicated region
  $region6: #{tf_conv_block.18} parent=0 // pred_check
    _
  $region7: #{tf_conv_block.18} parent=0 // pred_check_branch
    %11 = sbr.rel (0) target = $region9
  $region8: #{tf_conv_block.18} parent=0 // pred_region
    _
  $region9: #{tf_conv_block.18} parent=0 // pred_fallthru
    _
  // Predicated region
  $region10: #{tf_conv_block.18} parent=0 // pred_check
    _
  $region11: #{tf_conv_block.18} parent=0 // pred_check_branch
    %13 = sbr.rel (0) target = $region13
  $region12: #{tf_conv_block.18} parent=0 // pred_region
    _
  $region13: #{tf_conv_block.18} parent=0 // pred_fallthru
    _
  %v14 = vld [vmem:[%s0] sm:$0xff]
  %v15 = vld [vmem:[%s0 + $0x8] sm:$0xff]
  %v16 = vld [vmem:[%s0 + $0x10] sm:$0xff]
  %v17 = vld [vmem:[%s0 + $0x18] sm:$0xff]
  %v18 = vld [vmem:[%s1] sm:$0xff]
  %v19 = vld [vmem:[%s1 + $0x8] sm:$0xff]
  %v20 = vld [vmem:[%s1 + $0x10] sm:$0xff]
  %v21 = vld [vmem:[%s1 + $0x18] sm:$0xff]
  %v22 = vld [vmem:[%s1 + $0x20] sm:$0xff]
  %v23 = vld [vmem:[%s1 + $0x28] sm:$0xff]
  %v24 = vld [vmem:[%s1 + $0x30] sm:$0xff]
  %v25 = vld [vmem:[%s1 + $0x38] sm:$0xff]
  %v26 = vld [vmem:[%s1 + $0x40] sm:$0xff]
  %v27 = vld [vmem:[%s1 + $0x48] sm:$0xff]
  %v28 = vld [vmem:[%s1 + $0x50] sm:$0xff]
  %v29 = vld [vmem:[%s1 + $0x58] sm:$0xff]
  %v30 = vld [vmem:[%s1 + $0x60] sm:$0xff]
  %v31 = vld [vmem:[%s1 + $0x68] sm:$0xff]
  %v32 = vld [vmem:[%s1 + $0x70] sm:$0xff]
  %v33 = vld [vmem:[%s1 + $0x78] sm:$0xff]
  %v34 = vld [vmem:[%s1 + $0x80] sm:$0xff]
  %v35 = vld [vmem:[%s1 + $0x88] sm:$0xff]
  %v36 = vld [vmem:[%s1 + $0x90] sm:$0xff]
  %v37 = vld [vmem:[%s1 + $0x98] sm:$0xff]
  %v38 = vld [vmem:[%s1 + $0xa0] sm:$0xff]
  %v39 = vld [vmem:[%s1 + $0xa8] sm:$0xff]
  %v40 = vld [vmem:[%s1 + $0xb0] sm:$0xff]
  %v41 = vld [vmem:[%s1 + $0xb8] sm:$0xff]
  %v42 = vld [vmem:[%s1 + $0xc0] sm:$0xff]
  %v43 = vld [vmem:[%s1 + $0xc8] sm:$0xff]
  %v44 = vld [vmem:[%s1 + $0xd0] sm:$0xff]
  %v45 = vld [vmem:[%s1 + $0xd8] sm:$0xff]
  %v46 = vld [vmem:[%s1 + $0xe0] sm:$0xff]
  %v47 = vld [vmem:[%s1 + $0xe8] sm:$0xff]
  %v48 = vld [vmem:[%s1 + $0xf0] sm:$0xff]
  %v49 = vld [vmem:[%s1 + $0xf8] sm:$0xff]
  %v50 = vld [vmem:[%s1 + $0x100] sm:$0xff]
  %v51 = vld [vmem:[%s1 + $0x108] sm:$0xff]
  %v52 = vld [vmem:[%s1 + $0x110] sm:$0xff]
  %v53 = vld [vmem:[%s1 + $0x118] sm:$0xff]
  %v54 = vld [vmem:[%s1 + $0x120] sm:$0xff]
  %v55 = vld [vmem:[%s1 + $0x128] sm:$0xff]
  %v56 = vld [vmem:[%s1 + $0x130] sm:$0xff]
  %v57 = vld [vmem:[%s1 + $0x138] sm:$0xff]
  %v58 = vld [vmem:[%s1 + $0x140] sm:$0xff]
  %v59 = vld [vmem:[%s1 + $0x148] sm:$0xff]
  %v60 = vld [vmem:[%s1 + $0x150] sm:$0xff]
  %v61 = vld [vmem:[%s1 + $0x158] sm:$0xff]
  %v62 = vld [vmem:[%s1 + $0x160] sm:$0xff]
  %v63 = vld [vmem:[%s1 + $0x168] sm:$0xff]
  %v64 = vld [vmem:[%s1 + $0x170] sm:$0xff]
  %v65 = vld [vmem:[%s1 + $0x178] sm:$0xff]
  %v66 = vld [vmem:[%s1 + $0x180] sm:$0xff]
  %v67 = vld [vmem:[%s1 + $0x188] sm:$0xff]
  %v68 = vld [vmem:[%s2] sm:$0x1]
  %v70 = vlaneseq
  %v71 = vshrl.u32 %v70, 7
  %v72 = vsub.s32 0, %v71
  %v73 = vrot.slane %v68, %v72
  %vm75 = vcmask 130048
  %v77 = vsel %vm75, %v17, 0
  %79 = vmatprep.subr.mxu0 0.0
  %80 = vmatpush1.msra.mxu0 %v18
  %81 = vmatprep.subr.mxu0 0.0
  %82 = vmatpush1.msra.mxu0 %v19
  %83 = vmatprep.subr.mxu0 0.0
  %84 = vmatpush1.msra.mxu0 %v20
  %85 = vmatprep.subr.mxu0 0.0
  %86 = vmatpush1.msra.mxu0 %v21
  %87 = vmatprep.subr.mxu0 0.0
  %88 = vmatpush1.msra.mxu0 %v22
  %89 = vmatprep.subr.mxu0 0.0
  %90 = vmatpush1.msra.mxu0 %v23
  %91 = vmatprep.subr.mxu0 0.0
  %92 = vmatpush1.msra.mxu0 %v24
  %93 = vmatprep.subr.mxu0 0.0
  %94 = vmatpush1.msra.mxu0 %v25
  %95 = vmatprep.subr.mxu0 0.0
  %96 = vmatpush1.msra.mxu0 %v26
  %97 = vmatprep.subr.mxu0 0.0
  %98 = vmatpush1.msra.mxu0 %v27
  %99 = vmatprep.subr.mxu0 0.0
  %100 = vmatpush1.msra.mxu0 %v28
  %101 = vmatprep.subr.mxu0 0.0
  %102 = vmatpush1.msra.mxu0 %v29
  %103 = vmatprep.subr.mxu0 0.0
  %104 = vmatpush1.msra.mxu0 %v30
  %105 = vmatprep.subr.mxu0 0.0
  %106 = vmatpush1.msra.mxu0 %v31
  %107 = vmatprep.subr.mxu0 0.0
  %108 = vmatpush1.msra.mxu0 %v32
  %109 = vmatprep.subr.mxu0 0.0
  %110 = vmatpush1.msra.mxu0 %v33
  %111 = vmatprep.subr.mxu0 0.0
  %112 = vmatpush1.msra.mxu0 %v34
  %113 = vmatprep.subr.mxu0 0.0
  %114 = vmatpush1.msra.mxu0 %v35
  %115 = vmatprep.subr.mxu0 0.0
  %116 = vmatpush1.msra.mxu0 %v36
  %117 = vmatprep.subr.mxu0 0.0
  %118 = vmatpush1.msra.mxu0 %v37
  %119 = vmatprep.subr.mxu0 0.0
  %120 = vmatpush1.msra.mxu0 %v38
  %121 = vmatprep.subr.mxu0 0.0
  %122 = vmatpush1.msra.mxu0 %v39
  %123 = vmatprep.subr.mxu0 0.0
  %124 = vmatpush1.msra.mxu0 %v40
  %125 = vmatprep.subr.mxu0 0.0
  %126 = vmatpush1.msra.mxu0 %v41
  %127 = vmatprep.subr.mxu0 0.0
  %128 = vmatpush1.msra.mxu0 %v42
  %129 = vmatprep.subr.mxu0 0.0
  %130 = vmatpush1.msra.mxu0 %v43
  %131 = vmatprep.subr.mxu0 0.0
  %132 = vmatpush1.msra.mxu0 %v44
  %133 = vmatprep.subr.mxu0 0.0
  %134 = vmatpush1.msra.mxu0 %v45
  %135 = vmatprep.subr.mxu0 0.0
  %136 = vmatpush1.msra.mxu0 %v46
  %137 = vmatprep.subr.mxu0 0.0
  %138 = vmatpush1.msra.mxu0 %v47
  %139 = vmatprep.subr.mxu0 0.0
  %140 = vmatpush1.msra.mxu0 %v48
  %141 = vmatprep.subr.mxu0 0.0
  %142 = vmatpush1.msra.mxu0 %v49
  %143 = vmatprep.mubr.f32.mxu0 %v15
  %144 = vmatmul.mubr.f32.gmra.mrb[0].mxu0 %v14
  %v145 = vpop.f32.mrb[0].mxu0
  %v146 = vadd.f32 %v73, %v145
  %v147 = vpop.f32.mrb[0].mxu0
  %148 = vdwg.mxu0
  %149 = vmatprep.subr.mxu0 0.0
  %150 = vmatpush1.msra.mxu0 %v50
  %151 = vmatprep.subr.mxu0 0.0
  %152 = vmatpush1.msra.mxu0 %v51
  %153 = vmatprep.subr.mxu0 0.0
  %154 = vmatpush1.msra.mxu0 %v52
  %155 = vmatprep.subr.mxu0 0.0
  %156 = vmatpush1.msra.mxu0 %v53
  %157 = vmatprep.subr.mxu0 0.0
  %158 = vmatpush1.msra.mxu0 %v54
  %159 = vmatprep.subr.mxu0 0.0
  %160 = vmatpush1.msra.mxu0 %v55
  %161 = vmatprep.subr.mxu0 0.0
  %162 = vmatpush1.msra.mxu0 %v56
  %163 = vmatprep.subr.mxu0 0.0
  %164 = vmatpush1.msra.mxu0 %v57
  %165 = vmatprep.subr.mxu0 0.0
  %166 = vmatpush1.msra.mxu0 %v58
  %167 = vmatprep.subr.mxu0 0.0
  %168 = vmatpush1.msra.mxu0 %v59
  %169 = vmatprep.subr.mxu0 0.0
  %170 = vmatpush1.msra.mxu0 %v60
  %171 = vmatprep.subr.mxu0 0.0
  %172 = vmatpush1.msra.mxu0 %v61
  %173 = vmatprep.subr.mxu0 0.0
  %174 = vmatpush1.msra.mxu0 %v62
  %175 = vmatprep.subr.mxu0 0.0
  %176 = vmatpush1.msra.mxu0 %v63
  %177 = vmatprep.subr.mxu0 0.0
  %178 = vmatpush1.msra.mxu0 %v64
  %179 = vmatprep.subr.mxu0 0.0
  %180 = vmatpush1.msra.mxu0 %v65
  %181 = vmatprep.subr.mxu0 0.0
  %182 = vmatpush1.msra.mxu0 %v66
  %183 = vmatprep.subr.mxu0 0.0
  %184 = vmatpush1.msra.mxu0 %v67
  %185 = vmatprep.subr.mxu0 0.0
  %186 = vmatpush1.msra.mxu0 0.0
  %187 = vmatprep.subr.mxu0 0.0
  %188 = vmatpush1.msra.mxu0 0.0
  %189 = vmatprep.subr.mxu0 0.0
  %190 = vmatpush1.msra.mxu0 0.0
  %191 = vmatprep.subr.mxu0 0.0
  %192 = vmatpush1.msra.mxu0 0.0
  %193 = vmatprep.subr.mxu0 0.0
  %194 = vmatpush1.msra.mxu0 0.0
  %195 = vmatprep.subr.mxu0 0.0
  %196 = vmatpush1.msra.mxu0 0.0
  %197 = vmatprep.subr.mxu0 0.0
  %198 = vmatpush1.msra.mxu0 0.0
  %199 = vmatprep.subr.mxu0 0.0
  %200 = vmatpush1.msra.mxu0 0.0
  %201 = vmatprep.subr.mxu0 0.0
  %202 = vmatpush1.msra.mxu0 0.0
  %203 = vmatprep.subr.mxu0 0.0
  %204 = vmatpush1.msra.mxu0 0.0
  %205 = vmatprep.subr.mxu0 0.0
  %206 = vmatpush1.msra.mxu0 0.0
  %207 = vmatprep.subr.mxu0 0.0
  %208 = vmatpush1.msra.mxu0 0.0
  %209 = vmatprep.subr.mxu0 0.0
  %210 = vmatpush1.msra.mxu0 0.0
  %211 = vmatprep.subr.mxu0 0.0
  %212 = vmatpush1.msra.mxu0 0.0
  %213 = vmatprep.mubr.f32.mxu0 %v77
  %214 = vmatmul.mubr.f32.gmra.mrb[0].mxu0 %v16
  %v215 = vpop.f32.mrb[0].mxu0
  %v216 = vadd.f32 %v146, %v215
  %v217 = vpop.f32.mrb[0].mxu0
  %218 = vdwg.mxu0
  %219 = vst.msk [vmem:[%s3] sm:$0xff] %vm75, %v216
  // Predicated region
  $region14: #{tf_conv_block.18} parent=0 // pred_check
    _
  $region15: #{tf_conv_block.18} parent=0 // pred_check_branch
    %221 = sbr.rel (0) target = $region17
  $region16: #{tf_conv_block.18} parent=0 // pred_region
    _
  $region17: #{tf_conv_block.18} parent=0 // pred_fallthru
    _
  // Predicated region
  $region18: #{tf_conv_block.18} parent=0 // pred_check
    _
  $region19: #{tf_conv_block.18} parent=0 // pred_check_branch
    %223 = sbr.rel (0) target = $region21
  $region20: #{tf_conv_block.18} parent=0 // pred_region
    _
  $region21: #{tf_conv_block.18} parent=0 // pred_fallthru
    _

// kernel: tf_conv_block.19
$region0: #{tf_conv_block.19}
  #allocation0 [shape = 'u32[]', space=smem, size = 0x4, offset = 0x4, fixed_abs, tag = 'smem constant byte address 0x4 - core index']
  #allocation1 [shape = 'u32[144,128]{1,0:T(1,128)}', space=vmem, size = 0x12000, scoped, tag = 'internal scratch']
  %s0 = inlined_call_operand.vmem [shape: f32[8,784], index: 0, kind: input, shape index: {}]
  %s1 = inlined_call_operand.vmem [shape: f32[784,16], index: 1, kind: input, shape index: {}]
  %s2 = inlined_call_operand.vmem [shape: f32[1,16], index: 2, kind: input, shape index: {}]
  %s3 = inlined_call_operand.vmem [shape: f32[8,16], index: 3, kind: output, shape index: {}]
  %s4 = sld [smem:[#allocation0]]
  $region22: #{tf_conv_block.19} parent=0
    _
  %s6 = ssub.s32 1, %s4
  %s7 = scalar_select 0, %s6, %s4
  // Predicated region
  $region2: #{tf_conv_block.19} parent=0 // pred_check
    _
  $region3: #{tf_conv_block.19} parent=0 // pred_check_branch
    %9 = sbr.rel (0) target = $region5
  $region4: #{tf_conv_block.19} parent=0 // pred_region
    _
  $region5: #{tf_conv_block.19} parent=0 // pred_fallthru
    _
  // Predicated region
  $region6: #{tf_conv_block.19} parent=0 // pred_check
    _
  $region7: #{tf_conv_block.19} parent=0 // pred_check_branch
    %11 = sbr.rel (0) target = $region9
  $region8: #{tf_conv_block.19} parent=0 // pred_region
    _
  $region9: #{tf_conv_block.19} parent=0 // pred_fallthru
    _
  // Predicated region
  $region10: #{tf_conv_block.19} parent=0 // pred_check
    _
  $region11: #{tf_conv_block.19} parent=0 // pred_check_branch
    %13 = sbr.rel (0) target = $region13
  $region12: #{tf_conv_block.19} parent=0 // pred_region
    _
  $region13: #{tf_conv_block.19} parent=0 // pred_fallthru
    _
  %v14 = vld [vmem:[%s0] sm:$0xff]
  %v15 = vld [vmem:[%s0 + $0x8] sm:$0xff]
  %v16 = vld [vmem:[%s0 + $0x10] sm:$0xff]
  %v17 = vld [vmem:[%s0 + $0x18] sm:$0xff]
  %v18 = vld [vmem:[%s0 + $0x20] sm:$0xff]
  %v19 = vld [vmem:[%s0 + $0x28] sm:$0xff]
  %v20 = vld [vmem:[%s0 + $0x30] sm:$0xff]
  %v21 = vld [vmem:[%s1] sm:$0xff]
  %v22 = vld [vmem:[%s1 + $0x8] sm:$0xff]
  %v23 = vld [vmem:[%s1 + $0x10] sm:$0xff]
  %v24 = vld [vmem:[%s1 + $0x18] sm:$0xff]
  %v25 = vld [vmem:[%s1 + $0x20] sm:$0xff]
  %v26 = vld [vmem:[%s1 + $0x28] sm:$0xff]
  %v27 = vld [vmem:[%s1 + $0x30] sm:$0xff]
  %v28 = vld [vmem:[%s1 + $0x38] sm:$0xff]
  %v29 = vld [vmem:[%s1 + $0x40] sm:$0xff]
  %v30 = vld [vmem:[%s1 + $0x48] sm:$0xff]
  %v31 = vld [vmem:[%s1 + $0x50] sm:$0xff]
  %v32 = vld [vmem:[%s1 + $0x58] sm:$0xff]
  %v33 = vld [vmem:[%s1 + $0x60] sm:$0xff]
  %v34 = vld [vmem:[%s1 + $0x68] sm:$0xff]
  %v35 = vld [vmem:[%s1 + $0x70] sm:$0xff]
  %v36 = vld [vmem:[%s1 + $0x78] sm:$0xff]
  %v37 = vld [vmem:[%s1 + $0x80] sm:$0xff]
  %v38 = vld [vmem:[%s1 + $0x88] sm:$0xff]
  %v39 = vld [vmem:[%s1 + $0x90] sm:$0xff]
  %v40 = vld [vmem:[%s1 + $0x98] sm:$0xff]
  %v41 = vld [vmem:[%s1 + $0xa0] sm:$0xff]
  %v42 = vld [vmem:[%s1 + $0xa8] sm:$0xff]
  %v43 = vld [vmem:[%s1 + $0xb0] sm:$0xff]
  %v44 = vld [vmem:[%s1 + $0xb8] sm:$0xff]
  %v45 = vld [vmem:[%s1 + $0xc0] sm:$0xff]
  %v46 = vld [vmem:[%s1 + $0xc8] sm:$0xff]
  %v47 = vld [vmem:[%s1 + $0xd0] sm:$0xff]
  %v48 = vld [vmem:[%s1 + $0xd8] sm:$0xff]
  %v49 = vld [vmem:[%s1 + $0xe0] sm:$0xff]
  %v50 = vld [vmem:[%s1 + $0xe8] sm:$0xff]
  %v51 = vld [vmem:[%s1 + $0xf0] sm:$0xff]
  %v52 = vld [vmem:[%s1 + $0xf8] sm:$0xff]
  %v53 = vld [vmem:[%s1 + $0x100] sm:$0xff]
  %v54 = vld [vmem:[%s1 + $0x108] sm:$0xff]
  %v55 = vld [vmem:[%s1 + $0x110] sm:$0xff]
  %v56 = vld [vmem:[%s1 + $0x118] sm:$0xff]
  %v57 = vld [vmem:[%s1 + $0x120] sm:$0xff]
  %v58 = vld [vmem:[%s1 + $0x128] sm:$0xff]
  %v59 = vld [vmem:[%s1 + $0x130] sm:$0xff]
  %v60 = vld [vmem:[%s1 + $0x138] sm:$0xff]
  %v61 = vld [vmem:[%s1 + $0x140] sm:$0xff]
  %v62 = vld [vmem:[%s1 + $0x148] sm:$0xff]
  %v63 = vld [vmem:[%s1 + $0x150] sm:$0xff]
  %v64 = vld [vmem:[%s1 + $0x158] sm:$0xff]
  %v65 = vld [vmem:[%s1 + $0x160] sm:$0xff]
  %v66 = vld [vmem:[%s1 + $0x168] sm:$0xff]
  %v67 = vld [vmem:[%s1 + $0x170] sm:$0xff]
  %v68 = vld [vmem:[%s1 + $0x178] sm:$0xff]
  %v69 = vld [vmem:[%s1 + $0x180] sm:$0xff]
  %v70 = vld [vmem:[%s1 + $0x188] sm:$0xff]
  %v71 = vld [vmem:[%s1 + $0x190] sm:$0xff]
  %v72 = vld [vmem:[%s1 + $0x198] sm:$0xff]
  %v73 = vld [vmem:[%s1 + $0x1a0] sm:$0xff]
  %v74 = vld [vmem:[%s1 + $0x1a8] sm:$0xff]
  %v75 = vld [vmem:[%s1 + $0x1b0] sm:$0xff]
  %v76 = vld [vmem:[%s1 + $0x1b8] sm:$0xff]
  %v77 = vld [vmem:[%s1 + $0x1c0] sm:$0xff]
  %v78 = vld [vmem:[%s1 + $0x1c8] sm:$0xff]
  %v79 = vld [vmem:[%s1 + $0x1d0] sm:$0xff]
  %v80 = vld [vmem:[%s1 + $0x1d8] sm:$0xff]
  %v81 = vld [vmem:[%s1 + $0x1e0] sm:$0xff]
  %v82 = vld [vmem:[%s1 + $0x1e8] sm:$0xff]
  %v83 = vld [vmem:[%s1 + $0x1f0] sm:$0xff]
  %v84 = vld [vmem:[%s1 + $0x1f8] sm:$0xff]
  %v85 = vld [vmem:[%s1 + $0x200] sm:$0xff]
  %v86 = vld [vmem:[%s1 + $0x208] sm:$0xff]
  %v87 = vld [vmem:[%s1 + $0x210] sm:$0xff]
  %v88 = vld [vmem:[%s1 + $0x218] sm:$0xff]
  %v89 = vld [vmem:[%s1 + $0x220] sm:$0xff]
  %v90 = vld [vmem:[%s1 + $0x228] sm:$0xff]
  %v91 = vld [vmem:[%s1 + $0x230] sm:$0xff]
  %v92 = vld [vmem:[%s1 + $0x238] sm:$0xff]
  %v93 = vld [vmem:[%s1 + $0x240] sm:$0xff]
  %v94 = vld [vmem:[%s1 + $0x248] sm:$0xff]
  %v95 = vld [vmem:[%s1 + $0x250] sm:$0xff]
  %v96 = vld [vmem:[%s1 + $0x258] sm:$0xff]
  %v97 = vld [vmem:[%s1 + $0x260] sm:$0xff]
  %v98 = vld [vmem:[%s1 + $0x268] sm:$0xff]
  %v99 = vld [vmem:[%s1 + $0x270] sm:$0xff]
  %v100 = vld [vmem:[%s1 + $0x278] sm:$0xff]
  %v101 = vld [vmem:[%s1 + $0x280] sm:$0xff]
  %v102 = vld [vmem:[%s1 + $0x288] sm:$0xff]
  %v103 = vld [vmem:[%s1 + $0x290] sm:$0xff]
  %v104 = vld [vmem:[%s1 + $0x298] sm:$0xff]
  %v105 = vld [vmem:[%s1 + $0x2a0] sm:$0xff]
  %v106 = vld [vmem:[%s1 + $0x2a8] sm:$0xff]
  %v107 = vld [vmem:[%s1 + $0x2b0] sm:$0xff]
  %v108 = vld [vmem:[%s1 + $0x2b8] sm:$0xff]
  %v109 = vld [vmem:[%s1 + $0x2c0] sm:$0xff]
  %v110 = vld [vmem:[%s1 + $0x2c8] sm:$0xff]
  %v111 = vld [vmem:[%s1 + $0x2d0] sm:$0xff]
  %v112 = vld [vmem:[%s1 + $0x2d8] sm:$0xff]
  %v113 = vld [vmem:[%s1 + $0x2e0] sm:$0xff]
  %v114 = vld [vmem:[%s1 + $0x2e8] sm:$0xff]
  %v115 = vld [vmem:[%s1 + $0x2f0] sm:$0xff]
  %v116 = vld [vmem:[%s1 + $0x2f8] sm:$0xff]
  %v117 = vld [vmem:[%s1 + $0x300] sm:$0xff]
  %v118 = vld [vmem:[%s1 + $0x308] sm:$0xff]
  %v119 = vld [vmem:[%s2] sm:$0x1]
  %v121 = vlaneseq
  %v122 = vshrl.u32 %v121, 7
  %v123 = vsub.s32 0, %v122
  %v124 = vrot.slane %v119, %v123
  %vm126 = vcmask 130048
  %v128 = vsel %vm126, %v20, 0
  %130 = vmatprep.subr.mxu0 0.0
  %131 = vmatpush1.msra.mxu0 %v21
  %132 = vmatprep.subr.mxu0 0.0
  %133 = vmatpush1.msra.mxu0 %v22
  %134 = vmatprep.subr.mxu0 0.0
  %135 = vmatpush1.msra.mxu0 %v23
  %136 = vmatprep.subr.mxu0 0.0
  %137 = vmatpush1.msra.mxu0 %v24
  %138 = vmatprep.subr.mxu0 0.0
  %139 = vmatpush1.msra.mxu0 %v25
  %140 = vmatprep.subr.mxu0 0.0
  %141 = vmatpush1.msra.mxu0 %v26
  %142 = vmatprep.subr.mxu0 0.0
  %143 = vmatpush1.msra.mxu0 %v27
  %144 = vmatprep.subr.mxu0 0.0
  %145 = vmatpush1.msra.mxu0 %v28
  %146 = vmatprep.subr.mxu0 0.0
  %147 = vmatpush1.msra.mxu0 %v29
  %148 = vmatprep.subr.mxu0 0.0
  %149 = vmatpush1.msra.mxu0 %v30
  %150 = vmatprep.subr.mxu0 0.0
  %151 = vmatpush1.msra.mxu0 %v31
  %152 = vmatprep.subr.mxu0 0.0
  %153 = vmatpush1.msra.mxu0 %v32
  %154 = vmatprep.subr.mxu0 0.0
  %155 = vmatpush1.msra.mxu0 %v33
  %156 = vmatprep.subr.mxu0 0.0
  %157 = vmatpush1.msra.mxu0 %v34
  %158 = vmatprep.subr.mxu0 0.0
  %159 = vmatpush1.msra.mxu0 %v35
  %160 = vmatprep.subr.mxu0 0.0
  %161 = vmatpush1.msra.mxu0 %v36
  %162 = vmatprep.subr.mxu0 0.0
  %163 = vmatpush1.msra.mxu0 %v37
  %164 = vmatprep.subr.mxu0 0.0
  %165 = vmatpush1.msra.mxu0 %v38
  %166 = vmatprep.subr.mxu0 0.0
  %167 = vmatpush1.msra.mxu0 %v39
  %168 = vmatprep.subr.mxu0 0.0
  %169 = vmatpush1.msra.mxu0 %v40
  %170 = vmatprep.subr.mxu0 0.0
  %171 = vmatpush1.msra.mxu0 %v41
  %172 = vmatprep.subr.mxu0 0.0
  %173 = vmatpush1.msra.mxu0 %v42
  %174 = vmatprep.subr.mxu0 0.0
  %175 = vmatpush1.msra.mxu0 %v43
  %176 = vmatprep.subr.mxu0 0.0
  %177 = vmatpush1.msra.mxu0 %v44
  %178 = vmatprep.subr.mxu0 0.0
  %179 = vmatpush1.msra.mxu0 %v45
  %180 = vmatprep.subr.mxu0 0.0
  %181 = vmatpush1.msra.mxu0 %v46
  %182 = vmatprep.subr.mxu0 0.0
  %183 = vmatpush1.msra.mxu0 %v47
  %184 = vmatprep.subr.mxu0 0.0
  %185 = vmatpush1.msra.mxu0 %v48
  %186 = vmatprep.subr.mxu0 0.0
  %187 = vmatpush1.msra.mxu0 %v49
  %188 = vmatprep.subr.mxu0 0.0
  %189 = vmatpush1.msra.mxu0 %v50
  %190 = vmatprep.subr.mxu0 0.0
  %191 = vmatpush1.msra.mxu0 %v51
  %192 = vmatprep.subr.mxu0 0.0
  %193 = vmatpush1.msra.mxu0 %v52
  %194 = vmatprep.mubr.f32.mxu0 %v15
  %195 = vmatmul.mubr.f32.gmra.mrb[0].mxu0 %v14
  %v196 = vpop.f32.mrb[0].mxu0
  %v197 = vadd.f32 %v124, %v196
  %v198 = vpop.f32.mrb[0].mxu0
  %199 = vdwg.mxu0
  %200 = vmatprep.subr.mxu0 0.0
  %201 = vmatpush1.msra.mxu0 %v53
  %202 = vmatprep.subr.mxu0 0.0
  %203 = vmatpush1.msra.mxu0 %v54
  %204 = vmatprep.subr.mxu0 0.0
  %205 = vmatpush1.msra.mxu0 %v55
  %206 = vmatprep.subr.mxu0 0.0
  %207 = vmatpush1.msra.mxu0 %v56
  %208 = vmatprep.subr.mxu0 0.0
  %209 = vmatpush1.msra.mxu0 %v57
  %210 = vmatprep.subr.mxu0 0.0
  %211 = vmatpush1.msra.mxu0 %v58
  %212 = vmatprep.subr.mxu0 0.0
  %213 = vmatpush1.msra.mxu0 %v59
  %214 = vmatprep.subr.mxu0 0.0
  %215 = vmatpush1.msra.mxu0 %v60
  %216 = vmatprep.subr.mxu0 0.0
  %217 = vmatpush1.msra.mxu0 %v61
  %218 = vmatprep.subr.mxu0 0.0
  %219 = vmatpush1.msra.mxu0 %v62
  %220 = vmatprep.subr.mxu0 0.0
  %221 = vmatpush1.msra.mxu0 %v63
  %222 = vmatprep.subr.mxu0 0.0
  %223 = vmatpush1.msra.mxu0 %v64
  %224 = vmatprep.subr.mxu0 0.0
  %225 = vmatpush1.msra.mxu0 %v65
  %226 = vmatprep.subr.mxu0 0.0
  %227 = vmatpush1.msra.mxu0 %v66
  %228 = vmatprep.subr.mxu0 0.0
  %229 = vmatpush1.msra.mxu0 %v67
  %230 = vmatprep.subr.mxu0 0.0
  %231 = vmatpush1.msra.mxu0 %v68
  %232 = vmatprep.subr.mxu0 0.0
  %233 = vmatpush1.msra.mxu0 %v69
  %234 = vmatprep.subr.mxu0 0.0
  %235 = vmatpush1.msra.mxu0 %v70
  %236 = vmatprep.subr.mxu0 0.0
  %237 = vmatpush1.msra.mxu0 %v71
  %238 = vmatprep.subr.mxu0 0.0
  %239 = vmatpush1.msra.mxu0 %v72
  %240 = vmatprep.subr.mxu0 0.0
  %241 = vmatpush1.msra.mxu0 %v73
  %242 = vmatprep.subr.mxu0 0.0
  %243 = vmatpush1.msra.mxu0 %v74
  %244 = vmatprep.subr.mxu0 0.0
  %245 = vmatpush1.msra.mxu0 %v75
  %246 = vmatprep.subr.mxu0 0.0
  %247 = vmatpush1.msra.mxu0 %v76
  %248 = vmatprep.subr.mxu0 0.0
  %249 = vmatpush1.msra.mxu0 %v77
  %250 = vmatprep.subr.mxu0 0.0
  %251 = vmatpush1.msra.mxu0 %v78
  %252 = vmatprep.subr.mxu0 0.0
  %253 = vmatpush1.msra.mxu0 %v79
  %254 = vmatprep.subr.mxu0 0.0
  %255 = vmatpush1.msra.mxu0 %v80
  %256 = vmatprep.subr.mxu0 0.0
  %257 = vmatpush1.msra.mxu0 %v81
  %258 = vmatprep.subr.mxu0 0.0
  %259 = vmatpush1.msra.mxu0 %v82
  %260 = vmatprep.subr.mxu0 0.0
  %261 = vmatpush1.msra.mxu0 %v83
  %262 = vmatprep.subr.mxu0 0.0
  %263 = vmatpush1.msra.mxu0 %v84
  %264 = vmatprep.mubr.f32.mxu0 %v17
  %265 = vmatmul.mubr.f32.gmra.mrb[0].mxu0 %v16
  %v266 = vpop.f32.mrb[0].mxu0
  %v267 = vadd.f32 %v197, %v266
  %v268 = vpop.f32.mrb[0].mxu0
  %269 = vdwg.mxu0
  %270 = vmatprep.subr.mxu0 0.0
  %271 = vmatpush1.msra.mxu0 %v85
  %272 = vmatprep.subr.mxu0 0.0
  %273 = vmatpush1.msra.mxu0 %v86
  %274 = vmatprep.subr.mxu0 0.0
  %275 = vmatpush1.msra.mxu0 %v87
  %276 = vmatprep.subr.mxu0 0.0
  %277 = vmatpush1.msra.mxu0 %v88
  %278 = vmatprep.subr.mxu0 0.0
  %279 = vmatpush1.msra.mxu0 %v89
  %280 = vmatprep.subr.mxu0 0.0
  %281 = vmatpush1.msra.mxu0 %v90
  %282 = vmatprep.subr.mxu0 0.0
  %283 = vmatpush1.msra.mxu0 %v91
  %284 = vmatprep.subr.mxu0 0.0
  %285 = vmatpush1.msra.mxu0 %v92
  %286 = vmatprep.subr.mxu0 0.0
  %287 = vmatpush1.msra.mxu0 %v93
  %288 = vmatprep.subr.mxu0 0.0
  %289 = vmatpush1.msra.mxu0 %v94
  %290 = vmatprep.subr.mxu0 0.0
  %291 = vmatpush1.msra.mxu0 %v95
  %292 = vmatprep.subr.mxu0 0.0
  %293 = vmatpush1.msra.mxu0 %v96
  %294 = vmatprep.subr.mxu0 0.0
  %295 = vmatpush1.msra.mxu0 %v97
  %296 = vmatprep.subr.mxu0 0.0
  %297 = vmatpush1.msra.mxu0 %v98
  %298 = vmatprep.subr.mxu0 0.0
  %299 = vmatpush1.msra.mxu0 %v99
  %300 = vmatprep.subr.mxu0 0.0
  %301 = vmatpush1.msra.mxu0 %v100
  %302 = vmatprep.subr.mxu0 0.0
  %303 = vmatpush1.msra.mxu0 %v101
  %304 = vmatprep.subr.mxu0 0.0
  %305 = vmatpush1.msra.mxu0 %v102
  %306 = vmatprep.subr.mxu0 0.0
  %307 = vmatpush1.msra.mxu0 %v103
  %308 = vmatprep.subr.mxu0 0.0
  %309 = vmatpush1.msra.mxu0 %v104
  %310 = vmatprep.subr.mxu0 0.0
  %311 = vmatpush1.msra.mxu0 %v105
  %312 = vmatprep.subr.mxu0 0.0
  %313 = vmatpush1.msra.mxu0 %v106
  %314 = vmatprep.subr.mxu0 0.0
  %315 = vmatpush1.msra.mxu0 %v107
  %316 = vmatprep.subr.mxu0 0.0
  %317 = vmatpush1.msra.mxu0 %v108
  %318 = vmatprep.subr.mxu0 0.0
  %319 = vmatpush1.msra.mxu0 %v109
  %320 = vmatprep.subr.mxu0 0.0
  %321 = vmatpush1.msra.mxu0 %v110
  %322 = vmatprep.subr.mxu0 0.0
  %323 = vmatpush1.msra.mxu0 %v111
  %324 = vmatprep.subr.mxu0 0.0
  %325 = vmatpush1.msra.mxu0 %v112
  %326 = vmatprep.subr.mxu0 0.0
  %327 = vmatpush1.msra.mxu0 %v113
  %328 = vmatprep.subr.mxu0 0.0
  %329 = vmatpush1.msra.mxu0 %v114
  %330 = vmatprep.subr.mxu0 0.0
  %331 = vmatpush1.msra.mxu0 %v115
  %332 = vmatprep.subr.mxu0 0.0
  %333 = vmatpush1.msra.mxu0 %v116
  %334 = vmatprep.mubr.f32.mxu0 %v19
  %335 = vmatmul.mubr.f32.gmra.mrb[0].mxu0 %v18
  %v336 = vpop.f32.mrb[0].mxu0
  %v337 = vadd.f32 %v267, %v336
  %v338 = vpop.f32.mrb[0].mxu0
  %339 = vdwg.mxu0
  %340 = vmatprep.subr.mxu0 0.0
  %341 = vmatpush1.msra.mxu0 %v117
  %342 = vmatprep.subr.mxu0 0.0
  %343 = vmatpush1.msra.mxu0 %v118
  %344 = vmatprep.subr.mxu0 0.0
  %345 = vmatpush1.msra.mxu0 0.0
  %346 = vmatprep.subr.mxu0 0.0
  %347 = vmatpush1.msra.mxu0 0.0
  %348 = vmatprep.subr.mxu0 0.0
  %349 = vmatpush1.msra.mxu0 0.0
  %350 = vmatprep.subr.mxu0 0.0
  %351 = vmatpush1.msra.mxu0 0.0
  %352 = vmatprep.subr.mxu0 0.0
  %353 = vmatpush1.msra.mxu0 0.0
  %354 = vmatprep.subr.mxu0 0.0
  %355 = vmatpush1.msra.mxu0 0.0
  %356 = vmatprep.subr.mxu0 0.0
  %357 = vmatpush1.msra.mxu0 0.0
  %358 = vmatprep.subr.mxu0 0.0
  %359 = vmatpush1.msra.mxu0 0.0
  %360 = vmatprep.subr.mxu0 0.0
  %361 = vmatpush1.msra.mxu0 0.0
  %362 = vmatprep.subr.mxu0 0.0
  %363 = vmatpush1.msra.mxu0 0.0
  %364 = vmatprep.subr.mxu0 0.0
  %365 = vmatpush1.msra.mxu0 0.0
  %366 = vmatprep.subr.mxu0 0.0
  %367 = vmatpush1.msra.mxu0 0.0
  %368 = vmatprep.subr.mxu0 0.0
  %369 = vmatpush1.msra.mxu0 0.0
  %370 = vmatprep.subr.mxu0 0.0
  %371 = vmatpush1.msra.mxu0 0.0
  %372 = vmatprep.subr.mxu0 0.0
  %373 = vmatpush1.msra.mxu0 0.0
  %374 = vmatprep.subr.mxu0 0.0
  %375 = vmatpush1.msra.mxu0 0.0
  %376 = vmatprep.subr.mxu0 0.0
  %377 = vmatpush1.msra.mxu0 0.0
  %378 = vmatprep.subr.mxu0 0.0
  %379 = vmatpush1.msra.mxu0 0.0
  %380 = vmatprep.subr.mxu0 0.0
  %381 = vmatpush1.msra.mxu0 0.0
  %382 = vmatprep.subr.mxu0 0.0
  %383 = vmatpush1.msra.mxu0 0.0
  %384 = vmatprep.subr.mxu0 0.0
  %385 = vmatpush1.msra.mxu0 0.0
  %386 = vmatprep.subr.mxu0 0.0
  %387 = vmatpush1.msra.mxu0 0.0
  %388 = vmatprep.subr.mxu0 0.0
  %389 = vmatpush1.msra.mxu0 0.0
  %390 = vmatprep.subr.mxu0 0.0
  %391 = vmatpush1.msra.mxu0 0.0
  %392 = vmatprep.subr.mxu0 0.0
  %393 = vmatpush1.msra.mxu0 0.0
  %394 = vmatprep.subr.mxu0 0.0
  %395 = vmatpush1.msra.mxu0 0.0
  %396 = vmatprep.subr.mxu0 0.0
  %397 = vmatpush1.msra.mxu0 0.0
  %398 = vmatprep.subr.mxu0 0.0
  %399 = vmatpush1.msra.mxu0 0.0
  %400 = vmatprep.subr.mxu0 0.0
  %401 = vmatpush1.msra.mxu0 0.0
  %402 = vmatprep.subr.mxu0 0.0
  %403 = vmatpush1.msra.mxu0 0.0
  %404 = vmatprep.mubr.f32.mxu0 0.0
  %405 = vmatmul.mubr.f32.gmra.mrb[0].mxu0 %v128
  %v406 = vpop.f32.mrb[0].mxu0
  %v407 = vadd.f32 %v337, %v406
  %v408 = vpop.f32.mrb[0].mxu0
  %409 = vdwg.mxu0
  %410 = vst.msk [vmem:[%s3] sm:$0xff] %vm126, %v407
  // Predicated region
  $region14: #{tf_conv_block.19} parent=0 // pred_check
    _
  $region15: #{tf_conv_block.19} parent=0 // pred_check_branch
    %412 = sbr.rel (0) target = $region17
  $region16: #{tf_conv_block.19} parent=0 // pred_region
    _
  $region17: #{tf_conv_block.19} parent=0 // pred_fallthru
    _
  // Predicated region
  $region18: #{tf_conv_block.19} parent=0 // pred_check
    _
  $region19: #{tf_conv_block.19} parent=0 // pred_check_branch
    %414 = sbr.rel (0) target = $region21
  $region20: #{tf_conv_block.19} parent=0 // pred_region
    _
  $region21: #{tf_conv_block.19} parent=0 // pred_fallthru
    _

// kernel: tf_conv_block.20
$region0: #{tf_conv_block.20}
  #allocation0 [shape = 'u32[]', space=smem, size = 0x4, offset = 0x4, fixed_abs, tag = 'smem constant byte address 0x4 - core index']
  #allocation1 [shape = 'u32[144,128]{1,0:T(1,128)}', space=vmem, size = 0x12000, scoped, tag = 'internal scratch']
  %s0 = inlined_call_operand.vmem [shape: f32[8,1296], index: 0, kind: input, shape index: {}]
  %s1 = inlined_call_operand.vmem [shape: f32[1296,16], index: 1, kind: input, shape index: {}]
  %s2 = inlined_call_operand.vmem [shape: f32[1,16], index: 2, kind: input, shape index: {}]
  %s3 = inlined_call_operand.vmem [shape: f32[8,16], index: 3, kind: output, shape index: {}]
  %s4 = sld [smem:[#allocation0]]
  $region22: #{tf_conv_block.20} parent=0
    _
  %s6 = ssub.s32 1, %s4
  %s7 = scalar_select 0, %s6, %s4
  // Predicated region
  $region2: #{tf_conv_block.20} parent=0 // pred_check
    _
  $region3: #{tf_conv_block.20} parent=0 // pred_check_branch
    %9 = sbr.rel (0) target = $region5
  $region4: #{tf_conv_block.20} parent=0 // pred_region
    _
  $region5: #{tf_conv_block.20} parent=0 // pred_fallthru
    _
  // Predicated region
  $region6: #{tf_conv_block.20} parent=0 // pred_check
    _
  $region7: #{tf_conv_block.20} parent=0 // pred_check_branch
    %11 = sbr.rel (0) target = $region9
  $region8: #{tf_conv_block.20} parent=0 // pred_region
    _
  $region9: #{tf_conv_block.20} parent=0 // pred_fallthru
    _
  // Predicated region
  $region10: #{tf_conv_block.20} parent=0 // pred_check
    _
  $region11: #{tf_conv_block.20} parent=0 // pred_check_branch
    %13 = sbr.rel (0) target = $region13
  $region12: #{tf_conv_block.20} parent=0 // pred_region
    _
  $region13: #{tf_conv_block.20} parent=0 // pred_fallthru
    _
  %v14 = vld [vmem:[%s0] sm:$0xff]
  %v15 = vld [vmem:[%s0 + $0x8] sm:$0xff]
  %v16 = vld [vmem:[%s0 + $0x10] sm:$0xff]
  %v17 = vld [vmem:[%s0 + $0x18] sm:$0xff]
  %v18 = vld [vmem:[%s0 + $0x20] sm:$0xff]
  %v19 = vld [vmem:[%s0 + $0x28] sm:$0xff]
  %v20 = vld [vmem:[%s0 + $0x30] sm:$0xff]
  %v21 = vld [vmem:[%s0 + $0x38] sm:$0xff]
  %v22 = vld [vmem:[%s0 + $0x40] sm:$0xff]
  %v23 = vld [vmem:[%s0 + $0x48] sm:$0xff]
  %v24 = vld [vmem:[%s0 + $0x50] sm:$0xff]
  %v25 = vld [vmem:[%s1] sm:$0xff]
  %v26 = vld [vmem:[%s1 + $0x8] sm:$0xff]
  %v27 = vld [vmem:[%s1 + $0x10] sm:$0xff]
  %v28 = vld [vmem:[%s1 + $0x18] sm:$0xff]
  %v29 = vld [vmem:[%s1 + $0x20] sm:$0xff]
  %v30 = vld [vmem:[%s1 + $0x28] sm:$0xff]
  %v31 = vld [vmem:[%s1 + $0x30] sm:$0xff]
  %v32 = vld [vmem:[%s1 + $0x38] sm:$0xff]
  %v33 = vld [vmem:[%s1 + $0x40] sm:$0xff]
  %v34 = vld [vmem:[%s1 + $0x48] sm:$0xff]
  %v35 = vld [vmem:[%s1 + $0x50] sm:$0xff]
  %v36 = vld [vmem:[%s1 + $0x58] sm:$0xff]
  %v37 = vld [vmem:[%s1 + $0x60] sm:$0xff]
  %v38 = vld [vmem:[%s1 + $0x68] sm:$0xff]
  %v39 = vld [vmem:[%s1 + $0x70] sm:$0xff]
  %v40 = vld [vmem:[%s1 + $0x78] sm:$0xff]
  %v41 = vld [vmem:[%s1 + $0x80] sm:$0xff]
  %v42 = vld [vmem:[%s1 + $0x88] sm:$0xff]
  %v43 = vld [vmem:[%s1 + $0x90] sm:$0xff]
  %v44 = vld [vmem:[%s1 + $0x98] sm:$0xff]
  %v45 = vld [vmem:[%s1 + $0xa0] sm:$0xff]
  %v46 = vld [vmem:[%s1 + $0xa8] sm:$0xff]
  %v47 = vld [vmem:[%s1 + $0xb0] sm:$0xff]
  %v48 = vld [vmem:[%s1 + $0xb8] sm:$0xff]
  %v49 = vld [vmem:[%s1 + $0xc0] sm:$0xff]
  %v50 = vld [vmem:[%s1 + $0xc8] sm:$0xff]
  %v51 = vld [vmem:[%s1 + $0xd0] sm:$0xff]
  %v52 = vld [vmem:[%s1 + $0xd8] sm:$0xff]
  %v53 = vld [vmem:[%s1 + $0xe0] sm:$0xff]
  %v54 = vld [vmem:[%s1 + $0xe8] sm:$0xff]
  %v55 = vld [vmem:[%s1 + $0xf0] sm:$0xff]
  %v56 = vld [vmem:[%s1 + $0xf8] sm:$0xff]
  %v57 = vld [vmem:[%s1 + $0x100] sm:$0xff]
  %v58 = vld [vmem:[%s1 + $0x108] sm:$0xff]
  %v59 = vld [vmem:[%s1 + $0x110] sm:$0xff]
  %v60 = vld [vmem:[%s1 + $0x118] sm:$0xff]
  %v61 = vld [vmem:[%s1 + $0x120] sm:$0xff]
  %v62 = vld [vmem:[%s1 + $0x128] sm:$0xff]
  %v63 = vld [vmem:[%s1 + $0x130] sm:$0xff]
  %v64 = vld [vmem:[%s1 + $0x138] sm:$0xff]
  %v65 = vld [vmem:[%s1 + $0x140] sm:$0xff]
  %v66 = vld [vmem:[%s1 + $0x148] sm:$0xff]
  %v67 = vld [vmem:[%s1 + $0x150] sm:$0xff]
  %v68 = vld [vmem:[%s1 + $0x158] sm:$0xff]
  %v69 = vld [vmem:[%s1 + $0x160] sm:$0xff]
  %v70 = vld [vmem:[%s1 + $0x168] sm:$0xff]
  %v71 = vld [vmem:[%s1 + $0x170] sm:$0xff]
  %v72 = vld [vmem:[%s1 + $0x178] sm:$0xff]
  %v73 = vld [vmem:[%s1 + $0x180] sm:$0xff]
  %v74 = vld [vmem:[%s1 + $0x188] sm:$0xff]
  %v75 = vld [vmem:[%s1 + $0x190] sm:$0xff]
  %v76 = vld [vmem:[%s1 + $0x198] sm:$0xff]
  %v77 = vld [vmem:[%s1 + $0x1a0] sm:$0xff]
  %v78 = vld [vmem:[%s1 + $0x1a8] sm:$0xff]
  %v79 = vld [vmem:[%s1 + $0x1b0] sm:$0xff]
  %v80 = vld [vmem:[%s1 + $0x1b8] sm:$0xff]
  %v81 = vld [vmem:[%s1 + $0x1c0] sm:$0xff]
  %v82 = vld [vmem:[%s1 + $0x1c8] sm:$0xff]
  %v83 = vld [vmem:[%s1 + $0x1d0] sm:$0xff]
  %v84 = vld [vmem:[%s1 + $0x1d8] sm:$0xff]
  %v85 = vld [vmem:[%s1 + $0x1e0] sm:$0xff]
  %v86 = vld [vmem:[%s1 + $0x1e8] sm:$0xff]
  %v87 = vld [vmem:[%s1 + $0x1f0] sm:$0xff]
  %v88 = vld [vmem:[%s1 + $0x1f8] sm:$0xff]
  %v89 = vld [vmem:[%s1 + $0x200] sm:$0xff]
  %v90 = vld [vmem:[%s1 + $0x208] sm:$0xff]
  %v91 = vld [vmem:[%s1 + $0x210] sm:$0xff]
  %v92 = vld [vmem:[%s1 + $0x218] sm:$0xff]
  %v93 = vld [vmem:[%s1 + $0x220] sm:$0xff]
  %v94 = vld [vmem:[%s1 + $0x228] sm:$0xff]
  %v95 = vld [vmem:[%s1 + $0x230] sm:$0xff]
  %v96 = vld [vmem:[%s1 + $0x238] sm:$0xff]
  %v97 = vld [vmem:[%s1 + $0x240] sm:$0xff]
  %v98 = vld [vmem:[%s1 + $0x248] sm:$0xff]
  %v99 = vld [vmem:[%s1 + $0x250] sm:$0xff]
  %v100 = vld [vmem:[%s1 + $0x258] sm:$0xff]
  %v101 = vld [vmem:[%s1 + $0x260] sm:$0xff]
  %v102 = vld [vmem:[%s1 + $0x268] sm:$0xff]
  %v103 = vld [vmem:[%s1 + $0x270] sm:$0xff]
  %v104 = vld [vmem:[%s1 + $0x278] sm:$0xff]
  %v105 = vld [vmem:[%s1 + $0x280] sm:$0xff]
  %v106 = vld [vmem:[%s1 + $0x288] sm:$0xff]
  %v107 = vld [vmem:[%s1 + $0x290] sm:$0xff]
  %v108 = vld [vmem:[%s1 + $0x298] sm:$0xff]
  %v109 = vld [vmem:[%s1 + $0x2a0] sm:$0xff]
  %v110 = vld [vmem:[%s1 + $0x2a8] sm:$0xff]
  %v111 = vld [vmem:[%s1 + $0x2b0] sm:$0xff]
  %v112 = vld [vmem:[%s1 + $0x2b8] sm:$0xff]
  %v113 = vld [vmem:[%s1 + $0x2c0] sm:$0xff]
  %v114 = vld [vmem:[%s1 + $0x2c8] sm:$0xff]
  %v115 = vld [vmem:[%s1 + $0x2d0] sm:$0xff]
  %v116 = vld [vmem:[%s1 + $0x2d8] sm:$0xff]
  %v117 = vld [vmem:[%s1 + $0x2e0] sm:$0xff]
  %v118 = vld [vmem:[%s1 + $0x2e8] sm:$0xff]
  %v119 = vld [vmem:[%s1 + $0x2f0] sm:$0xff]
  %v120 = vld [vmem:[%s1 + $0x2f8] sm:$0xff]
  %v121 = vld [vmem:[%s1 + $0x300] sm:$0xff]
  %v122 = vld [vmem:[%s1 + $0x308] sm:$0xff]
  %v123 = vld [vmem:[%s1 + $0x310] sm:$0xff]
  %v124 = vld [vmem:[%s1 + $0x318] sm:$0xff]
  %v125 = vld [vmem:[%s1 + $0x320] sm:$0xff]
  %v126 = vld [vmem:[%s1 + $0x328] sm:$0xff]
  %v127 = vld [vmem:[%s1 + $0x330] sm:$0xff]
  %v128 = vld [vmem:[%s1 + $0x338] sm:$0xff]
  %v129 = vld [vmem:[%s1 + $0x340] sm:$0xff]
  %v130 = vld [vmem:[%s1 + $0x348] sm:$0xff]
  %v131 = vld [vmem:[%s1 + $0x350] sm:$0xff]
  %v132 = vld [vmem:[%s1 + $0x358] sm:$0xff]
  %v133 = vld [vmem:[%s1 + $0x360] sm:$0xff]
  %v134 = vld [vmem:[%s1 + $0x368] sm:$0xff]
  %v135 = vld [vmem:[%s1 + $0x370] sm:$0xff]
  %v136 = vld [vmem:[%s1 + $0x378] sm:$0xff]
  %v137 = vld [vmem:[%s1 + $0x380] sm:$0xff]
  %v138 = vld [vmem:[%s1 + $0x388] sm:$0xff]
  %v139 = vld [vmem:[%s1 + $0x390] sm:$0xff]
  %v140 = vld [vmem:[%s1 + $0x398] sm:$0xff]
  %v141 = vld [vmem:[%s1 + $0x3a0] sm:$0xff]
  %v142 = vld [vmem:[%s1 + $0x3a8] sm:$0xff]
  %v143 = vld [vmem:[%s1 + $0x3b0] sm:$0xff]
  %v144 = vld [vmem:[%s1 + $0x3b8] sm:$0xff]
  %v145 = vld [vmem:[%s1 + $0x3c0] sm:$0xff]
  %v146 = vld [vmem:[%s1 + $0x3c8] sm:$0xff]
  %v147 = vld [vmem:[%s1 + $0x3d0] sm:$0xff]
  %v148 = vld [vmem:[%s1 + $0x3d8] sm:$0xff]
  %v149 = vld [vmem:[%s1 + $0x3e0] sm:$0xff]
  %v150 = vld [vmem:[%s1 + $0x3e8] sm:$0xff]
  %v151 = vld [vmem:[%s1 + $0x3f0] sm:$0xff]
  %v152 = vld [vmem:[%s1 + $0x3f8] sm:$0xff]
  %v153 = vld [vmem:[%s1 + $0x400] sm:$0xff]
  %v154 = vld [vmem:[%s1 + $0x408] sm:$0xff]
  %v155 = vld [vmem:[%s1 + $0x410] sm:$0xff]
  %v156 = vld [vmem:[%s1 + $0x418] sm:$0xff]
  %v157 = vld [vmem:[%s1 + $0x420] sm:$0xff]
  %v158 = vld [vmem:[%s1 + $0x428] sm:$0xff]
  %v159 = vld [vmem:[%s1 + $0x430] sm:$0xff]
  %v160 = vld [vmem:[%s1 + $0x438] sm:$0xff]
  %v161 = vld [vmem:[%s1 + $0x440] sm:$0xff]
  %v162 = vld [vmem:[%s1 + $0x448] sm:$0xff]
  %v163 = vld [vmem:[%s1 + $0x450] sm:$0xff]
  %v164 = vld [vmem:[%s1 + $0x458] sm:$0xff]
  %v165 = vld [vmem:[%s1 + $0x460] sm:$0xff]
  %v166 = vld [vmem:[%s1 + $0x468] sm:$0xff]
  %v167 = vld [vmem:[%s1 + $0x470] sm:$0xff]
  %v168 = vld [vmem:[%s1 + $0x478] sm:$0xff]
  %v169 = vld [vmem:[%s1 + $0x480] sm:$0xff]
  %v170 = vld [vmem:[%s1 + $0x488] sm:$0xff]
  %v171 = vld [vmem:[%s1 + $0x490] sm:$0xff]
  %v172 = vld [vmem:[%s1 + $0x498] sm:$0xff]
  %v173 = vld [vmem:[%s1 + $0x4a0] sm:$0xff]
  %v174 = vld [vmem:[%s1 + $0x4a8] sm:$0xff]
  %v175 = vld [vmem:[%s1 + $0x4b0] sm:$0xff]
  %v176 = vld [vmem:[%s1 + $0x4b8] sm:$0xff]
  %v177 = vld [vmem:[%s1 + $0x4c0] sm:$0xff]
  %v178 = vld [vmem:[%s1 + $0x4c8] sm:$0xff]
  %v179 = vld [vmem:[%s1 + $0x4d0] sm:$0xff]
  %v180 = vld [vmem:[%s1 + $0x4d8] sm:$0xff]
  %v181 = vld [vmem:[%s1 + $0x4e0] sm:$0xff]
  %v182 = vld [vmem:[%s1 + $0x4e8] sm:$0xff]
  %v183 = vld [vmem:[%s1 + $0x4f0] sm:$0xff]
  %v184 = vld [vmem:[%s1 + $0x4f8] sm:$0xff]
  %v185 = vld [vmem:[%s1 + $0x500] sm:$0xff]
  %v186 = vld [vmem:[%s1 + $0x508] sm:$0xff]
  %v187 = vld [vmem:[%s2] sm:$0x1]
  %v189 = vlaneseq
  %v190 = vshrl.u32 %v189, 7
  %v191 = vsub.s32 0, %v190
  %v192 = vrot.slane %v187, %v191
  %vm194 = vcmask 130048
  %v196 = vsel %vm194, %v24, 0
  %198 = vmatprep.subr.mxu0 0.0
  %199 = vmatpush1.msra.mxu0 %v25
  %200 = vmatprep.subr.mxu0 0.0
  %201 = vmatpush1.msra.mxu0 %v26
  %202 = vmatprep.subr.mxu0 0.0
  %203 = vmatpush1.msra.mxu0 %v27
  %204 = vmatprep.subr.mxu0 0.0
  %205 = vmatpush1.msra.mxu0 %v28
  %206 = vmatprep.subr.mxu0 0.0
  %207 = vmatpush1.msra.mxu0 %v29
  %208 = vmatprep.subr.mxu0 0.0
  %209 = vmatpush1.msra.mxu0 %v30
  %210 = vmatprep.subr.mxu0 0.0
  %211 = vmatpush1.msra.mxu0 %v31
  %212 = vmatprep.subr.mxu0 0.0
  %213 = vmatpush1.msra.mxu0 %v32
  %214 = vmatprep.subr.mxu0 0.0
  %215 = vmatpush1.msra.mxu0 %v33
  %216 = vmatprep.subr.mxu0 0.0
  %217 = vmatpush1.msra.mxu0 %v34
  %218 = vmatprep.subr.mxu0 0.0
  %219 = vmatpush1.msra.mxu0 %v35
  %220 = vmatprep.subr.mxu0 0.0
  %221 = vmatpush1.msra.mxu0 %v36
  %222 = vmatprep.subr.mxu0 0.0
  %223 = vmatpush1.msra.mxu0 %v37
  %224 = vmatprep.subr.mxu0 0.0
  %225 = vmatpush1.msra.mxu0 %v38
  %226 = vmatprep.subr.mxu0 0.0
  %227 = vmatpush1.msra.mxu0 %v39
  %228 = vmatprep.subr.mxu0 0.0
  %229 = vmatpush1.msra.mxu0 %v40
  %230 = vmatprep.subr.mxu0 0.0
  %231 = vmatpush1.msra.mxu0 %v41
  %232 = vmatprep.subr.mxu0 0.0
  %233 = vmatpush1.msra.mxu0 %v42
  %234 = vmatprep.subr.mxu0 0.0
  %235 = vmatpush1.msra.mxu0 %v43
  %236 = vmatprep.subr.mxu0 0.0
  %237 = vmatpush1.msra.mxu0 %v44
  %238 = vmatprep.subr.mxu0 0.0
  %239 = vmatpush1.msra.mxu0 %v45
  %240 = vmatprep.subr.mxu0 0.0
  %241 = vmatpush1.msra.mxu0 %v46
  %242 = vmatprep.subr.mxu0 0.0
  %243 = vmatpush1.msra.mxu0 %v47
  %244 = vmatprep.subr.mxu0 0.0
  %245 = vmatpush1.msra.mxu0 %v48
  %246 = vmatprep.subr.mxu0 0.0
  %247 = vmatpush1.msra.mxu0 %v49
  %248 = vmatprep.subr.mxu0 0.0
  %249 = vmatpush1.msra.mxu0 %v50
  %250 = vmatprep.subr.mxu0 0.0
  %251 = vmatpush1.msra.mxu0 %v51
  %252 = vmatprep.subr.mxu0 0.0
  %253 = vmatpush1.msra.mxu0 %v52
  %254 = vmatprep.subr.mxu0 0.0
  %255 = vmatpush1.msra.mxu0 %v53
  %256 = vmatprep.subr.mxu0 0.0
  %257 = vmatpush1.msra.mxu0 %v54
  %258 = vmatprep.subr.mxu0 0.0
  %259 = vmatpush1.msra.mxu0 %v55
  %260 = vmatprep.subr.mxu0 0.0
  %261 = vmatpush1.msra.mxu0 %v56
  %262 = vmatprep.mubr.f32.mxu0 %v15
  %263 = vmatmul.mubr.f32.gmra.mrb[0].mxu0 %v14
  %v264 = vpop.f32.mrb[0].mxu0
  %v265 = vadd.f32 %v192, %v264
  %v266 = vpop.f32.mrb[0].mxu0
  %267 = vdwg.mxu0
  %268 = vmatprep.subr.mxu0 0.0
  %269 = vmatpush1.msra.mxu0 %v57
  %270 = vmatprep.subr.mxu0 0.0
  %271 = vmatpush1.msra.mxu0 %v58
  %272 = vmatprep.subr.mxu0 0.0
  %273 = vmatpush1.msra.mxu0 %v59
  %274 = vmatprep.subr.mxu0 0.0
  %275 = vmatpush1.msra.mxu0 %v60
  %276 = vmatprep.subr.mxu0 0.0
  %277 = vmatpush1.msra.mxu0 %v61
  %278 = vmatprep.subr.mxu0 0.0
  %279 = vmatpush1.msra.mxu0 %v62
  %280 = vmatprep.subr.mxu0 0.0
  %281 = vmatpush1.msra.mxu0 %v63
  %282 = vmatprep.subr.mxu0 0.0
  %283 = vmatpush1.msra.mxu0 %v64
  %284 = vmatprep.subr.mxu0 0.0
  %285 = vmatpush1.msra.mxu0 %v65
  %286 = vmatprep.subr.mxu0 0.0
  %287 = vmatpush1.msra.mxu0 %v66
  %288 = vmatprep.subr.mxu0 0.0
  %289 = vmatpush1.msra.mxu0 %v67
  %290 = vmatprep.subr.mxu0 0.0
  %291 = vmatpush1.msra.mxu0 %v68
  %292 = vmatprep.subr.mxu0 0.0
  %293 = vmatpush1.msra.mxu0 %v69
  %294 = vmatprep.subr.mxu0 0.0
  %295 = vmatpush1.msra.mxu0 %v70
  %296 = vmatprep.subr.mxu0 0.0
  %297 = vmatpush1.msra.mxu0 %v71
  %298 = vmatprep.subr.mxu0 0.0
  %299 = vmatpush1.msra.mxu0 %v72
  %300 = vmatprep.subr.mxu0 0.0
  %301 = vmatpush1.msra.mxu0 %v73
  %302 = vmatprep.subr.mxu0 0.0
  %303 = vmatpush1.msra.mxu0 %v74
  %304 = vmatprep.subr.mxu0 0.0
  %305 = vmatpush1.msra.mxu0 %v75
  %306 = vmatprep.subr.mxu0 0.0
  %307 = vmatpush1.msra.mxu0 %v76
  %308 = vmatprep.subr.mxu0 0.0
  %309 = vmatpush1.msra.mxu0 %v77
  %310 = vmatprep.subr.mxu0 0.0
  %311 = vmatpush1.msra.mxu0 %v78
  %312 = vmatprep.subr.mxu0 0.0
  %313 = vmatpush1.msra.mxu0 %v79
  %314 = vmatprep.subr.mxu0 0.0
  %315 = vmatpush1.msra.mxu0 %v80
  %316 = vmatprep.subr.mxu0 0.0
  %317 = vmatpush1.msra.mxu0 %v81
  %318 = vmatprep.subr.mxu0 0.0
  %319 = vmatpush1.msra.mxu0 %v82
  %320 = vmatprep.subr.mxu0 0.0
  %321 = vmatpush1.msra.mxu0 %v83
  %322 = vmatprep.subr.mxu0 0.0
  %323 = vmatpush1.msra.mxu0 %v84
  %324 = vmatprep.subr.mxu0 0.0
  %325 = vmatpush1.msra.mxu0 %v85
  %326 = vmatprep.subr.mxu0 0.0
  %327 = vmatpush1.msra.mxu0 %v86
  %328 = vmatprep.subr.mxu0 0.0
  %329 = vmatpush1.msra.mxu0 %v87
  %330 = vmatprep.subr.mxu0 0.0
  %331 = vmatpush1.msra.mxu0 %v88
  %332 = vmatprep.mubr.f32.mxu0 %v17
  %333 = vmatmul.mubr.f32.gmra.mrb[0].mxu0 %v16
  %v334 = vpop.f32.mrb[0].mxu0
  %v335 = vadd.f32 %v265, %v334
  %v336 = vpop.f32.mrb[0].mxu0
  %337 = vdwg.mxu0
  %338 = vmatprep.subr.mxu0 0.0
  %339 = vmatpush1.msra.mxu0 %v89
  %340 = vmatprep.subr.mxu0 0.0
  %341 = vmatpush1.msra.mxu0 %v90
  %342 = vmatprep.subr.mxu0 0.0
  %343 = vmatpush1.msra.mxu0 %v91
  %344 = vmatprep.subr.mxu0 0.0
  %345 = vmatpush1.msra.mxu0 %v92
  %346 = vmatprep.subr.mxu0 0.0
  %347 = vmatpush1.msra.mxu0 %v93
  %348 = vmatprep.subr.mxu0 0.0
  %349 = vmatpush1.msra.mxu0 %v94
  %350 = vmatprep.subr.mxu0 0.0
  %351 = vmatpush1.msra.mxu0 %v95
  %352 = vmatprep.subr.mxu0 0.0
  %353 = vmatpush1.msra.mxu0 %v96
  %354 = vmatprep.subr.mxu0 0.0
  %355 = vmatpush1.msra.mxu0 %v97
  %356 = vmatprep.subr.mxu0 0.0
  %357 = vmatpush1.msra.mxu0 %v98
  %358 = vmatprep.subr.mxu0 0.0
  %359 = vmatpush1.msra.mxu0 %v99
  %360 = vmatprep.subr.mxu0 0.0
  %361 = vmatpush1.msra.mxu0 %v100
  %362 = vmatprep.subr.mxu0 0.0
  %363 = vmatpush1.msra.mxu0 %v101
  %364 = vmatprep.subr.mxu0 0.0
  %365 = vmatpush1.msra.mxu0 %v102
  %366 = vmatprep.subr.mxu0 0.0
  %367 = vmatpush1.msra.mxu0 %v103
  %368 = vmatprep.subr.mxu0 0.0
  %369 = vmatpush1.msra.mxu0 %v104
  %370 = vmatprep.subr.mxu0 0.0
  %371 = vmatpush1.msra.mxu0 %v105
  %372 = vmatprep.subr.mxu0 0.0
  %373 = vmatpush1.msra.mxu0 %v106
  %374 = vmatprep.subr.mxu0 0.0
  %375 = vmatpush1.msra.mxu0 %v107
  %376 = vmatprep.subr.mxu0 0.0
  %377 = vmatpush1.msra.mxu0 %v108
  %378 = vmatprep.subr.mxu0 0.0
  %379 = vmatpush1.msra.mxu0 %v109
  %380 = vmatprep.subr.mxu0 0.0
  %381 = vmatpush1.msra.mxu0 %v110
  %382 = vmatprep.subr.mxu0 0.0
  %383 = vmatpush1.msra.mxu0 %v111
  %384 = vmatprep.subr.mxu0 0.0
  %385 = vmatpush1.msra.mxu0 %v112
  %386 = vmatprep.subr.mxu0 0.0
  %387 = vmatpush1.msra.mxu0 %v113
  %388 = vmatprep.subr.mxu0 0.0
  %389 = vmatpush1.msra.mxu0 %v114
  %390 = vmatprep.subr.mxu0 0.0
  %391 = vmatpush1.msra.mxu0 %v115
  %392 = vmatprep.subr.mxu0 0.0
  %393 = vmatpush1.msra.mxu0 %v116
  %394 = vmatprep.subr.mxu0 0.0
  %395 = vmatpush1.msra.mxu0 %v117
  %396 = vmatprep.subr.mxu0 0.0
  %397 = vmatpush1.msra.mxu0 %v118
  %398 = vmatprep.subr.mxu0 0.0
  %399 = vmatpush1.msra.mxu0 %v119
  %400 = vmatprep.subr.mxu0 0.0
  %401 = vmatpush1.msra.mxu0 %v120
  %402 = vmatprep.mubr.f32.mxu0 %v19
  %403 = vmatmul.mubr.f32.gmra.mrb[0].mxu0 %v18
  %v404 = vpop.f32.mrb[0].mxu0
  %v405 = vadd.f32 %v335, %v404
  %v406 = vpop.f32.mrb[0].mxu0
  %407 = vdwg.mxu0
  %408 = vmatprep.subr.mxu0 0.0
  %409 = vmatpush1.msra.mxu0 %v121
  %410 = vmatprep.subr.mxu0 0.0
  %411 = vmatpush1.msra.mxu0 %v122
  %412 = vmatprep.subr.mxu0 0.0
  %413 = vmatpush1.msra.mxu0 %v123
  %414 = vmatprep.subr.mxu0 0.0
  %415 = vmatpush1.msra.mxu0 %v124
  %416 = vmatprep.subr.mxu0 0.0
  %417 = vmatpush1.msra.mxu0 %v125
  %418 = vmatprep.subr.mxu0 0.0
  %419 = vmatpush1.msra.mxu0 %v126
  %420 = vmatprep.subr.mxu0 0.0
  %421 = vmatpush1.msra.mxu0 %v127
  %422 = vmatprep.subr.mxu0 0.0
  %423 = vmatpush1.msra.mxu0 %v128
  %424 = vmatprep.subr.mxu0 0.0
  %425 = vmatpush1.msra.mxu0 %v129
  %426 = vmatprep.subr.mxu0 0.0
  %427 = vmatpush1.msra.mxu0 %v130
  %428 = vmatprep.subr.mxu0 0.0
  %429 = vmatpush1.msra.mxu0 %v131
  %430 = vmatprep.subr.mxu0 0.0
  %431 = vmatpush1.msra.mxu0 %v132
  %432 = vmatprep.subr.mxu0 0.0
  %433 = vmatpush1.msra.mxu0 %v133
  %434 = vmatprep.subr.mxu0 0.0
  %435 = vmatpush1.msra.mxu0 %v134
  %436 = vmatprep.subr.mxu0 0.0
  %437 = vmatpush1.msra.mxu0 %v135
  %438 = vmatprep.subr.mxu0 0.0
  %439 = vmatpush1.msra.mxu0 %v136
  %440 = vmatprep.subr.mxu0 0.0
  %441 = vmatpush1.msra.mxu0 %v137
  %442 = vmatprep.subr.mxu0 0.0
  %443 = vmatpush1.msra.mxu0 %v138
  %444 = vmatprep.subr.mxu0 0.0
  %445 = vmatpush1.msra.mxu0 %v139
  %446 = vmatprep.subr.mxu0 0.0
  %447 = vmatpush1.msra.mxu0 %v140
  %448 = vmatprep.subr.mxu0 0.0
  %449 = vmatpush1.msra.mxu0 %v141
  %450 = vmatprep.subr.mxu0 0.0
  %451 = vmatpush1.msra.mxu0 %v142
  %452 = vmatprep.subr.mxu0 0.0
  %453 = vmatpush1.msra.mxu0 %v143
  %454 = vmatprep.subr.mxu0 0.0
  %455 = vmatpush1.msra.mxu0 %v144
  %456 = vmatprep.subr.mxu0 0.0
  %457 = vmatpush1.msra.mxu0 %v145
  %458 = vmatprep.subr.mxu0 0.0
  %459 = vmatpush1.msra.mxu0 %v146
  %460 = vmatprep.subr.mxu0 0.0
  %461 = vmatpush1.msra.mxu0 %v147
  %462 = vmatprep.subr.mxu0 0.0
  %463 = vmatpush1.msra.mxu0 %v148
  %464 = vmatprep.subr.mxu0 0.0
  %465 = vmatpush1.msra.mxu0 %v149
  %466 = vmatprep.subr.mxu0 0.0
  %467 = vmatpush1.msra.mxu0 %v150
  %468 = vmatprep.subr.mxu0 0.0
  %469 = vmatpush1.msra.mxu0 %v151
  %470 = vmatprep.subr.mxu0 0.0
  %471 = vmatpush1.msra.mxu0 %v152
  %472 = vmatprep.mubr.f32.mxu0 %v21
  %473 = vmatmul.mubr.f32.gmra.mrb[0].mxu0 %v20
  %v474 = vpop.f32.mrb[0].mxu0
  %v475 = vadd.f32 %v405, %v474
  %v476 = vpop.f32.mrb[0].mxu0
  %477 = vdwg.mxu0
  %478 = vmatprep.subr.mxu0 0.0
  %479 = vmatpush1.msra.mxu0 %v153
  %480 = vmatprep.subr.mxu0 0.0
  %481 = vmatpush1.msra.mxu0 %v154
  %482 = vmatprep.subr.mxu0 0.0
  %483 = vmatpush1.msra.mxu0 %v155
  %484 = vmatprep.subr.mxu0 0.0
  %485 = vmatpush1.msra.mxu0 %v156
  %486 = vmatprep.subr.mxu0 0.0
  %487 = vmatpush1.msra.mxu0 %v157
  %488 = vmatprep.subr.mxu0 0.0
  %489 = vmatpush1.msra.mxu0 %v158
  %490 = vmatprep.subr.mxu0 0.0
  %491 = vmatpush1.msra.mxu0 %v159
  %492 = vmatprep.subr.mxu0 0.0
  %493 = vmatpush1.msra.mxu0 %v160
  %494 = vmatprep.subr.mxu0 0.0
  %495 = vmatpush1.msra.mxu0 %v161
  %496 = vmatprep.subr.mxu0 0.0
  %497 = vmatpush1.msra.mxu0 %v162
  %498 = vmatprep.subr.mxu0 0.0
  %499 = vmatpush1.msra.mxu0 %v163
  %500 = vmatprep.subr.mxu0 0.0
  %501 = vmatpush1.msra.mxu0 %v164
  %502 = vmatprep.subr.mxu0 0.0
  %503 = vmatpush1.msra.mxu0 %v165
  %504 = vmatprep.subr.mxu0 0.0
  %505 = vmatpush1.msra.mxu0 %v166
  %506 = vmatprep.subr.mxu0 0.0
  %507 = vmatpush1.msra.mxu0 %v167
  %508 = vmatprep.subr.mxu0 0.0
  %509 = vmatpush1.msra.mxu0 %v168
  %510 = vmatprep.subr.mxu0 0.0
  %511 = vmatpush1.msra.mxu0 %v169
  %512 = vmatprep.subr.mxu0 0.0
  %513 = vmatpush1.msra.mxu0 %v170
  %514 = vmatprep.subr.mxu0 0.0
  %515 = vmatpush1.msra.mxu0 %v171
  %516 = vmatprep.subr.mxu0 0.0
  %517 = vmatpush1.msra.mxu0 %v172
  %518 = vmatprep.subr.mxu0 0.0
  %519 = vmatpush1.msra.mxu0 %v173
  %520 = vmatprep.subr.mxu0 0.0
  %521 = vmatpush1.msra.mxu0 %v174
  %522 = vmatprep.subr.mxu0 0.0
  %523 = vmatpush1.msra.mxu0 %v175
  %524 = vmatprep.subr.mxu0 0.0
  %525 = vmatpush1.msra.mxu0 %v176
  %526 = vmatprep.subr.mxu0 0.0
  %527 = vmatpush1.msra.mxu0 %v177
  %528 = vmatprep.subr.mxu0 0.0
  %529 = vmatpush1.msra.mxu0 %v178
  %530 = vmatprep.subr.mxu0 0.0
  %531 = vmatpush1.msra.mxu0 %v179
  %532 = vmatprep.subr.mxu0 0.0
  %533 = vmatpush1.msra.mxu0 %v180
  %534 = vmatprep.subr.mxu0 0.0
  %535 = vmatpush1.msra.mxu0 %v181
  %536 = vmatprep.subr.mxu0 0.0
  %537 = vmatpush1.msra.mxu0 %v182
  %538 = vmatprep.subr.mxu0 0.0
  %539 = vmatpush1.msra.mxu0 %v183
  %540 = vmatprep.subr.mxu0 0.0
  %541 = vmatpush1.msra.mxu0 %v184
  %542 = vmatprep.mubr.f32.mxu0 %v23
  %543 = vmatmul.mubr.f32.gmra.mrb[0].mxu0 %v22
  %v544 = vpop.f32.mrb[0].mxu0
  %v545 = vadd.f32 %v475, %v544
  %v546 = vpop.f32.mrb[0].mxu0
  %547 = vdwg.mxu0
  %548 = vmatprep.subr.mxu0 0.0
  %549 = vmatpush1.msra.mxu0 %v185
  %550 = vmatprep.subr.mxu0 0.0
  %551 = vmatpush1.msra.mxu0 %v186
  %552 = vmatprep.subr.mxu0 0.0
  %553 = vmatpush1.msra.mxu0 0.0
  %554 = vmatprep.subr.mxu0 0.0
  %555 = vmatpush1.msra.mxu0 0.0
  %556 = vmatprep.subr.mxu0 0.0
  %557 = vmatpush1.msra.mxu0 0.0
  %558 = vmatprep.subr.mxu0 0.0
  %559 = vmatpush1.msra.mxu0 0.0
  %560 = vmatprep.subr.mxu0 0.0
  %561 = vmatpush1.msra.mxu0 0.0
  %562 = vmatprep.subr.mxu0 0.0
  %563 = vmatpush1.msra.mxu0 0.0
  %564 = vmatprep.subr.mxu0 0.0
  %565 = vmatpush1.msra.mxu0 0.0
  %566 = vmatprep.subr.mxu0 0.0
  %567 = vmatpush1.msra.mxu0 0.0
  %568 = vmatprep.subr.mxu0 0.0
  %569 = vmatpush1.msra.mxu0 0.0
  %570 = vmatprep.subr.mxu0 0.0
  %571 = vmatpush1.msra.mxu0 0.0
  %572 = vmatprep.subr.mxu0 0.0
  %573 = vmatpush1.msra.mxu0 0.0
  %574 = vmatprep.subr.mxu0 0.0
  %575 = vmatpush1.msra.mxu0 0.0
  %576 = vmatprep.subr.mxu0 0.0
  %577 = vmatpush1.msra.mxu0 0.0
  %578 = vmatprep.subr.mxu0 0.0
  %579 = vmatpush1.msra.mxu0 0.0
  %580 = vmatprep.subr.mxu0 0.0
  %581 = vmatpush1.msra.mxu0 0.0
  %582 = vmatprep.subr.mxu0 0.0
  %583 = vmatpush1.msra.mxu0 0.0
  %584 = vmatprep.subr.mxu0 0.0
  %585 = vmatpush1.msra.mxu0 0.0
  %586 = vmatprep.subr.mxu0 0.0
  %587 = vmatpush1.msra.mxu0 0.0
  %588 = vmatprep.subr.mxu0 0.0
  %589 = vmatpush1.msra.mxu0 0.0
  %590 = vmatprep.subr.mxu0 0.0
  %591 = vmatpush1.msra.mxu0 0.0
  %592 = vmatprep.subr.mxu0 0.0
  %593 = vmatpush1.msra.mxu0 0.0
  %594 = vmatprep.subr.mxu0 0.0
  %595 = vmatpush1.msra.mxu0 0.0
  %596 = vmatprep.subr.mxu0 0.0
  %597 = vmatpush1.msra.mxu0 0.0
  %598 = vmatprep.subr.mxu0 0.0
  %599 = vmatpush1.msra.mxu0 0.0
  %600 = vmatprep.subr.mxu0 0.0
  %601 = vmatpush1.msra.mxu0 0.0
  %602 = vmatprep.subr.mxu0 0.0
  %603 = vmatpush1.msra.mxu0 0.0
  %604 = vmatprep.subr.mxu0 0.0
  %605 = vmatpush1.msra.mxu0 0.0
  %606 = vmatprep.subr.mxu0 0.0
  %607 = vmatpush1.msra.mxu0 0.0
  %608 = vmatprep.subr.mxu0 0.0
  %609 = vmatpush1.msra.mxu0 0.0
  %610 = vmatprep.subr.mxu0 0.0
  %611 = vmatpush1.msra.mxu0 0.0
  %612 = vmatprep.mubr.f32.mxu0 0.0
  %613 = vmatmul.mubr.f32.gmra.mrb[0].mxu0 %v196
  %v614 = vpop.f32.mrb[0].mxu0
  %v615 = vadd.f32 %v545, %v614
  %v616 = vpop.f32.mrb[0].mxu0
  %617 = vdwg.mxu0
  %618 = vst.msk [vmem:[%s3] sm:$0xff] %vm194, %v615
  // Predicated region
  $region14: #{tf_conv_block.20} parent=0 // pred_check
    _
  $region15: #{tf_conv_block.20} parent=0 // pred_check_branch
    %620 = sbr.rel (0) target = $region17
  $region16: #{tf_conv_block.20} parent=0 // pred_region
    _
  $region17: #{tf_conv_block.20} parent=0 // pred_fallthru
    _
  // Predicated region
  $region18: #{tf_conv_block.20} parent=0 // pred_check
    _
  $region19: #{tf_conv_block.20} parent=0 // pred_check_branch
    %622 = sbr.rel (0) target = $region21
  $region20: #{tf_conv_block.20} parent=0 // pred_region
    _
  $region21: #{tf_conv_block.20} parent=0 // pred_fallthru
    _

// kernel: tf_conv_block.21
$region0: #{tf_conv_block.21}
  #allocation0 [shape = 'u32[]', space=smem, size = 0x4, offset = 0x4, fixed_abs, tag = 'smem constant byte address 0x4 - core index']
  #allocation1 [shape = 'u32[144,128]{1,0:T(1,128)}', space=vmem, size = 0x12000, scoped, tag = 'internal scratch']
  %s0 = inlined_call_operand.vmem [shape: f32[4,2,2,16], index: 0, kind: input, shape index: {}]
  %s1 = inlined_call_operand.vmem [shape: f32[4,2,2,16], index: 1, kind: input, shape index: {}]
  %s2 = inlined_call_operand.vmem [shape: f32[4,16,8], index: 2, kind: input, shape index: {}]
  %s3 = inlined_call_operand.vmem [shape: f32[4,8,16], index: 3, kind: input, shape index: {}]
  %s4 = inlined_call_operand.vmem [shape: f32[4,2,2,16], index: 4, kind: output, shape index: {}]
  %s5 = sld [smem:[#allocation0]]
  $region49: #{tf_conv_block.21} parent=0
    _
  %s7 = ssub.s32 1, %s5
  %s8 = scalar_select 0, %s7, %s5
  loop: start=0, step=1, limit=6
  $region2: #{tf_conv_block.21} parent=0 // loop_pre_header
    _
  $region3: #{tf_conv_block.21} parent=0 // loop_header
    %s10 = sphi 0, %s14
    %p11 = scmp.ge.s32.totalorder %s10, 6
    %s20 = sphi 0, %s22
    %s23 = sphi 0, %s20
    %s24 = sphi 0, %s23
    %s40 = sphi 0, %s24
    %s46 = sphi 0, %s48
    %s49 = sphi 0, %s46
    %s50 = sphi 0, %s49
    %s66 = sphi 0, %s50
    %s72 = sphi 0, %s74
    %s75 = sphi 0, %s72
    %s76 = sphi 0, %s75
    %s92 = sphi 0, %s76
    %s98 = sphi 0, %s100
    %s101 = sphi 0, %s98
    %s102 = sphi 0, %s101
    %s118 = sphi 0, %s102
    %s124 = sphi 0, %s126
    %s127 = sphi 0, %s124
    %s128 = sphi 0, %s127
    %s144 = sphi 0, %s128
  $region4: #{tf_conv_block.21} parent=0 // loop_header_branch
    %13 = sbr.rel (%p11) target = $region8
  $region5: #{tf_conv_block.21} parent=0 // loop_body
    %s15 = ssub.s32 %s10, 1
    %s16 = ssub.s32 %s10, 2
    %s17 = sadd.s32 %s10, 1
    %s18 = ssub.s32 %s10, %s17
    %p19 = scmp.eq.s32.totalorder %s18, 0
    %s21 = sadd.s32 %s20, 1
    %s22 = scalar_select %p19, %s20, %s21
    %p25 = pneg %p19
    %p26 = scmp.eq.s32.totalorder %s10, 3
    %p27 = por %p25, %p26
    %p28 = scmp.ne.s32.totalorder %s20, %s23
    %p29 = scmp.eq.s32.totalorder %s10, 0
    %p30 = por %p28, %p29
    %p31 = scmp.ne.s32.totalorder %s20, %s23
    %p32 = scmp.eq.s32.totalorder %s15, 3
    %p33 = por %p31, %p32
    %p34 = scmp.ne.s32.totalorder %s23, %s24
    %p35 = scmp.eq.s32.totalorder %s15, 0
    %p36 = por %p34, %p35
    %p37 = scmp.ne.s32.totalorder %s23, %s24
    %p38 = scmp.eq.s32.totalorder %s16, 3
    %p39 = por %p37, %p38
    %p41 = scmp.ne.s32.totalorder %s24, %s40
    %p42 = scmp.eq.s32.totalorder %s16, 0
    %p43 = por %p41, %p42
    %s44 = ssub.s32 %s10, %s17
    %p45 = scmp.eq.s32.totalorder %s44, 0
    %s47 = sadd.s32 %s46, 1
    %s48 = scalar_select %p45, %s46, %s47
    %p51 = pneg %p45
    %p52 = scmp.eq.s32.totalorder %s10, 3
    %p53 = por %p51, %p52
    %p54 = scmp.ne.s32.totalorder %s46, %s49
    %p55 = scmp.eq.s32.totalorder %s10, 0
    %p56 = por %p54, %p55
    %p57 = scmp.ne.s32.totalorder %s46, %s49
    %p58 = scmp.eq.s32.totalorder %s15, 3
    %p59 = por %p57, %p58
    %p60 = scmp.ne.s32.totalorder %s49, %s50
    %p61 = scmp.eq.s32.totalorder %s15, 0
    %p62 = por %p60, %p61
    %p63 = scmp.ne.s32.totalorder %s49, %s50
    %p64 = scmp.eq.s32.totalorder %s16, 3
    %p65 = por %p63, %p64
    %p67 = scmp.ne.s32.totalorder %s50, %s66
    %p68 = scmp.eq.s32.totalorder %s16, 0
    %p69 = por %p67, %p68
    %s70 = ssub.s32 %s10, %s17
    %p71 = scmp.eq.s32.totalorder %s70, 0
    %s73 = sadd.s32 %s72, 1
    %s74 = scalar_select %p71, %s72, %s73
    %p77 = pneg %p71
    %p78 = scmp.eq.s32.totalorder %s10, 3
    %p79 = por %p77, %p78
    %p80 = scmp.ne.s32.totalorder %s72, %s75
    %p81 = scmp.eq.s32.totalorder %s10, 0
    %p82 = por %p80, %p81
    %p83 = scmp.ne.s32.totalorder %s72, %s75
    %p84 = scmp.eq.s32.totalorder %s15, 3
    %p85 = por %p83, %p84
    %p86 = scmp.ne.s32.totalorder %s75, %s76
    %p87 = scmp.eq.s32.totalorder %s15, 0
    %p88 = por %p86, %p87
    %p89 = scmp.ne.s32.totalorder %s75, %s76
    %p90 = scmp.eq.s32.totalorder %s16, 3
    %p91 = por %p89, %p90
    %p93 = scmp.ne.s32.totalorder %s76, %s92
    %p94 = scmp.eq.s32.totalorder %s16, 0
    %p95 = por %p93, %p94
    %s96 = ssub.s32 %s10, %s17
    %p97 = scmp.eq.s32.totalorder %s96, 0
    %s99 = sadd.s32 %s98, 1
    %s100 = scalar_select %p97, %s98, %s99
    %p103 = pneg %p97
    %p104 = scmp.eq.s32.totalorder %s10, 3
    %p105 = por %p103, %p104
    %p106 = scmp.ne.s32.totalorder %s98, %s101
    %p107 = scmp.eq.s32.totalorder %s10, 0
    %p108 = por %p106, %p107
    %p109 = scmp.ne.s32.totalorder %s98, %s101
    %p110 = scmp.eq.s32.totalorder %s15, 3
    %p111 = por %p109, %p110
    %p112 = scmp.ne.s32.totalorder %s101, %s102
    %p113 = scmp.eq.s32.totalorder %s15, 0
    %p114 = por %p112, %p113
    %p115 = scmp.ne.s32.totalorder %s101, %s102
    %p116 = scmp.eq.s32.totalorder %s16, 3
    %p117 = por %p115, %p116
    %p119 = scmp.ne.s32.totalorder %s102, %s118
    %p120 = scmp.eq.s32.totalorder %s16, 0
    %p121 = por %p119, %p120
    %s122 = ssub.s32 %s10, %s17
    %p123 = scmp.eq.s32.totalorder %s122, 0
    %s125 = sadd.s32 %s124, 1
    %s126 = scalar_select %p123, %s124, %s125
    %p129 = pneg %p123
    %p130 = scmp.eq.s32.totalorder %s10, 3
    %p131 = por %p129, %p130
    %p132 = scmp.ne.s32.totalorder %s124, %s127
    %p133 = scmp.eq.s32.totalorder %s10, 0
    %p134 = por %p132, %p133
    %p135 = scmp.ne.s32.totalorder %s124, %s127
    %p136 = scmp.eq.s32.totalorder %s15, 3
    %p137 = por %p135, %p136
    %p138 = scmp.ne.s32.totalorder %s127, %s128
    %p139 = scmp.eq.s32.totalorder %s15, 0
    %p140 = por %p138, %p139
    %p141 = scmp.ne.s32.totalorder %s127, %s128
    %p142 = scmp.eq.s32.totalorder %s16, 3
    %p143 = por %p141, %p142
    %p145 = scmp.ne.s32.totalorder %s128, %s144
    %p146 = scmp.eq.s32.totalorder %s16, 0
    %p147 = por %p145, %p146
    %p148 = scmp.le.s32.totalorder 1, %s10
    %p149 = scmp.lt.s32.totalorder %s10, 5
    %p150 = pnand %p148, %p149
    %p151 = pneg %p150
    // Predicated region
    $region9: #{tf_conv_block.21} parent=5 // pred_check
      _
    $region10: #{tf_conv_block.21} parent=5 // pred_check_branch
      %153 = sbr.rel (%p150) target = $region12
    $region11: #{tf_conv_block.21} parent=5 // pred_region
      %s154 = ssub.s32 %s10, 1
    $region12: #{tf_conv_block.21} parent=5 // pred_fallthru
      _
    %p155 = scmp.lt.s32.totalorder %s10, 4
    // Predicated region
    $region13: #{tf_conv_block.21} parent=5 // pred_check
      %p156 = pneg %p155
    $region14: #{tf_conv_block.21} parent=5 // pred_check_branch
      %158 = sbr.rel (%p156) target = $region16
    $region15: #{tf_conv_block.21} parent=5 // pred_region
      // Predicated region
      $region17: #{tf_conv_block.21} parent=15 // pred_check
        %p159 = pneg %p30
      $region18: #{tf_conv_block.21} parent=15 // pred_check_branch
        %161 = sbr.rel (%p159) target = $region20
      $region19: #{tf_conv_block.21} parent=15 // pred_region
        %p162 = scmp.lt.s32.totalorder %s10, 3
        %s163 = scalar_select %p162, %s10, 3
        %s164 = smul.addr %s163, 2
        %s165 = smul.addr %s164, 2
        %s166 = scalar_lea.vmem %s0, %s165
      $region20: #{tf_conv_block.21} parent=15 // pred_fallthru
        _
      // Predicated region
      $region21: #{tf_conv_block.21} parent=15 // pred_check
        %p167 = pneg %p56
      $region22: #{tf_conv_block.21} parent=15 // pred_check_branch
        %169 = sbr.rel (%p167) target = $region24
      $region23: #{tf_conv_block.21} parent=15 // pred_region
        %p170 = scmp.lt.s32.totalorder %s10, 3
        %s171 = scalar_select %p170, %s10, 3
        %s172 = smul.addr %s171, 2
        %s173 = smul.addr %s172, 2
        %s174 = scalar_lea.vmem %s1, %s173
      $region24: #{tf_conv_block.21} parent=15 // pred_fallthru
        _
      // Predicated region
      $region25: #{tf_conv_block.21} parent=15 // pred_check
        %p175 = pneg %p82
      $region26: #{tf_conv_block.21} parent=15 // pred_check_branch
        %177 = sbr.rel (%p175) target = $region28
      $region27: #{tf_conv_block.21} parent=15 // pred_region
        %p178 = scmp.lt.s32.totalorder %s10, 3
        %s179 = scalar_select %p178, %s10, 3
        %s180 = smul.addr %s179, 2
        %s181 = smul.addr %s180, 8
        %s182 = scalar_lea.vmem %s2, %s181
      $region28: #{tf_conv_block.21} parent=15 // pred_fallthru
        _
      // Predicated region
      $region29: #{tf_conv_block.21} parent=15 // pred_check
        %p183 = pneg %p108
      $region30: #{tf_conv_block.21} parent=15 // pred_check_branch
        %185 = sbr.rel (%p183) target = $region32
      $region31: #{tf_conv_block.21} parent=15 // pred_region
        %p186 = scmp.lt.s32.totalorder %s10, 3
        %s187 = scalar_select %p186, %s10, 3
        %s188 = smul.addr %s187, 8
        %s189 = scalar_lea.vmem %s3, %s188
      $region32: #{tf_conv_block.21} parent=15 // pred_fallthru
        _
    $region16: #{tf_conv_block.21} parent=5 // pred_fallthru
      _
    %p190 = scmp.le.s32.totalorder 1, %s10
    %p191 = scmp.lt.s32.totalorder %s10, 5
    %p192 = pnand %p190, %p191
    %p193 = pneg %p192
    // Predicated region
    $region33: #{tf_conv_block.21} parent=5 // pred_check
      _
    $region34: #{tf_conv_block.21} parent=5 // pred_check_branch
      %195 = sbr.rel (%p192) target = $region36
    $region35: #{tf_conv_block.21} parent=5 // pred_region
      %s196 = ssub.s32 %s10, 1
      %p197 = scmp.lt.s32.totalorder %s15, 3
      %s198 = scalar_select %p197, %s15, 3
      %s199 = smul.addr %s198, 2
      %s200 = smul.addr %s199, 2
      %s201 = scalar_lea.vmem %s0, %s200
      %p202 = pneg %p36
      %p203 = pneg %p33
      %p204 = scmp.lt.s32.totalorder %s15, 3
      %s205 = scalar_select %p204, %s15, 3
      %s206 = smul.addr %s205, 2
      %s207 = smul.addr %s206, 2
      %s208 = scalar_lea.vmem %s1, %s207
      %p209 = pneg %p62
      %p210 = pneg %p59
      %p211 = scmp.lt.s32.totalorder %s15, 3
      %s212 = scalar_select %p211, %s15, 3
      %s213 = smul.addr %s212, 2
      %s214 = smul.addr %s213, 8
      %s215 = scalar_lea.vmem %s2, %s214
      %p216 = pneg %p88
      %p217 = pneg %p85
      %p218 = scmp.lt.s32.totalorder %s15, 3
      %s219 = scalar_select %p218, %s15, 3
      %s220 = smul.addr %s219, 8
      %s221 = scalar_lea.vmem %s3, %s220
      %p222 = pneg %p114
      %p223 = pneg %p111
      %p224 = pneg %p140
      %p225 = pneg %p137
      %p226 = scmp.lt.s32.totalorder %s15, 3
      %s227 = scalar_select %p226, %s15, 3
      %s228 = smul.addr %s227, 2
      %s229 = smul.addr %s228, 2
      %s230 = scalar_lea.vmem %s4, %s229
      %p231 = scmp.lt.s32.totalorder %s15, 3
      %s232 = scalar_select %p231, %s15, 3
      %s233 = smul.addr %s232, 2
      %s234 = smul.addr %s233, 2
      %s235 = scalar_lea.vmem %s0, %s234
      %p236 = scmp.lt.s32.totalorder %s15, 3
      %s237 = scalar_select %p236, %s15, 3
      %s238 = smul.addr %s237, 2
      %s239 = smul.addr %s238, 2
      %s240 = scalar_lea.vmem %s1, %s239
      %p241 = scmp.lt.s32.totalorder %s15, 3
      %s242 = scalar_select %p241, %s15, 3
      %s243 = smul.addr %s242, 2
      %s244 = smul.addr %s243, 8
      %s245 = scalar_lea.vmem %s2, %s244
      %p246 = scmp.lt.s32.totalorder %s15, 3
      %s247 = scalar_select %p246, %s15, 3
      %s248 = smul.addr %s247, 8
      %s249 = scalar_lea.vmem %s3, %s248
      %p250 = scmp.lt.s32.totalorder %s15, 3
      %s251 = scalar_select %p250, %s15, 3
      %s252 = smul.addr %s251, 2
      %s253 = smul.addr %s252, 2
      %s254 = scalar_lea.vmem %s4, %s253
      %v255 = vld [vmem:[%s235] sm:$0x3]
      %v256 = vld [vmem:[%s235 + $0x2] sm:$0x3]
      %v257 = vld [vmem:[%s240] sm:$0x3]
      %v258 = vld [vmem:[%s240 + $0x2] sm:$0x3]
      %vm259 = vcmask 123904
      %v260 = vsel %vm259, %v255, 0.0
      %v261 = vrot.slane %v260, 4
      %v262 = vadd.f32 %v260, %v261
      %v263 = vrot.slane %v262, 2
      %v264 = vadd.f32 %v262, %v263
      %v265 = vrot.slane %v264, 1
      %v266 = vadd.f32 %v264, %v265
      %v267 = vsel %vm259, %v256, 0.0
      %v268 = vrot.slane %v267, 4
      %v269 = vadd.f32 %v267, %v268
      %v270 = vrot.slane %v269, 2
      %v271 = vadd.f32 %v269, %v270
      %v272 = vrot.slane %v271, 1
      %v273 = vadd.f32 %v271, %v272
      %v274 = vrcp.pop 2.0
      %v275 = vmul.f32 %v266, %v274
      %v276 = vmul.f32 %v273, %v274
      %v277 = vld [vmem:[%s245] sm:$0xff]
      %v278 = vld [vmem:[%s245 + $0x8] sm:$0xff]
      %vm281 = vcmask 1041409
      %v282 = vsel %vm281, %v276, %v275
      %vm283 = vcmask 130048
      %v284 = vsel %vm283, %v282, 0
      %286 = vmatprep.subr.mxu0 0.0
      %287 = vmatpush1.msra.mxu0 %v277
      %288 = vmatprep.subr.mxu0 0.0
      %289 = vmatpush1.msra.mxu0 %v278
      %290 = vmatprep.subr.mxu0 0.0
      %291 = vmatpush1.msra.mxu0 0.0
      %292 = vmatprep.subr.mxu0 0.0
      %293 = vmatpush1.msra.mxu0 0.0
      %294 = vmatprep.subr.mxu0 0.0
      %295 = vmatpush1.msra.mxu0 0.0
      %296 = vmatprep.subr.mxu0 0.0
      %297 = vmatpush1.msra.mxu0 0.0
      %298 = vmatprep.subr.mxu0 0.0
      %299 = vmatpush1.msra.mxu0 0.0
      %300 = vmatprep.subr.mxu0 0.0
      %301 = vmatpush1.msra.mxu0 0.0
      %302 = vmatprep.subr.mxu0 0.0
      %303 = vmatpush1.msra.mxu0 0.0
      %304 = vmatprep.subr.mxu0 0.0
      %305 = vmatpush1.msra.mxu0 0.0
      %306 = vmatprep.subr.mxu0 0.0
      %307 = vmatpush1.msra.mxu0 0.0
      %308 = vmatprep.subr.mxu0 0.0
      %309 = vmatpush1.msra.mxu0 0.0
      %310 = vmatprep.subr.mxu0 0.0
      %311 = vmatpush1.msra.mxu0 0.0
      %312 = vmatprep.subr.mxu0 0.0
      %313 = vmatpush1.msra.mxu0 0.0
      %314 = vmatprep.subr.mxu0 0.0
      %315 = vmatpush1.msra.mxu0 0.0
      %316 = vmatprep.subr.mxu0 0.0
      %317 = vmatpush1.msra.mxu0 0.0
      %318 = vmatprep.subr.mxu0 0.0
      %319 = vmatpush1.msra.mxu0 0.0
      %320 = vmatprep.subr.mxu0 0.0
      %321 = vmatpush1.msra.mxu0 0.0
      %322 = vmatprep.subr.mxu0 0.0
      %323 = vmatpush1.msra.mxu0 0.0
      %324 = vmatprep.subr.mxu0 0.0
      %325 = vmatpush1.msra.mxu0 0.0
      %326 = vmatprep.subr.mxu0 0.0
      %327 = vmatpush1.msra.mxu0 0.0
      %328 = vmatprep.subr.mxu0 0.0
      %329 = vmatpush1.msra.mxu0 0.0
      %330 = vmatprep.subr.mxu0 0.0
      %331 = vmatpush1.msra.mxu0 0.0
      %332 = vmatprep.subr.mxu0 0.0
      %333 = vmatpush1.msra.mxu0 0.0
      %334 = vmatprep.subr.mxu0 0.0
      %335 = vmatpush1.msra.mxu0 0.0
      %336 = vmatprep.subr.mxu0 0.0
      %337 = vmatpush1.msra.mxu0 0.0
      %338 = vmatprep.subr.mxu0 0.0
      %339 = vmatpush1.msra.mxu0 0.0
      %340 = vmatprep.subr.mxu0 0.0
      %341 = vmatpush1.msra.mxu0 0.0
      %342 = vmatprep.subr.mxu0 0.0
      %343 = vmatpush1.msra.mxu0 0.0
      %344 = vmatprep.subr.mxu0 0.0
      %345 = vmatpush1.msra.mxu0 0.0
      %346 = vmatprep.subr.mxu0 0.0
      %347 = vmatpush1.msra.mxu0 0.0
      %348 = vmatprep.subr.mxu0 0.0
      %349 = vmatpush1.msra.mxu0 0.0
      %350 = vmatprep.mubr.f32.mxu0 0.0
      %351 = vmatmul.mubr.f32.gmra.mrb[0].mxu0 %v284
      %v352 = vpop.f32.mrb[0].mxu0
      %v353 = vadd.f32 0.0, %v352
      %v354 = vpop.f32.mrb[0].mxu0
      %355 = vdwg.mxu0
      %v356 = vmax.f32 %v353, 0.0
      %v357 = vld [vmem:[%s249] sm:$0xff]
      %vm358 = vcmask 64512
      %v360 = vsel %vm358, %v356, 0
      %362 = vmatprep.subr.mxu0 0.0
      %363 = vmatpush1.msra.mxu0 %v357
      %364 = vmatprep.subr.mxu0 0.0
      %365 = vmatpush1.msra.mxu0 0.0
      %366 = vmatprep.subr.mxu0 0.0
      %367 = vmatpush1.msra.mxu0 0.0
      %368 = vmatprep.subr.mxu0 0.0
      %369 = vmatpush1.msra.mxu0 0.0
      %370 = vmatprep.subr.mxu0 0.0
      %371 = vmatpush1.msra.mxu0 0.0
      %372 = vmatprep.subr.mxu0 0.0
      %373 = vmatpush1.msra.mxu0 0.0
      %374 = vmatprep.subr.mxu0 0.0
      %375 = vmatpush1.msra.mxu0 0.0
      %376 = vmatprep.subr.mxu0 0.0
      %377 = vmatpush1.msra.mxu0 0.0
      %378 = vmatprep.subr.mxu0 0.0
      %379 = vmatpush1.msra.mxu0 0.0
      %380 = vmatprep.subr.mxu0 0.0
      %381 = vmatpush1.msra.mxu0 0.0
      %382 = vmatprep.subr.mxu0 0.0
      %383 = vmatpush1.msra.mxu0 0.0
      %384 = vmatprep.subr.mxu0 0.0
      %385 = vmatpush1.msra.mxu0 0.0
      %386 = vmatprep.subr.mxu0 0.0
      %387 = vmatpush1.msra.mxu0 0.0
      %388 = vmatprep.subr.mxu0 0.0
      %389 = vmatpush1.msra.mxu0 0.0
      %390 = vmatprep.subr.mxu0 0.0
      %391 = vmatpush1.msra.mxu0 0.0
      %392 = vmatprep.subr.mxu0 0.0
      %393 = vmatpush1.msra.mxu0 0.0
      %394 = vmatprep.subr.mxu0 0.0
      %395 = vmatpush1.msra.mxu0 0.0
      %396 = vmatprep.subr.mxu0 0.0
      %397 = vmatpush1.msra.mxu0 0.0
      %398 = vmatprep.subr.mxu0 0.0
      %399 = vmatpush1.msra.mxu0 0.0
      %400 = vmatprep.subr.mxu0 0.0
      %401 = vmatpush1.msra.mxu0 0.0
      %402 = vmatprep.subr.mxu0 0.0
      %403 = vmatpush1.msra.mxu0 0.0
      %404 = vmatprep.subr.mxu0 0.0
      %405 = vmatpush1.msra.mxu0 0.0
      %406 = vmatprep.subr.mxu0 0.0
      %407 = vmatpush1.msra.mxu0 0.0
      %408 = vmatprep.subr.mxu0 0.0
      %409 = vmatpush1.msra.mxu0 0.0
      %410 = vmatprep.subr.mxu0 0.0
      %411 = vmatpush1.msra.mxu0 0.0
      %412 = vmatprep.subr.mxu0 0.0
      %413 = vmatpush1.msra.mxu0 0.0
      %414 = vmatprep.subr.mxu0 0.0
      %415 = vmatpush1.msra.mxu0 0.0
      %416 = vmatprep.subr.mxu0 0.0
      %417 = vmatpush1.msra.mxu0 0.0
      %418 = vmatprep.subr.mxu0 0.0
      %419 = vmatpush1.msra.mxu0 0.0
      %420 = vmatprep.subr.mxu0 0.0
      %421 = vmatpush1.msra.mxu0 0.0
      %422 = vmatprep.subr.mxu0 0.0
      %423 = vmatpush1.msra.mxu0 0.0
      %424 = vmatprep.subr.mxu0 0.0
      %425 = vmatpush1.msra.mxu0 0.0
      %426 = vmatprep.mubr.f32.mxu0 0.0
      %427 = vmatmul.mubr.f32.gmra.mrb[0].mxu0 %v360
      %v428 = vpop.f32.mrb[0].mxu0
      %v429 = vadd.f32 0.0, %v428
      %v430 = vpop.f32.mrb[0].mxu0
      %431 = vdwg.mxu0
      %v432 = vsub.f32 0.0, %v429
      %v433 = vmul.f32 %v432, 1.442695
      %v434 = vpow.pop %v433
      %v435 = vadd.f32 %v434, 1.0
      %v436 = vrcp.pop %v435
      %v437 = vmul.f32 1.0, %v436
      %v438 = vmul.f32 %v257, %v255
      %v439 = vmul.f32 %v258, %v256
      %v442 = vunpack.c.l.s4 1966171168
      %v443 = vunpack.c.0.s8 %v442
      %v444 = vlaneseq
      %v445 = vshrl.u32 %v444, 7
      %v446 = vsub.s32 %v443, %v445
      %v447 = vrot.slane %v437, %v446
      %v448 = vcombine.high %v447, %v447
      %v450 = vunpack.c.l.s4 1966171168
      %v451 = vunpack.c.0.s8 %v450
      %v452 = vlaneseq
      %v453 = vshrl.u32 %v452, 7
      %v454 = vsub.s32 %v451, %v453
      %v455 = vrot.slane %v447, %v454
      %v457 = vunpack.c.l.s4 1966171168
      %v458 = vunpack.c.0.s8 %v457
      %v459 = vlaneseq
      %v460 = vshrl.u32 %v459, 7
      %v461 = vsub.s32 %v458, %v460
      %v462 = vrot.slane %v448, %v461
      %v463 = vlaneseq
      %v464 = vshrl.u32 %v463, 7
      %v465 = vsub.s32 0, %v464
      %v466 = vrot.slane %v455, %v465
      %v467 = vlaneseq
      %v468 = vshrl.u32 %v467, 7
      %v469 = vsub.s32 0, %v468
      %v470 = vrot.slane %v462, %v469
      %v473 = vmul.f32 %v438, %v466
      %v474 = vmul.f32 %v439, %v470
      %475 = vst.msk [vmem:[%s254] sm:$0x3] %vm259, %v473
      %476 = vst.msk [vmem:[%s254 + $0x2] sm:$0x3] %vm259, %v474
      %p477 = scmp.lt.s32.totalorder %s15, 3
      %s478 = scalar_select %p477, %s15, 3
      %s479 = smul.addr %s478, 2
      %s480 = smul.addr %s479, 2
      %s481 = scalar_lea.vmem %s4, %s480
      // Predicated region
      $region37: #{tf_conv_block.21} parent=35 // pred_check
        %p482 = pneg %p137
      $region38: #{tf_conv_block.21} parent=35 // pred_check_branch
        %484 = sbr.rel (%p482) target = $region40
      $region39: #{tf_conv_block.21} parent=35 // pred_region
        _
      $region40: #{tf_conv_block.21} parent=35 // pred_fallthru
        _
    $region36: #{tf_conv_block.21} parent=5 // pred_fallthru
      _
    %p485 = scmp.le.s32.totalorder 2, %s10
    // Predicated region
    $region41: #{tf_conv_block.21} parent=5 // pred_check
      %p486 = pneg %p485
    $region42: #{tf_conv_block.21} parent=5 // pred_check_branch
      %488 = sbr.rel (%p486) target = $region44
    $region43: #{tf_conv_block.21} parent=5 // pred_region
      %s489 = ssub.s32 %s10, 2
      // Predicated region
      $region45: #{tf_conv_block.21} parent=43 // pred_check
        %p490 = pneg %p143
      $region46: #{tf_conv_block.21} parent=43 // pred_check_branch
        %492 = sbr.rel (%p490) target = $region48
      $region47: #{tf_conv_block.21} parent=43 // pred_region
        %p493 = scmp.lt.s32.totalorder %s16, 3
        %s494 = scalar_select %p493, %s16, 3
        %s495 = smul.addr %s494, 2
        %s496 = smul.addr %s495, 2
        %s497 = scalar_lea.vmem %s4, %s496
      $region48: #{tf_conv_block.21} parent=43 // pred_fallthru
        _
    $region44: #{tf_conv_block.21} parent=5 // pred_fallthru
      _
  $region6: #{tf_conv_block.21} parent=0 // loop_footer
    %s14 = sadd.s32 1, %s10
  $region7: #{tf_conv_block.21} parent=0 // loop_footer_branch
    %9 = sbr.rel target = $region3
  $region8: #{tf_conv_block.21} parent=0 // loop_exit
    _

</llo_original>
